<compile_context>
chip_gen: v6e
topology: v6e:2x2x1
jax: 0.10.0
libtpu: 0.0.40
codegen_flags: <defaults>
</compile_context>

<pallas_src>
import functools

import jax
import jax.numpy as jnp
from jax.experimental import pallas as pl
from jax.experimental.pallas import tpu as pltpu


def _round_up(n, m):
    return ((n + m - 1) // m) * m


def _lstm_kernel(x_ref,      # (T*Bp, Dp)  time-major, padded, flattened input
                 wih0_ref,   # (Dp, 4H)    layer-0 input weights (gate-permuted)
                 whh0_ref,   # (H, 4H)     layer-0 recurrent weights
                 b0_ref,     # (1, 4H)     b_ih0 + b_hh0
                 wih1_ref,   # (H, 4H)     layer-1 input weights
                 whh1_ref,   # (H, 4H)     layer-1 recurrent weights
                 b1_ref,     # (1, 4H)     b_ih1 + b_hh1
                 fcw_ref,    # (H, Np)     [fc1 | fc2] weights, lane-padded
                 fcb_ref,    # (1, Np)     [fc1 | fc2] bias, lane-padded
                 y_ref,      # (Bp, Np)    merged head output
                 zx_ref,     # (T*Bp, 4H)  VMEM scratch: hoisted x-projection
                 *, hidden_dim, seq_len):
    H = hidden_dim
    T = seq_len
    Bp = x_ref.shape[0] // T

    # Prologue: loop-invariant layer-0 input projection as ONE big matmul
    # (bias folded in).  This is the only place the (Dp, 4H) weights are read.
    zx_ref[...] = (jnp.dot(x_ref[...], wih0_ref[...],
                           preferred_element_type=jnp.float32) + b0_ref[...])

    def gates(z, c_prev):
        # Gate columns are (i, f, o, g): one wide sigmoid + one tanh.
        sig = jax.nn.sigmoid(z[:, :3 * H])
        g_g = jnp.tanh(z[:, 3 * H:])
        i_g = sig[:, 0 * H:1 * H]
        f_g = sig[:, 1 * H:2 * H]
        o_g = sig[:, 2 * H:3 * H]
        c_new = f_g * c_prev + i_g * g_g
        h_new = o_g * jnp.tanh(c_new)
        return h_new, c_new

    zeros = jnp.zeros((Bp, H), jnp.float32)

    def step(t, carry):
        h0, c0, h1, c1 = carry
        row = pl.multiple_of(t * Bp, Bp)
        # Layer 0: only the K=128 recurrent dot remains on the serial path;
        # weight refs are indexed at the dot site (no hoisted SSA copies).
        z0 = zx_ref[pl.ds(row, Bp), :] + jnp.dot(
            h0, whh0_ref[...], preferred_element_type=jnp.float32)
        h0n, c0n = gates(z0, c0)
        # Layer 1: two K=128 dots, no per-step concat materialization.
        z1 = (jnp.dot(h0n, wih1_ref[...], preferred_element_type=jnp.float32)
              + jnp.dot(h1, whh1_ref[...], preferred_element_type=jnp.float32)
              + b1_ref[...])
        h1n, c1n = gates(z1, c1)
        return (h0n, c0n, h1n, c1n)

    # Full unroll for short T (gives the LLO scheduler visibility to overlap
    # layer-1(t) / layer-0(t+1) matmuls with the other layer's gate math);
    # partial unroll for long T to bound code size and live ranges.
    unroll = True if T <= 64 else 8
    _, _, h1, _ = jax.lax.fori_loop(
        0, T, step, (zeros, zeros, zeros, zeros), unroll=unroll)

    # Merged fc1/fc2 head on the last top-layer hidden state; lane-dense store.
    y_ref[...] = (jnp.dot(h1, fcw_ref[...], preferred_element_type=jnp.float32)
                  + fcb_ref[...]).astype(y_ref.dtype)


def lstm_model_forward(x, params, *, hidden_dim, output_dim):
    """x: (B, T, D) float32.  Returns (y_a: (B, output_dim), y_t: (B, 1))."""
    B, T, D = x.shape
    H = hidden_dim                      # lane-aligned when H % 128 == 0
    Bp = _round_up(B, 8)                # sublane padding
    Dp = _round_up(D, 128)              # lane padding of the input features
    No = output_dim + 1                 # fc1 + fc2 merged
    Np = _round_up(No, 128)             # lane-dense output slab

    # Time-major, batch/feature zero-padded, flattened to (T*Bp, Dp) so the
    # layer-0 input projection is a single prologue matmul in the kernel.
    x_tm = jnp.transpose(x, (1, 0, 2))
    x_tm = jnp.pad(x_tm, ((0, 0), (0, Bp - B), (0, Dp - D)))
    x_flat = x_tm.reshape(T * Bp, Dp)

    # Permute packed gate columns from PyTorch (i, f, g, o) to (i, f, o, g).
    def perm(w):
        return jnp.concatenate(
            [w[..., :2 * H], w[..., 3 * H:4 * H], w[..., 2 * H:3 * H]], axis=-1)

    wih0 = perm(jnp.pad(params["wih0_t"], ((0, Dp - D), (0, 0))))   # (Dp, 4H)
    whh0 = perm(params["whh0_t"])                                    # (H, 4H)
    b0 = perm(params["b0"])                                          # (1, 4H)
    wih1 = perm(params["wih1_t"])                                    # (H, 4H)
    whh1 = perm(params["whh1_t"])                                    # (H, 4H)
    b1 = perm(params["b1"])                                          # (1, 4H)

    # Merged fc1/fc2 head, padded to a full 128-lane output slab.
    fcw = jnp.concatenate([params["fc1w_t"], params["fc2w_t"]], axis=1)  # (H, No)
    fcb = jnp.concatenate([params["fc1b"], params["fc2b"]], axis=1)      # (1, No)
    fcw = jnp.pad(fcw, ((0, 0), (0, Np - No)))
    fcb = jnp.pad(fcb, ((0, 0), (0, Np - No)))

    kernel = functools.partial(_lstm_kernel, hidden_dim=H, seq_len=T)
    vmem = lambda: pl.BlockSpec(memory_space=pltpu.MemorySpace.VMEM)

    # Single kernel invocation (no grid): ~1.3 MiB of weights/activations fits
    # trivially in VMEM on v5e/v6e (128 MiB) and v7x (64 MiB), and the serial
    # recurrence runs without per-step pipeline overhead.  A batch split
    # across v7x's two TensorCores only pays off for real batches >= 16.
    y = pl.pallas_call(
        kernel,
        in_specs=[vmem() for _ in range(9)],
        out_specs=vmem(),
        out_shape=jax.ShapeDtypeStruct((Bp, Np), jnp.float32),
        scratch_shapes=[pltpu.VMEM((T * Bp, 4 * H), jnp.float32)],
    )(x_flat, wih0, whh0, b0, wih1, whh1, b1, fcw, fcb)

    y_a = y[:B, :output_dim]
    y_t = y[:B, output_dim:output_dim + 1]
    return y_a, y_t


def lstm_model_ref(x, params, *, hidden_dim, output_dim):
    """Pure-JAX reference reproducing torch.nn.LSTM + the two Linear heads."""
    B, T, D = x.shape
    H = hidden_dim
    wih0_t, whh0_t, b0 = params["wih0_t"], params["whh0_t"], params["b0"]
    wih1_t, whh1_t, b1 = params["wih1_t"], params["whh1_t"], params["b1"]

    def cell(x_in, h, c, wih, whh, b):
        z = x_in @ wih + h @ whh + b
        i = jax.nn.sigmoid(z[:, 0 * H:1 * H])
        f = jax.nn.sigmoid(z[:, 1 * H:2 * H])
        g = jnp.tanh(z[:, 2 * H:3 * H])
        o = jax.nn.sigmoid(z[:, 3 * H:4 * H])
        c_new = f * c + i * g
        h_new = o * jnp.tanh(c_new)
        return h_new, c_new

    def step(carry, x_t):
        h0, c0, h1, c1 = carry
        h0, c0 = cell(x_t, h0, c0, wih0_t, whh0_t, b0)
        h1, c1 = cell(h0, h1, c1, wih1_t, whh1_t, b1)
        return (h0, c0, h1, c1), None

    zeros = jnp.zeros((B, H), jnp.float32)
    (h0, c0, h1, c1), _ = jax.lax.scan(
        step, (zeros, zeros, zeros, zeros), jnp.transpose(x, (1, 0, 2)))
    y_a = h1 @ params["fc1w_t"] + params["fc1b"]
    y_t = h1 @ params["fc2w_t"] + params["fc2b"]
    return y_a, y_t


def init_params(key, input_dim, hidden_dim, output_dim):
    """Deterministic synthetic init (PyTorch-style uniform(-1/sqrt(H), 1/sqrt(H)))."""
    H = hidden_dim
    s = 1.0 / jnp.sqrt(jnp.float32(H))
    keys = jax.random.split(key, 12)
    u = lambda k, shape: jax.random.uniform(k, shape, jnp.float32, -s, s)

    # torch weights are (4H, in) / (4H, H); store transposed for (B,K)@(K,4H).
    wih0 = u(keys[0], (4 * H, input_dim))
    whh0 = u(keys[1], (4 * H, H))
    bih0, bhh0 = u(keys[2], (4 * H,)), u(keys[3], (4 * H,))
    wih1 = u(keys[4], (4 * H, H))
    whh1 = u(keys[5], (4 * H, H))
    bih1, bhh1 = u(keys[6], (4 * H,)), u(keys[7], (4 * H,))
    fc1w = u(keys[8], (output_dim, H))
    fc1b = u(keys[9], (output_dim,))
    fc2w = u(keys[10], (1, H))
    fc2b = u(keys[11], (1,))

    return {
        "wih0_t": wih0.T, "whh0_t": whh0.T, "b0": (bih0 + bhh0)[None, :],
        "wih1_t": wih1.T, "whh1_t": whh1.T, "b1": (bih1 + bhh1)[None, :],
        "fc1w_t": fc1w.T, "fc1b": fc1b[None, :],
        "fc2w_t": fc2w.T, "fc2b": fc2b[None, :],
    }


if __name__ == "__main__":
    # Shapes consistent with the module: input_dim = len(chars)+5,
    # output_dim = len(chars), hidden_dim = 128, num_layers = 2.
    batch = 2
    seq_len = 8
    input_dim = 16      # e.g. 11 chars + 5 extra features
    hidden_dim = 128    # as in the source module (keeps gates lane-aligned)
    output_dim = 11

    key = jax.random.PRNGKey(0)
    k_params, k_x = jax.random.split(key)
    params = init_params(k_params, input_dim, hidden_dim, output_dim)
    x = jax.random.normal(k_x, (batch, seq_len, input_dim), jnp.float32)

    y_a, y_t = lstm_model_forward(x, params,
                                  hidden_dim=hidden_dim, output_dim=output_dim)
    jax.block_until_ready((y_a, y_t))

    y_a_ref, y_t_ref = lstm_model_ref(x, params,
                                      hidden_dim=hidden_dim, output_dim=output_dim)
    assert y_a.shape == (batch, output_dim) and y_t.shape == (batch, 1)
    assert jnp.allclose(y_a, y_a_ref, atol=1e-4, rtol=1e-4)
    assert jnp.allclose(y_t, y_t_ref, atol=1e-4, rtol=1e-4)

    print("KERNEL_OK")
</pallas_src>

<mosaic_0001>
module attributes {stable_mosaic.version = 11 : i64} {
  func.func @_lstm_kernel(%arg0: memref<64x128xf32, #tpu.memory_space<vmem>>, %arg1: memref<128x512xf32, #tpu.memory_space<vmem>>, %arg2: memref<128x512xf32, #tpu.memory_space<vmem>>, %arg3: memref<1x512xf32, #tpu.memory_space<vmem>>, %arg4: memref<128x512xf32, #tpu.memory_space<vmem>>, %arg5: memref<128x512xf32, #tpu.memory_space<vmem>>, %arg6: memref<1x512xf32, #tpu.memory_space<vmem>>, %arg7: memref<128x128xf32, #tpu.memory_space<vmem>>, %arg8: memref<1x128xf32, #tpu.memory_space<vmem>>, %arg9: memref<8x128xf32, #tpu.memory_space<vmem>>, %arg10: memref<64x512xf32, #tpu.memory_space<vmem>>) attributes {dimension_semantics = [], scalar_prefetch = 0 : i64, scratch_operands = 1 : i64, tpu.core_type = #tpu.core_type<tc>} {
    %c0 = arith.constant 0 : index
    %c0_0 = arith.constant 0 : index
    %0 = vector.load %arg0[%c0, %c0_0] : memref<64x128xf32, #tpu.memory_space<vmem>>, vector<64x128xf32>
    %c0_1 = arith.constant 0 : index
    %c0_2 = arith.constant 0 : index
    %1 = vector.load %arg1[%c0_1, %c0_2] : memref<128x512xf32, #tpu.memory_space<vmem>>, vector<128x512xf32>
    %cst = arith.constant dense<0.000000e+00> : vector<64x512xf32>
    %2 = tpu.matmul %0, %1, %cst {dimension_numbers = #tpu.dot_dimension_numbers<[1], [0], [0], [1], [0, 0, 1, 1], [], []>} : vector<64x128xf32>, vector<128x512xf32>, vector<64x512xf32> -> vector<64x512xf32>
    %c0_3 = arith.constant 0 : index
    %c0_4 = arith.constant 0 : index
    %3 = vector.load %arg3[%c0_3, %c0_4] : memref<1x512xf32, #tpu.memory_space<vmem>>, vector<1x512xf32>
    %4 = vector.broadcast %3 : vector<1x512xf32> to vector<64x512xf32>
    %5 = arith.addf %2, %4 : vector<64x512xf32>
    %c0_5 = arith.constant 0 : index
    %c0_6 = arith.constant 0 : index
    %6 = vector.load %arg10[%c0_5, %c0_6] : memref<64x512xf32, #tpu.memory_space<vmem>>, vector<64x512xf32>
    tpu.vector_store %arg10[%c0_5, %c0_6], %5 {strides = array<i32>} : memref<64x512xf32, #tpu.memory_space<vmem>>, vector<64x512xf32>,
    %cst_7 = arith.constant 0.000000e+00 : f32
    %7 = vector.broadcast %cst_7 : f32 to vector<8x128xf32>
    %c0_i32 = arith.constant 0 : i32
    %c8_i32 = arith.constant 8 : i32
    %8 = arith.muli %c0_i32, %c8_i32 : i32
    %9 = tpu.assume_multiple %8, 8 : i32
    %10 = arith.index_cast %9 : i32 to index
    %c0_8 = arith.constant 0 : index
    %11 = vector.load %arg10[%10, %c0_8] : memref<64x512xf32, #tpu.memory_space<vmem>>, vector<8x512xf32>
    %c0_9 = arith.constant 0 : index
    %c0_10 = arith.constant 0 : index
    %12 = vector.load %arg2[%c0_9, %c0_10] : memref<128x512xf32, #tpu.memory_space<vmem>>, vector<128x512xf32>
    %cst_11 = arith.constant dense<0.000000e+00> : vector<8x512xf32>
    %13 = tpu.matmul %7, %12, %cst_11 {dimension_numbers = #tpu.dot_dimension_numbers<[1], [0], [0], [1], [0, 0, 1, 1], [], []>} : vector<8x128xf32>, vector<128x512xf32>, vector<8x512xf32> -> vector<8x512xf32>
    %14 = arith.addf %11, %13 : vector<8x512xf32>
    %15 = vector.extract_strided_slice %14 {offsets = [0, 0], sizes = [8, 384], strides = [1, 1]} : vector<8x512xf32> to vector<8x384xf32>
    %16 = arith.negf %15 : vector<8x384xf32>
    %17 = math.exp %16 : vector<8x384xf32>
    %cst_12 = arith.constant 1.000000e+00 : f32
    %18 = vector.broadcast %cst_12 : f32 to vector<8x384xf32>
    %19 = arith.addf %18, %17 : vector<8x384xf32>
    %20 = arith.divf %18, %19 : vector<8x384xf32>
    %21 = vector.extract_strided_slice %14 {offsets = [0, 384], sizes = [8, 128], strides = [1, 1]} : vector<8x512xf32> to vector<8x128xf32>
    %22 = math.tanh %21 : vector<8x128xf32>
    %23 = vector.extract_strided_slice %20 {offsets = [0, 0], sizes = [8, 128], strides = [1, 1]} : vector<8x384xf32> to vector<8x128xf32>
    %24 = vector.extract_strided_slice %20 {offsets = [0, 128], sizes = [8, 128], strides = [1, 1]} : vector<8x384xf32> to vector<8x128xf32>
    %25 = vector.extract_strided_slice %20 {offsets = [0, 256], sizes = [8, 128], strides = [1, 1]} : vector<8x384xf32> to vector<8x128xf32>
    %26 = arith.mulf %24, %7 : vector<8x128xf32>
    %27 = arith.mulf %23, %22 : vector<8x128xf32>
    %28 = arith.addf %26, %27 : vector<8x128xf32>
    %29 = math.tanh %28 : vector<8x128xf32>
    %30 = arith.mulf %25, %29 : vector<8x128xf32>
    %c0_13 = arith.constant 0 : index
    %c0_14 = arith.constant 0 : index
    %31 = vector.load %arg4[%c0_13, %c0_14] : memref<128x512xf32, #tpu.memory_space<vmem>>, vector<128x512xf32>
    %cst_15 = arith.constant dense<0.000000e+00> : vector<8x512xf32>
    %32 = tpu.matmul %30, %31, %cst_15 {dimension_numbers = #tpu.dot_dimension_numbers<[1], [0], [0], [1], [0, 0, 1, 1], [], []>} : vector<8x128xf32>, vector<128x512xf32>, vector<8x512xf32> -> vector<8x512xf32>
    %c0_16 = arith.constant 0 : index
    %c0_17 = arith.constant 0 : index
    %33 = vector.load %arg5[%c0_16, %c0_17] : memref<128x512xf32, #tpu.memory_space<vmem>>, vector<128x512xf32>
    %cst_18 = arith.constant dense<0.000000e+00> : vector<8x512xf32>
    %34 = tpu.matmul %7, %33, %cst_18 {dimension_numbers = #tpu.dot_dimension_numbers<[1], [0], [0], [1], [0, 0, 1, 1], [], []>} : vector<8x128xf32>, vector<128x512xf32>, vector<8x512xf32> -> vector<8x512xf32>
    %35 = arith.addf %32, %34 : vector<8x512xf32>
    %c0_19 = arith.constant 0 : index
    %c0_20 = arith.constant 0 : index
    %36 = vector.load %arg6[%c0_19, %c0_20] : memref<1x512xf32, #tpu.memory_space<vmem>>, vector<1x512xf32>
    %37 = vector.broadcast %36 : vector<1x512xf32> to vector<8x512xf32>
    %38 = arith.addf %35, %37 : vector<8x512xf32>
    %39 = vector.extract_strided_slice %38 {offsets = [0, 0], sizes = [8, 384], strides = [1, 1]} : vector<8x512xf32> to vector<8x384xf32>
    %40 = arith.negf %39 : vector<8x384xf32>
    %41 = math.exp %40 : vector<8x384xf32>
    %cst_21 = arith.constant 1.000000e+00 : f32
    %42 = vector.broadcast %cst_21 : f32 to vector<8x384xf32>
    %43 = arith.addf %42, %41 : vector<8x384xf32>
    %44 = arith.divf %42, %43 : vector<8x384xf32>
    %45 = vector.extract_strided_slice %38 {offsets = [0, 384], sizes = [8, 128], strides = [1, 1]} : vector<8x512xf32> to vector<8x128xf32>
    %46 = math.tanh %45 : vector<8x128xf32>
    %47 = vector.extract_strided_slice %44 {offsets = [0, 0], sizes = [8, 128], strides = [1, 1]} : vector<8x384xf32> to vector<8x128xf32>
    %48 = vector.extract_strided_slice %44 {offsets = [0, 128], sizes = [8, 128], strides = [1, 1]} : vector<8x384xf32> to vector<8x128xf32>
    %49 = vector.extract_strided_slice %44 {offsets = [0, 256], sizes = [8, 128], strides = [1, 1]} : vector<8x384xf32> to vector<8x128xf32>
    %50 = arith.mulf %48, %7 : vector<8x128xf32>
    %51 = arith.mulf %47, %46 : vector<8x128xf32>
    %52 = arith.addf %50, %51 : vector<8x128xf32>
    %53 = math.tanh %52 : vector<8x128xf32>
    %54 = arith.mulf %49, %53 : vector<8x128xf32>
    %c1_i32 = arith.constant 1 : i32
    %c8_i32_22 = arith.constant 8 : i32
    %55 = arith.muli %c1_i32, %c8_i32_22 : i32
    %56 = tpu.assume_multiple %55, 8 : i32
    %57 = arith.index_cast %56 : i32 to index
    %c0_23 = arith.constant 0 : index
    %58 = vector.load %arg10[%57, %c0_23] : memref<64x512xf32, #tpu.memory_space<vmem>>, vector<8x512xf32>
    %c0_24 = arith.constant 0 : index
    %c0_25 = arith.constant 0 : index
    %59 = vector.load %arg2[%c0_24, %c0_25] : memref<128x512xf32, #tpu.memory_space<vmem>>, vector<128x512xf32>
    %cst_26 = arith.constant dense<0.000000e+00> : vector<8x512xf32>
    %60 = tpu.matmul %30, %59, %cst_26 {dimension_numbers = #tpu.dot_dimension_numbers<[1], [0], [0], [1], [0, 0, 1, 1], [], []>} : vector<8x128xf32>, vector<128x512xf32>, vector<8x512xf32> -> vector<8x512xf32>
    %61 = arith.addf %58, %60 : vector<8x512xf32>
    %62 = vector.extract_strided_slice %61 {offsets = [0, 0], sizes = [8, 384], strides = [1, 1]} : vector<8x512xf32> to vector<8x384xf32>
    %63 = arith.negf %62 : vector<8x384xf32>
    %64 = math.exp %63 : vector<8x384xf32>
    %cst_27 = arith.constant 1.000000e+00 : f32
    %65 = vector.broadcast %cst_27 : f32 to vector<8x384xf32>
    %66 = arith.addf %65, %64 : vector<8x384xf32>
    %67 = arith.divf %65, %66 : vector<8x384xf32>
    %68 = vector.extract_strided_slice %61 {offsets = [0, 384], sizes = [8, 128], strides = [1, 1]} : vector<8x512xf32> to vector<8x128xf32>
    %69 = math.tanh %68 : vector<8x128xf32>
    %70 = vector.extract_strided_slice %67 {offsets = [0, 0], sizes = [8, 128], strides = [1, 1]} : vector<8x384xf32> to vector<8x128xf32>
    %71 = vector.extract_strided_slice %67 {offsets = [0, 128], sizes = [8, 128], strides = [1, 1]} : vector<8x384xf32> to vector<8x128xf32>
    %72 = vector.extract_strided_slice %67 {offsets = [0, 256], sizes = [8, 128], strides = [1, 1]} : vector<8x384xf32> to vector<8x128xf32>
    %73 = arith.mulf %71, %28 : vector<8x128xf32>
    %74 = arith.mulf %70, %69 : vector<8x128xf32>
    %75 = arith.addf %73, %74 : vector<8x128xf32>
    %76 = math.tanh %75 : vector<8x128xf32>
    %77 = arith.mulf %72, %76 : vector<8x128xf32>
    %c0_28 = arith.constant 0 : index
    %c0_29 = arith.constant 0 : index
    %78 = vector.load %arg4[%c0_28, %c0_29] : memref<128x512xf32, #tpu.memory_space<vmem>>, vector<128x512xf32>
    %cst_30 = arith.constant dense<0.000000e+00> : vector<8x512xf32>
    %79 = tpu.matmul %77, %78, %cst_30 {dimension_numbers = #tpu.dot_dimension_numbers<[1], [0], [0], [1], [0, 0, 1, 1], [], []>} : vector<8x128xf32>, vector<128x512xf32>, vector<8x512xf32> -> vector<8x512xf32>
    %c0_31 = arith.constant 0 : index
    %c0_32 = arith.constant 0 : index
    %80 = vector.load %arg5[%c0_31, %c0_32] : memref<128x512xf32, #tpu.memory_space<vmem>>, vector<128x512xf32>
    %cst_33 = arith.constant dense<0.000000e+00> : vector<8x512xf32>
    %81 = tpu.matmul %54, %80, %cst_33 {dimension_numbers = #tpu.dot_dimension_numbers<[1], [0], [0], [1], [0, 0, 1, 1], [], []>} : vector<8x128xf32>, vector<128x512xf32>, vector<8x512xf32> -> vector<8x512xf32>
    %82 = arith.addf %79, %81 : vector<8x512xf32>
    %c0_34 = arith.constant 0 : index
    %c0_35 = arith.constant 0 : index
    %83 = vector.load %arg6[%c0_34, %c0_35] : memref<1x512xf32, #tpu.memory_space<vmem>>, vector<1x512xf32>
    %84 = vector.broadcast %83 : vector<1x512xf32> to vector<8x512xf32>
    %85 = arith.addf %82, %84 : vector<8x512xf32>
    %86 = vector.extract_strided_slice %85 {offsets = [0, 0], sizes = [8, 384], strides = [1, 1]} : vector<8x512xf32> to vector<8x384xf32>
    %87 = arith.negf %86 : vector<8x384xf32>
    %88 = math.exp %87 : vector<8x384xf32>
    %cst_36 = arith.constant 1.000000e+00 : f32
    %89 = vector.broadcast %cst_36 : f32 to vector<8x384xf32>
    %90 = arith.addf %89, %88 : vector<8x384xf32>
    %91 = arith.divf %89, %90 : vector<8x384xf32>
    %92 = vector.extract_strided_slice %85 {offsets = [0, 384], sizes = [8, 128], strides = [1, 1]} : vector<8x512xf32> to vector<8x128xf32>
    %93 = math.tanh %92 : vector<8x128xf32>
    %94 = vector.extract_strided_slice %91 {offsets = [0, 0], sizes = [8, 128], strides = [1, 1]} : vector<8x384xf32> to vector<8x128xf32>
    %95 = vector.extract_strided_slice %91 {offsets = [0, 128], sizes = [8, 128], strides = [1, 1]} : vector<8x384xf32> to vector<8x128xf32>
    %96 = vector.extract_strided_slice %91 {offsets = [0, 256], sizes = [8, 128], strides = [1, 1]} : vector<8x384xf32> to vector<8x128xf32>
    %97 = arith.mulf %95, %52 : vector<8x128xf32>
    %98 = arith.mulf %94, %93 : vector<8x128xf32>
    %99 = arith.addf %97, %98 : vector<8x128xf32>
    %100 = math.tanh %99 : vector<8x128xf32>
    %101 = arith.mulf %96, %100 : vector<8x128xf32>
    %c2_i32 = arith.constant 2 : i32
    %c8_i32_37 = arith.constant 8 : i32
    %102 = arith.muli %c2_i32, %c8_i32_37 : i32
    %103 = tpu.assume_multiple %102, 8 : i32
    %104 = arith.index_cast %103 : i32 to index
    %c0_38 = arith.constant 0 : index
    %105 = vector.load %arg10[%104, %c0_38] : memref<64x512xf32, #tpu.memory_space<vmem>>, vector<8x512xf32>
    %c0_39 = arith.constant 0 : index
    %c0_40 = arith.constant 0 : index
    %106 = vector.load %arg2[%c0_39, %c0_40] : memref<128x512xf32, #tpu.memory_space<vmem>>, vector<128x512xf32>
    %cst_41 = arith.constant dense<0.000000e+00> : vector<8x512xf32>
    %107 = tpu.matmul %77, %106, %cst_41 {dimension_numbers = #tpu.dot_dimension_numbers<[1], [0], [0], [1], [0, 0, 1, 1], [], []>} : vector<8x128xf32>, vector<128x512xf32>, vector<8x512xf32> -> vector<8x512xf32>
    %108 = arith.addf %105, %107 : vector<8x512xf32>
    %109 = vector.extract_strided_slice %108 {offsets = [0, 0], sizes = [8, 384], strides = [1, 1]} : vector<8x512xf32> to vector<8x384xf32>
    %110 = arith.negf %109 : vector<8x384xf32>
    %111 = math.exp %110 : vector<8x384xf32>
    %cst_42 = arith.constant 1.000000e+00 : f32
    %112 = vector.broadcast %cst_42 : f32 to vector<8x384xf32>
    %113 = arith.addf %112, %111 : vector<8x384xf32>
    %114 = arith.divf %112, %113 : vector<8x384xf32>
    %115 = vector.extract_strided_slice %108 {offsets = [0, 384], sizes = [8, 128], strides = [1, 1]} : vector<8x512xf32> to vector<8x128xf32>
    %116 = math.tanh %115 : vector<8x128xf32>
    %117 = vector.extract_strided_slice %114 {offsets = [0, 0], sizes = [8, 128], strides = [1, 1]} : vector<8x384xf32> to vector<8x128xf32>
    %118 = vector.extract_strided_slice %114 {offsets = [0, 128], sizes = [8, 128], strides = [1, 1]} : vector<8x384xf32> to vector<8x128xf32>
    %119 = vector.extract_strided_slice %114 {offsets = [0, 256], sizes = [8, 128], strides = [1, 1]} : vector<8x384xf32> to vector<8x128xf32>
    %120 = arith.mulf %118, %75 : vector<8x128xf32>
    %121 = arith.mulf %117, %116 : vector<8x128xf32>
    %122 = arith.addf %120, %121 : vector<8x128xf32>
    %123 = math.tanh %122 : vector<8x128xf32>
    %124 = arith.mulf %119, %123 : vector<8x128xf32>
    %c0_43 = arith.constant 0 : index
    %c0_44 = arith.constant 0 : index
    %125 = vector.load %arg4[%c0_43, %c0_44] : memref<128x512xf32, #tpu.memory_space<vmem>>, vector<128x512xf32>
    %cst_45 = arith.constant dense<0.000000e+00> : vector<8x512xf32>
    %126 = tpu.matmul %124, %125, %cst_45 {dimension_numbers = #tpu.dot_dimension_numbers<[1], [0], [0], [1], [0, 0, 1, 1], [], []>} : vector<8x128xf32>, vector<128x512xf32>, vector<8x512xf32> -> vector<8x512xf32>
    %c0_46 = arith.constant 0 : index
    %c0_47 = arith.constant 0 : index
    %127 = vector.load %arg5[%c0_46, %c0_47] : memref<128x512xf32, #tpu.memory_space<vmem>>, vector<128x512xf32>
    %cst_48 = arith.constant dense<0.000000e+00> : vector<8x512xf32>
    %128 = tpu.matmul %101, %127, %cst_48 {dimension_numbers = #tpu.dot_dimension_numbers<[1], [0], [0], [1], [0, 0, 1, 1], [], []>} : vector<8x128xf32>, vector<128x512xf32>, vector<8x512xf32> -> vector<8x512xf32>
    %129 = arith.addf %126, %128 : vector<8x512xf32>
    %c0_49 = arith.constant 0 : index
    %c0_50 = arith.constant 0 : index
    %130 = vector.load %arg6[%c0_49, %c0_50] : memref<1x512xf32, #tpu.memory_space<vmem>>, vector<1x512xf32>
    %131 = vector.broadcast %130 : vector<1x512xf32> to vector<8x512xf32>
    %132 = arith.addf %129, %131 : vector<8x512xf32>
    %133 = vector.extract_strided_slice %132 {offsets = [0, 0], sizes = [8, 384], strides = [1, 1]} : vector<8x512xf32> to vector<8x384xf32>
    %134 = arith.negf %133 : vector<8x384xf32>
    %135 = math.exp %134 : vector<8x384xf32>
    %cst_51 = arith.constant 1.000000e+00 : f32
    %136 = vector.broadcast %cst_51 : f32 to vector<8x384xf32>
    %137 = arith.addf %136, %135 : vector<8x384xf32>
    %138 = arith.divf %136, %137 : vector<8x384xf32>
    %139 = vector.extract_strided_slice %132 {offsets = [0, 384], sizes = [8, 128], strides = [1, 1]} : vector<8x512xf32> to vector<8x128xf32>
    %140 = math.tanh %139 : vector<8x128xf32>
    %141 = vector.extract_strided_slice %138 {offsets = [0, 0], sizes = [8, 128], strides = [1, 1]} : vector<8x384xf32> to vector<8x128xf32>
    %142 = vector.extract_strided_slice %138 {offsets = [0, 128], sizes = [8, 128], strides = [1, 1]} : vector<8x384xf32> to vector<8x128xf32>
    %143 = vector.extract_strided_slice %138 {offsets = [0, 256], sizes = [8, 128], strides = [1, 1]} : vector<8x384xf32> to vector<8x128xf32>
    %144 = arith.mulf %142, %99 : vector<8x128xf32>
    %145 = arith.mulf %141, %140 : vector<8x128xf32>
    %146 = arith.addf %144, %145 : vector<8x128xf32>
    %147 = math.tanh %146 : vector<8x128xf32>
    %148 = arith.mulf %143, %147 : vector<8x128xf32>
    %c3_i32 = arith.constant 3 : i32
    %c8_i32_52 = arith.constant 8 : i32
    %149 = arith.muli %c3_i32, %c8_i32_52 : i32
    %150 = tpu.assume_multiple %149, 8 : i32
    %151 = arith.index_cast %150 : i32 to index
    %c0_53 = arith.constant 0 : index
    %152 = vector.load %arg10[%151, %c0_53] : memref<64x512xf32, #tpu.memory_space<vmem>>, vector<8x512xf32>
    %c0_54 = arith.constant 0 : index
    %c0_55 = arith.constant 0 : index
    %153 = vector.load %arg2[%c0_54, %c0_55] : memref<128x512xf32, #tpu.memory_space<vmem>>, vector<128x512xf32>
    %cst_56 = arith.constant dense<0.000000e+00> : vector<8x512xf32>
    %154 = tpu.matmul %124, %153, %cst_56 {dimension_numbers = #tpu.dot_dimension_numbers<[1], [0], [0], [1], [0, 0, 1, 1], [], []>} : vector<8x128xf32>, vector<128x512xf32>, vector<8x512xf32> -> vector<8x512xf32>
    %155 = arith.addf %152, %154 : vector<8x512xf32>
    %156 = vector.extract_strided_slice %155 {offsets = [0, 0], sizes = [8, 384], strides = [1, 1]} : vector<8x512xf32> to vector<8x384xf32>
    %157 = arith.negf %156 : vector<8x384xf32>
    %158 = math.exp %157 : vector<8x384xf32>
    %cst_57 = arith.constant 1.000000e+00 : f32
    %159 = vector.broadcast %cst_57 : f32 to vector<8x384xf32>
    %160 = arith.addf %159, %158 : vector<8x384xf32>
    %161 = arith.divf %159, %160 : vector<8x384xf32>
    %162 = vector.extract_strided_slice %155 {offsets = [0, 384], sizes = [8, 128], strides = [1, 1]} : vector<8x512xf32> to vector<8x128xf32>
    %163 = math.tanh %162 : vector<8x128xf32>
    %164 = vector.extract_strided_slice %161 {offsets = [0, 0], sizes = [8, 128], strides = [1, 1]} : vector<8x384xf32> to vector<8x128xf32>
    %165 = vector.extract_strided_slice %161 {offsets = [0, 128], sizes = [8, 128], strides = [1, 1]} : vector<8x384xf32> to vector<8x128xf32>
    %166 = vector.extract_strided_slice %161 {offsets = [0, 256], sizes = [8, 128], strides = [1, 1]} : vector<8x384xf32> to vector<8x128xf32>
    %167 = arith.mulf %165, %122 : vector<8x128xf32>
    %168 = arith.mulf %164, %163 : vector<8x128xf32>
    %169 = arith.addf %167, %168 : vector<8x128xf32>
    %170 = math.tanh %169 : vector<8x128xf32>
    %171 = arith.mulf %166, %170 : vector<8x128xf32>
    %c0_58 = arith.constant 0 : index
    %c0_59 = arith.constant 0 : index
    %172 = vector.load %arg4[%c0_58, %c0_59] : memref<128x512xf32, #tpu.memory_space<vmem>>, vector<128x512xf32>
    %cst_60 = arith.constant dense<0.000000e+00> : vector<8x512xf32>
    %173 = tpu.matmul %171, %172, %cst_60 {dimension_numbers = #tpu.dot_dimension_numbers<[1], [0], [0], [1], [0, 0, 1, 1], [], []>} : vector<8x128xf32>, vector<128x512xf32>, vector<8x512xf32> -> vector<8x512xf32>
    %c0_61 = arith.constant 0 : index
    %c0_62 = arith.constant 0 : index
    %174 = vector.load %arg5[%c0_61, %c0_62] : memref<128x512xf32, #tpu.memory_space<vmem>>, vector<128x512xf32>
    %cst_63 = arith.constant dense<0.000000e+00> : vector<8x512xf32>
    %175 = tpu.matmul %148, %174, %cst_63 {dimension_numbers = #tpu.dot_dimension_numbers<[1], [0], [0], [1], [0, 0, 1, 1], [], []>} : vector<8x128xf32>, vector<128x512xf32>, vector<8x512xf32> -> vector<8x512xf32>
    %176 = arith.addf %173, %175 : vector<8x512xf32>
    %c0_64 = arith.constant 0 : index
    %c0_65 = arith.constant 0 : index
    %177 = vector.load %arg6[%c0_64, %c0_65] : memref<1x512xf32, #tpu.memory_space<vmem>>, vector<1x512xf32>
    %178 = vector.broadcast %177 : vector<1x512xf32> to vector<8x512xf32>
    %179 = arith.addf %176, %178 : vector<8x512xf32>
    %180 = vector.extract_strided_slice %179 {offsets = [0, 0], sizes = [8, 384], strides = [1, 1]} : vector<8x512xf32> to vector<8x384xf32>
    %181 = arith.negf %180 : vector<8x384xf32>
    %182 = math.exp %181 : vector<8x384xf32>
    %cst_66 = arith.constant 1.000000e+00 : f32
    %183 = vector.broadcast %cst_66 : f32 to vector<8x384xf32>
    %184 = arith.addf %183, %182 : vector<8x384xf32>
    %185 = arith.divf %183, %184 : vector<8x384xf32>
    %186 = vector.extract_strided_slice %179 {offsets = [0, 384], sizes = [8, 128], strides = [1, 1]} : vector<8x512xf32> to vector<8x128xf32>
    %187 = math.tanh %186 : vector<8x128xf32>
    %188 = vector.extract_strided_slice %185 {offsets = [0, 0], sizes = [8, 128], strides = [1, 1]} : vector<8x384xf32> to vector<8x128xf32>
    %189 = vector.extract_strided_slice %185 {offsets = [0, 128], sizes = [8, 128], strides = [1, 1]} : vector<8x384xf32> to vector<8x128xf32>
    %190 = vector.extract_strided_slice %185 {offsets = [0, 256], sizes = [8, 128], strides = [1, 1]} : vector<8x384xf32> to vector<8x128xf32>
    %191 = arith.mulf %189, %146 : vector<8x128xf32>
    %192 = arith.mulf %188, %187 : vector<8x128xf32>
    %193 = arith.addf %191, %192 : vector<8x128xf32>
    %194 = math.tanh %193 : vector<8x128xf32>
    %195 = arith.mulf %190, %194 : vector<8x128xf32>
    %c4_i32 = arith.constant 4 : i32
    %c8_i32_67 = arith.constant 8 : i32
    %196 = arith.muli %c4_i32, %c8_i32_67 : i32
    %197 = tpu.assume_multiple %196, 8 : i32
    %198 = arith.index_cast %197 : i32 to index
    %c0_68 = arith.constant 0 : index
    %199 = vector.load %arg10[%198, %c0_68] : memref<64x512xf32, #tpu.memory_space<vmem>>, vector<8x512xf32>
    %c0_69 = arith.constant 0 : index
    %c0_70 = arith.constant 0 : index
    %200 = vector.load %arg2[%c0_69, %c0_70] : memref<128x512xf32, #tpu.memory_space<vmem>>, vector<128x512xf32>
    %cst_71 = arith.constant dense<0.000000e+00> : vector<8x512xf32>
    %201 = tpu.matmul %171, %200, %cst_71 {dimension_numbers = #tpu.dot_dimension_numbers<[1], [0], [0], [1], [0, 0, 1, 1], [], []>} : vector<8x128xf32>, vector<128x512xf32>, vector<8x512xf32> -> vector<8x512xf32>
    %202 = arith.addf %199, %201 : vector<8x512xf32>
    %203 = vector.extract_strided_slice %202 {offsets = [0, 0], sizes = [8, 384], strides = [1, 1]} : vector<8x512xf32> to vector<8x384xf32>
    %204 = arith.negf %203 : vector<8x384xf32>
    %205 = math.exp %204 : vector<8x384xf32>
    %cst_72 = arith.constant 1.000000e+00 : f32
    %206 = vector.broadcast %cst_72 : f32 to vector<8x384xf32>
    %207 = arith.addf %206, %205 : vector<8x384xf32>
    %208 = arith.divf %206, %207 : vector<8x384xf32>
    %209 = vector.extract_strided_slice %202 {offsets = [0, 384], sizes = [8, 128], strides = [1, 1]} : vector<8x512xf32> to vector<8x128xf32>
    %210 = math.tanh %209 : vector<8x128xf32>
    %211 = vector.extract_strided_slice %208 {offsets = [0, 0], sizes = [8, 128], strides = [1, 1]} : vector<8x384xf32> to vector<8x128xf32>
    %212 = vector.extract_strided_slice %208 {offsets = [0, 128], sizes = [8, 128], strides = [1, 1]} : vector<8x384xf32> to vector<8x128xf32>
    %213 = vector.extract_strided_slice %208 {offsets = [0, 256], sizes = [8, 128], strides = [1, 1]} : vector<8x384xf32> to vector<8x128xf32>
    %214 = arith.mulf %212, %169 : vector<8x128xf32>
    %215 = arith.mulf %211, %210 : vector<8x128xf32>
    %216 = arith.addf %214, %215 : vector<8x128xf32>
    %217 = math.tanh %216 : vector<8x128xf32>
    %218 = arith.mulf %213, %217 : vector<8x128xf32>
    %c0_73 = arith.constant 0 : index
    %c0_74 = arith.constant 0 : index
    %219 = vector.load %arg4[%c0_73, %c0_74] : memref<128x512xf32, #tpu.memory_space<vmem>>, vector<128x512xf32>
    %cst_75 = arith.constant dense<0.000000e+00> : vector<8x512xf32>
    %220 = tpu.matmul %218, %219, %cst_75 {dimension_numbers = #tpu.dot_dimension_numbers<[1], [0], [0], [1], [0, 0, 1, 1], [], []>} : vector<8x128xf32>, vector<128x512xf32>, vector<8x512xf32> -> vector<8x512xf32>
    %c0_76 = arith.constant 0 : index
    %c0_77 = arith.constant 0 : index
    %221 = vector.load %arg5[%c0_76, %c0_77] : memref<128x512xf32, #tpu.memory_space<vmem>>, vector<128x512xf32>
    %cst_78 = arith.constant dense<0.000000e+00> : vector<8x512xf32>
    %222 = tpu.matmul %195, %221, %cst_78 {dimension_numbers = #tpu.dot_dimension_numbers<[1], [0], [0], [1], [0, 0, 1, 1], [], []>} : vector<8x128xf32>, vector<128x512xf32>, vector<8x512xf32> -> vector<8x512xf32>
    %223 = arith.addf %220, %222 : vector<8x512xf32>
    %c0_79 = arith.constant 0 : index
    %c0_80 = arith.constant 0 : index
    %224 = vector.load %arg6[%c0_79, %c0_80] : memref<1x512xf32, #tpu.memory_space<vmem>>, vector<1x512xf32>
    %225 = vector.broadcast %224 : vector<1x512xf32> to vector<8x512xf32>
    %226 = arith.addf %223, %225 : vector<8x512xf32>
    %227 = vector.extract_strided_slice %226 {offsets = [0, 0], sizes = [8, 384], strides = [1, 1]} : vector<8x512xf32> to vector<8x384xf32>
    %228 = arith.negf %227 : vector<8x384xf32>
    %229 = math.exp %228 : vector<8x384xf32>
    %cst_81 = arith.constant 1.000000e+00 : f32
    %230 = vector.broadcast %cst_81 : f32 to vector<8x384xf32>
    %231 = arith.addf %230, %229 : vector<8x384xf32>
    %232 = arith.divf %230, %231 : vector<8x384xf32>
    %233 = vector.extract_strided_slice %226 {offsets = [0, 384], sizes = [8, 128], strides = [1, 1]} : vector<8x512xf32> to vector<8x128xf32>
    %234 = math.tanh %233 : vector<8x128xf32>
    %235 = vector.extract_strided_slice %232 {offsets = [0, 0], sizes = [8, 128], strides = [1, 1]} : vector<8x384xf32> to vector<8x128xf32>
    %236 = vector.extract_strided_slice %232 {offsets = [0, 128], sizes = [8, 128], strides = [1, 1]} : vector<8x384xf32> to vector<8x128xf32>
    %237 = vector.extract_strided_slice %232 {offsets = [0, 256], sizes = [8, 128], strides = [1, 1]} : vector<8x384xf32> to vector<8x128xf32>
    %238 = arith.mulf %236, %193 : vector<8x128xf32>
    %239 = arith.mulf %235, %234 : vector<8x128xf32>
    %240 = arith.addf %238, %239 : vector<8x128xf32>
    %241 = math.tanh %240 : vector<8x128xf32>
    %242 = arith.mulf %237, %241 : vector<8x128xf32>
    %c5_i32 = arith.constant 5 : i32
    %c8_i32_82 = arith.constant 8 : i32
    %243 = arith.muli %c5_i32, %c8_i32_82 : i32
    %244 = tpu.assume_multiple %243, 8 : i32
    %245 = arith.index_cast %244 : i32 to index
    %c0_83 = arith.constant 0 : index
    %246 = vector.load %arg10[%245, %c0_83] : memref<64x512xf32, #tpu.memory_space<vmem>>, vector<8x512xf32>
    %c0_84 = arith.constant 0 : index
    %c0_85 = arith.constant 0 : index
    %247 = vector.load %arg2[%c0_84, %c0_85] : memref<128x512xf32, #tpu.memory_space<vmem>>, vector<128x512xf32>
    %cst_86 = arith.constant dense<0.000000e+00> : vector<8x512xf32>
    %248 = tpu.matmul %218, %247, %cst_86 {dimension_numbers = #tpu.dot_dimension_numbers<[1], [0], [0], [1], [0, 0, 1, 1], [], []>} : vector<8x128xf32>, vector<128x512xf32>, vector<8x512xf32> -> vector<8x512xf32>
    %249 = arith.addf %246, %248 : vector<8x512xf32>
    %250 = vector.extract_strided_slice %249 {offsets = [0, 0], sizes = [8, 384], strides = [1, 1]} : vector<8x512xf32> to vector<8x384xf32>
    %251 = arith.negf %250 : vector<8x384xf32>
    %252 = math.exp %251 : vector<8x384xf32>
    %cst_87 = arith.constant 1.000000e+00 : f32
    %253 = vector.broadcast %cst_87 : f32 to vector<8x384xf32>
    %254 = arith.addf %253, %252 : vector<8x384xf32>
    %255 = arith.divf %253, %254 : vector<8x384xf32>
    %256 = vector.extract_strided_slice %249 {offsets = [0, 384], sizes = [8, 128], strides = [1, 1]} : vector<8x512xf32> to vector<8x128xf32>
    %257 = math.tanh %256 : vector<8x128xf32>
    %258 = vector.extract_strided_slice %255 {offsets = [0, 0], sizes = [8, 128], strides = [1, 1]} : vector<8x384xf32> to vector<8x128xf32>
    %259 = vector.extract_strided_slice %255 {offsets = [0, 128], sizes = [8, 128], strides = [1, 1]} : vector<8x384xf32> to vector<8x128xf32>
    %260 = vector.extract_strided_slice %255 {offsets = [0, 256], sizes = [8, 128], strides = [1, 1]} : vector<8x384xf32> to vector<8x128xf32>
    %261 = arith.mulf %259, %216 : vector<8x128xf32>
    %262 = arith.mulf %258, %257 : vector<8x128xf32>
    %263 = arith.addf %261, %262 : vector<8x128xf32>
    %264 = math.tanh %263 : vector<8x128xf32>
    %265 = arith.mulf %260, %264 : vector<8x128xf32>
    %c0_88 = arith.constant 0 : index
    %c0_89 = arith.constant 0 : index
    %266 = vector.load %arg4[%c0_88, %c0_89] : memref<128x512xf32, #tpu.memory_space<vmem>>, vector<128x512xf32>
    %cst_90 = arith.constant dense<0.000000e+00> : vector<8x512xf32>
    %267 = tpu.matmul %265, %266, %cst_90 {dimension_numbers = #tpu.dot_dimension_numbers<[1], [0], [0], [1], [0, 0, 1, 1], [], []>} : vector<8x128xf32>, vector<128x512xf32>, vector<8x512xf32> -> vector<8x512xf32>
    %c0_91 = arith.constant 0 : index
    %c0_92 = arith.constant 0 : index
    %268 = vector.load %arg5[%c0_91, %c0_92] : memref<128x512xf32, #tpu.memory_space<vmem>>, vector<128x512xf32>
    %cst_93 = arith.constant dense<0.000000e+00> : vector<8x512xf32>
    %269 = tpu.matmul %242, %268, %cst_93 {dimension_numbers = #tpu.dot_dimension_numbers<[1], [0], [0], [1], [0, 0, 1, 1], [], []>} : vector<8x128xf32>, vector<128x512xf32>, vector<8x512xf32> -> vector<8x512xf32>
    %270 = arith.addf %267, %269 : vector<8x512xf32>
    %c0_94 = arith.constant 0 : index
    %c0_95 = arith.constant 0 : index
    %271 = vector.load %arg6[%c0_94, %c0_95] : memref<1x512xf32, #tpu.memory_space<vmem>>, vector<1x512xf32>
    %272 = vector.broadcast %271 : vector<1x512xf32> to vector<8x512xf32>
    %273 = arith.addf %270, %272 : vector<8x512xf32>
    %274 = vector.extract_strided_slice %273 {offsets = [0, 0], sizes = [8, 384], strides = [1, 1]} : vector<8x512xf32> to vector<8x384xf32>
    %275 = arith.negf %274 : vector<8x384xf32>
    %276 = math.exp %275 : vector<8x384xf32>
    %cst_96 = arith.constant 1.000000e+00 : f32
    %277 = vector.broadcast %cst_96 : f32 to vector<8x384xf32>
    %278 = arith.addf %277, %276 : vector<8x384xf32>
    %279 = arith.divf %277, %278 : vector<8x384xf32>
    %280 = vector.extract_strided_slice %273 {offsets = [0, 384], sizes = [8, 128], strides = [1, 1]} : vector<8x512xf32> to vector<8x128xf32>
    %281 = math.tanh %280 : vector<8x128xf32>
    %282 = vector.extract_strided_slice %279 {offsets = [0, 0], sizes = [8, 128], strides = [1, 1]} : vector<8x384xf32> to vector<8x128xf32>
    %283 = vector.extract_strided_slice %279 {offsets = [0, 128], sizes = [8, 128], strides = [1, 1]} : vector<8x384xf32> to vector<8x128xf32>
    %284 = vector.extract_strided_slice %279 {offsets = [0, 256], sizes = [8, 128], strides = [1, 1]} : vector<8x384xf32> to vector<8x128xf32>
    %285 = arith.mulf %283, %240 : vector<8x128xf32>
    %286 = arith.mulf %282, %281 : vector<8x128xf32>
    %287 = arith.addf %285, %286 : vector<8x128xf32>
    %288 = math.tanh %287 : vector<8x128xf32>
    %289 = arith.mulf %284, %288 : vector<8x128xf32>
    %c6_i32 = arith.constant 6 : i32
    %c8_i32_97 = arith.constant 8 : i32
    %290 = arith.muli %c6_i32, %c8_i32_97 : i32
    %291 = tpu.assume_multiple %290, 8 : i32
    %292 = arith.index_cast %291 : i32 to index
    %c0_98 = arith.constant 0 : index
    %293 = vector.load %arg10[%292, %c0_98] : memref<64x512xf32, #tpu.memory_space<vmem>>, vector<8x512xf32>
    %c0_99 = arith.constant 0 : index
    %c0_100 = arith.constant 0 : index
    %294 = vector.load %arg2[%c0_99, %c0_100] : memref<128x512xf32, #tpu.memory_space<vmem>>, vector<128x512xf32>
    %cst_101 = arith.constant dense<0.000000e+00> : vector<8x512xf32>
    %295 = tpu.matmul %265, %294, %cst_101 {dimension_numbers = #tpu.dot_dimension_numbers<[1], [0], [0], [1], [0, 0, 1, 1], [], []>} : vector<8x128xf32>, vector<128x512xf32>, vector<8x512xf32> -> vector<8x512xf32>
    %296 = arith.addf %293, %295 : vector<8x512xf32>
    %297 = vector.extract_strided_slice %296 {offsets = [0, 0], sizes = [8, 384], strides = [1, 1]} : vector<8x512xf32> to vector<8x384xf32>
    %298 = arith.negf %297 : vector<8x384xf32>
    %299 = math.exp %298 : vector<8x384xf32>
    %cst_102 = arith.constant 1.000000e+00 : f32
    %300 = vector.broadcast %cst_102 : f32 to vector<8x384xf32>
    %301 = arith.addf %300, %299 : vector<8x384xf32>
    %302 = arith.divf %300, %301 : vector<8x384xf32>
    %303 = vector.extract_strided_slice %296 {offsets = [0, 384], sizes = [8, 128], strides = [1, 1]} : vector<8x512xf32> to vector<8x128xf32>
    %304 = math.tanh %303 : vector<8x128xf32>
    %305 = vector.extract_strided_slice %302 {offsets = [0, 0], sizes = [8, 128], strides = [1, 1]} : vector<8x384xf32> to vector<8x128xf32>
    %306 = vector.extract_strided_slice %302 {offsets = [0, 128], sizes = [8, 128], strides = [1, 1]} : vector<8x384xf32> to vector<8x128xf32>
    %307 = vector.extract_strided_slice %302 {offsets = [0, 256], sizes = [8, 128], strides = [1, 1]} : vector<8x384xf32> to vector<8x128xf32>
    %308 = arith.mulf %306, %263 : vector<8x128xf32>
    %309 = arith.mulf %305, %304 : vector<8x128xf32>
    %310 = arith.addf %308, %309 : vector<8x128xf32>
    %311 = math.tanh %310 : vector<8x128xf32>
    %312 = arith.mulf %307, %311 : vector<8x128xf32>
    %c0_103 = arith.constant 0 : index
    %c0_104 = arith.constant 0 : index
    %313 = vector.load %arg4[%c0_103, %c0_104] : memref<128x512xf32, #tpu.memory_space<vmem>>, vector<128x512xf32>
    %cst_105 = arith.constant dense<0.000000e+00> : vector<8x512xf32>
    %314 = tpu.matmul %312, %313, %cst_105 {dimension_numbers = #tpu.dot_dimension_numbers<[1], [0], [0], [1], [0, 0, 1, 1], [], []>} : vector<8x128xf32>, vector<128x512xf32>, vector<8x512xf32> -> vector<8x512xf32>
    %c0_106 = arith.constant 0 : index
    %c0_107 = arith.constant 0 : index
    %315 = vector.load %arg5[%c0_106, %c0_107] : memref<128x512xf32, #tpu.memory_space<vmem>>, vector<128x512xf32>
    %cst_108 = arith.constant dense<0.000000e+00> : vector<8x512xf32>
    %316 = tpu.matmul %289, %315, %cst_108 {dimension_numbers = #tpu.dot_dimension_numbers<[1], [0], [0], [1], [0, 0, 1, 1], [], []>} : vector<8x128xf32>, vector<128x512xf32>, vector<8x512xf32> -> vector<8x512xf32>
    %317 = arith.addf %314, %316 : vector<8x512xf32>
    %c0_109 = arith.constant 0 : index
    %c0_110 = arith.constant 0 : index
    %318 = vector.load %arg6[%c0_109, %c0_110] : memref<1x512xf32, #tpu.memory_space<vmem>>, vector<1x512xf32>
    %319 = vector.broadcast %318 : vector<1x512xf32> to vector<8x512xf32>
    %320 = arith.addf %317, %319 : vector<8x512xf32>
    %321 = vector.extract_strided_slice %320 {offsets = [0, 0], sizes = [8, 384], strides = [1, 1]} : vector<8x512xf32> to vector<8x384xf32>
    %322 = arith.negf %321 : vector<8x384xf32>
    %323 = math.exp %322 : vector<8x384xf32>
    %cst_111 = arith.constant 1.000000e+00 : f32
    %324 = vector.broadcast %cst_111 : f32 to vector<8x384xf32>
    %325 = arith.addf %324, %323 : vector<8x384xf32>
    %326 = arith.divf %324, %325 : vector<8x384xf32>
    %327 = vector.extract_strided_slice %320 {offsets = [0, 384], sizes = [8, 128], strides = [1, 1]} : vector<8x512xf32> to vector<8x128xf32>
    %328 = math.tanh %327 : vector<8x128xf32>
    %329 = vector.extract_strided_slice %326 {offsets = [0, 0], sizes = [8, 128], strides = [1, 1]} : vector<8x384xf32> to vector<8x128xf32>
    %330 = vector.extract_strided_slice %326 {offsets = [0, 128], sizes = [8, 128], strides = [1, 1]} : vector<8x384xf32> to vector<8x128xf32>
    %331 = vector.extract_strided_slice %326 {offsets = [0, 256], sizes = [8, 128], strides = [1, 1]} : vector<8x384xf32> to vector<8x128xf32>
    %332 = arith.mulf %330, %287 : vector<8x128xf32>
    %333 = arith.mulf %329, %328 : vector<8x128xf32>
    %334 = arith.addf %332, %333 : vector<8x128xf32>
    %335 = math.tanh %334 : vector<8x128xf32>
    %336 = arith.mulf %331, %335 : vector<8x128xf32>
    %c7_i32 = arith.constant 7 : i32
    %c8_i32_112 = arith.constant 8 : i32
    %337 = arith.muli %c7_i32, %c8_i32_112 : i32
    %338 = tpu.assume_multiple %337, 8 : i32
    %339 = arith.index_cast %338 : i32 to index
    %c0_113 = arith.constant 0 : index
    %340 = vector.load %arg10[%339, %c0_113] : memref<64x512xf32, #tpu.memory_space<vmem>>, vector<8x512xf32>
    %c0_114 = arith.constant 0 : index
    %c0_115 = arith.constant 0 : index
    %341 = vector.load %arg2[%c0_114, %c0_115] : memref<128x512xf32, #tpu.memory_space<vmem>>, vector<128x512xf32>
    %cst_116 = arith.constant dense<0.000000e+00> : vector<8x512xf32>
    %342 = tpu.matmul %312, %341, %cst_116 {dimension_numbers = #tpu.dot_dimension_numbers<[1], [0], [0], [1], [0, 0, 1, 1], [], []>} : vector<8x128xf32>, vector<128x512xf32>, vector<8x512xf32> -> vector<8x512xf32>
    %343 = arith.addf %340, %342 : vector<8x512xf32>
    %344 = vector.extract_strided_slice %343 {offsets = [0, 0], sizes = [8, 384], strides = [1, 1]} : vector<8x512xf32> to vector<8x384xf32>
    %345 = arith.negf %344 : vector<8x384xf32>
    %346 = math.exp %345 : vector<8x384xf32>
    %cst_117 = arith.constant 1.000000e+00 : f32
    %347 = vector.broadcast %cst_117 : f32 to vector<8x384xf32>
    %348 = arith.addf %347, %346 : vector<8x384xf32>
    %349 = arith.divf %347, %348 : vector<8x384xf32>
    %350 = vector.extract_strided_slice %343 {offsets = [0, 384], sizes = [8, 128], strides = [1, 1]} : vector<8x512xf32> to vector<8x128xf32>
    %351 = math.tanh %350 : vector<8x128xf32>
    %352 = vector.extract_strided_slice %349 {offsets = [0, 0], sizes = [8, 128], strides = [1, 1]} : vector<8x384xf32> to vector<8x128xf32>
    %353 = vector.extract_strided_slice %349 {offsets = [0, 128], sizes = [8, 128], strides = [1, 1]} : vector<8x384xf32> to vector<8x128xf32>
    %354 = vector.extract_strided_slice %349 {offsets = [0, 256], sizes = [8, 128], strides = [1, 1]} : vector<8x384xf32> to vector<8x128xf32>
    %355 = arith.mulf %353, %310 : vector<8x128xf32>
    %356 = arith.mulf %352, %351 : vector<8x128xf32>
    %357 = arith.addf %355, %356 : vector<8x128xf32>
    %358 = math.tanh %357 : vector<8x128xf32>
    %359 = arith.mulf %354, %358 : vector<8x128xf32>
    %c0_118 = arith.constant 0 : index
    %c0_119 = arith.constant 0 : index
    %360 = vector.load %arg4[%c0_118, %c0_119] : memref<128x512xf32, #tpu.memory_space<vmem>>, vector<128x512xf32>
    %cst_120 = arith.constant dense<0.000000e+00> : vector<8x512xf32>
    %361 = tpu.matmul %359, %360, %cst_120 {dimension_numbers = #tpu.dot_dimension_numbers<[1], [0], [0], [1], [0, 0, 1, 1], [], []>} : vector<8x128xf32>, vector<128x512xf32>, vector<8x512xf32> -> vector<8x512xf32>
    %c0_121 = arith.constant 0 : index
    %c0_122 = arith.constant 0 : index
    %362 = vector.load %arg5[%c0_121, %c0_122] : memref<128x512xf32, #tpu.memory_space<vmem>>, vector<128x512xf32>
    %cst_123 = arith.constant dense<0.000000e+00> : vector<8x512xf32>
    %363 = tpu.matmul %336, %362, %cst_123 {dimension_numbers = #tpu.dot_dimension_numbers<[1], [0], [0], [1], [0, 0, 1, 1], [], []>} : vector<8x128xf32>, vector<128x512xf32>, vector<8x512xf32> -> vector<8x512xf32>
    %364 = arith.addf %361, %363 : vector<8x512xf32>
    %c0_124 = arith.constant 0 : index
    %c0_125 = arith.constant 0 : index
    %365 = vector.load %arg6[%c0_124, %c0_125] : memref<1x512xf32, #tpu.memory_space<vmem>>, vector<1x512xf32>
    %366 = vector.broadcast %365 : vector<1x512xf32> to vector<8x512xf32>
    %367 = arith.addf %364, %366 : vector<8x512xf32>
    %368 = vector.extract_strided_slice %367 {offsets = [0, 0], sizes = [8, 384], strides = [1, 1]} : vector<8x512xf32> to vector<8x384xf32>
    %369 = arith.negf %368 : vector<8x384xf32>
    %370 = math.exp %369 : vector<8x384xf32>
    %cst_126 = arith.constant 1.000000e+00 : f32
    %371 = vector.broadcast %cst_126 : f32 to vector<8x384xf32>
    %372 = arith.addf %371, %370 : vector<8x384xf32>
    %373 = arith.divf %371, %372 : vector<8x384xf32>
    %374 = vector.extract_strided_slice %367 {offsets = [0, 384], sizes = [8, 128], strides = [1, 1]} : vector<8x512xf32> to vector<8x128xf32>
    %375 = math.tanh %374 : vector<8x128xf32>
    %376 = vector.extract_strided_slice %373 {offsets = [0, 0], sizes = [8, 128], strides = [1, 1]} : vector<8x384xf32> to vector<8x128xf32>
    %377 = vector.extract_strided_slice %373 {offsets = [0, 128], sizes = [8, 128], strides = [1, 1]} : vector<8x384xf32> to vector<8x128xf32>
    %378 = vector.extract_strided_slice %373 {offsets = [0, 256], sizes = [8, 128], strides = [1, 1]} : vector<8x384xf32> to vector<8x128xf32>
    %379 = arith.mulf %377, %334 : vector<8x128xf32>
    %380 = arith.mulf %376, %375 : vector<8x128xf32>
    %381 = arith.addf %379, %380 : vector<8x128xf32>
    %382 = math.tanh %381 : vector<8x128xf32>
    %383 = arith.mulf %378, %382 : vector<8x128xf32>
    %c8_i32_127 = arith.constant 8 : i32
    %c0_128 = arith.constant 0 : index
    %c0_129 = arith.constant 0 : index
    %384 = vector.load %arg7[%c0_128, %c0_129] : memref<128x128xf32, #tpu.memory_space<vmem>>, vector<128x128xf32>
    %cst_130 = arith.constant dense<0.000000e+00> : vector<8x128xf32>
    %385 = tpu.matmul %383, %384, %cst_130 {dimension_numbers = #tpu.dot_dimension_numbers<[1], [0], [0], [1], [0, 0, 1, 1], [], []>} : vector<8x128xf32>, vector<128x128xf32>, vector<8x128xf32> -> vector<8x128xf32>
    %c0_131 = arith.constant 0 : index
    %c0_132 = arith.constant 0 : index
    %386 = vector.load %arg8[%c0_131, %c0_132] : memref<1x128xf32, #tpu.memory_space<vmem>>, vector<1x128xf32>
    %387 = vector.broadcast %386 : vector<1x128xf32> to vector<8x128xf32>
    %388 = arith.addf %385, %387 : vector<8x128xf32>
    %c0_133 = arith.constant 0 : index
    %c0_134 = arith.constant 0 : index
    %389 = vector.load %arg9[%c0_133, %c0_134] : memref<8x128xf32, #tpu.memory_space<vmem>>, vector<8x128xf32>
    tpu.vector_store %arg9[%c0_133, %c0_134], %388 {strides = array<i32>} : memref<8x128xf32, #tpu.memory_space<vmem>>, vector<8x128xf32>,
    return
  }
}

</mosaic_0001>

<llo_original>
// kernel: tpu_custom_call.1
$region0: #{tpu_custom_call.1}
  #allocation0 [shape = 'u32[]', space=smem, size = 0x4, offset = 0x4, fixed_abs, tag = 'smem constant byte address 0x4 - core index']
  #allocation1 [shape = 'u32[144,128]{1,0:T(1,128)}', space=vmem, size = 0x12000, scoped, tag = 'internal scratch']
  #allocation2 [shape = 'f32[64,512]{1,0:T(8,128)}', space=vmem, size = 0x20000, scoped, tag = 'scratch operand']
  %s0 = inlined_call_operand.hbm [shape: f32[64,128], index: 0, kind: input, shape index: {}]
  %s1 = inlined_call_operand.hbm [shape: f32[128,512], index: 1, kind: input, shape index: {}]
  %s2 = inlined_call_operand.hbm [shape: f32[128,512], index: 2, kind: input, shape index: {}]
  %s3 = inlined_call_operand.vmem [shape: f32[1,512], index: 3, kind: input, shape index: {}]
  %s4 = inlined_call_operand.hbm [shape: f32[128,512], index: 4, kind: input, shape index: {}]
  %s5 = inlined_call_operand.hbm [shape: f32[128,512], index: 5, kind: input, shape index: {}]
  %s6 = inlined_call_operand.vmem [shape: f32[1,512], index: 6, kind: input, shape index: {}]
  %s7 = inlined_call_operand.hbm [shape: f32[128,128], index: 7, kind: input, shape index: {}]
  %s8 = inlined_call_operand.vmem [shape: f32[1,128], index: 8, kind: input, shape index: {}]
  %s9 = inlined_call_operand.hbm [shape: f32[8,128], index: 9, kind: output, shape index: {}]
  %s10 = sld [smem:[#allocation0]]
  $region70: #{tpu_custom_call.1} parent=0
    _
  %s12 = ssub.s32 1, %s10
  %s13 = scalar_select 0, %s12, %s10
  $region1: #{tpu_custom_call.1} parent=0
    #allocation3 [shape = 'u8[32768]{0}', space=vmem, size = 0x8000, scoped, tag = 'input window, operand 0, single buffered']
    #allocation4 [shape = 's32[1]{0}', space=sflag, size = 0x4, scoped, tag = 'scoped memory for tpu_custom_call.1']
    #allocation5 [shape = 's32[1]{0}', space=sflag, size = 0x4, scoped, tag = 'scoped memory for tpu_custom_call.1']
    #allocation6 [shape = 'u8[262144]{0}', space=vmem, size = 0x40000, scoped, tag = 'input window, operand 1, single buffered']
    #allocation7 [shape = 's32[1]{0}', space=sflag, size = 0x4, scoped, tag = 'scoped memory for tpu_custom_call.1']
    #allocation8 [shape = 'u8[262144]{0}', space=vmem, size = 0x40000, scoped, tag = 'input window, operand 2, single buffered']
    #allocation9 [shape = 'u8[262144]{0}', space=vmem, size = 0x40000, scoped, tag = 'input window, operand 4, single buffered']
    #allocation10 [shape = 's32[1]{0}', space=sflag, size = 0x4, scoped, tag = 'scoped memory for tpu_custom_call.1']
    #allocation11 [shape = 'u8[262144]{0}', space=vmem, size = 0x40000, scoped, tag = 'input window, operand 5, single buffered']
    #allocation12 [shape = 'u8[65536]{0}', space=vmem, size = 0x10000, scoped, tag = 'input window, operand 7, single buffered']
    #allocation13 [shape = 's32[1]{0}', space=sflag, size = 0x4, scoped, tag = 'scoped memory for tpu_custom_call.1']
    #allocation14 [shape = 'u8[4096]{0}', space=vmem, size = 0x1000, scoped, tag = 'output window, operand 0, single buffered']
    %14 = vsyncpa [#allocation4], 0
    %15 = vsyncpa [#allocation7], 0
    %16 = vsyncpa [#allocation10], 0
    %17 = vsyncpa [#allocation13], 0
    %18 = vsyncpa [#allocation5], 0
    // Predicated region
    $region2: #{tpu_custom_call.1} parent=1 // pred_check
      _
    $region3: #{tpu_custom_call.1} parent=1 // pred_check_branch
      %20 = sbr.rel (0) target = $region5
    $region4: #{tpu_custom_call.1} parent=1 // pred_region
      %s22 = ssub.s32 1024, 1024
      %23 = vsyncadd [#allocation4], %s22
      %s24 = sshll.u32 [#allocation3], 4
      %s25 = int_to_ptr.vmem [resolvable:$true] %s24
      %30 = dma.hbm_to_vmem [thread:$0]  %s0, 1024, %s25, [#allocation4], 128, 128, 8
    $region5: #{tpu_custom_call.1} parent=1 // pred_fallthru
      _
    // Predicated region
    $region6: #{tpu_custom_call.1} parent=1 // pred_check
      _
    $region7: #{tpu_custom_call.1} parent=1 // pred_check_branch
      %32 = sbr.rel (0) target = $region9
    $region8: #{tpu_custom_call.1} parent=1 // pred_region
      %s34 = ssub.s32 8192, 8192
      %35 = vsyncadd [#allocation7], %s34
      %s36 = sshll.u32 [#allocation6], 4
      %s37 = int_to_ptr.vmem [resolvable:$true] %s36
      %42 = dma.hbm_to_vmem [thread:$0]  %s1, 8192, %s37, [#allocation7], 512, 512, 32
    $region9: #{tpu_custom_call.1} parent=1 // pred_fallthru
      _
    // Predicated region
    $region10: #{tpu_custom_call.1} parent=1 // pred_check
      _
    $region11: #{tpu_custom_call.1} parent=1 // pred_check_branch
      %44 = sbr.rel (0) target = $region13
    $region12: #{tpu_custom_call.1} parent=1 // pred_region
      %s46 = ssub.s32 8192, 8192
      %47 = vsyncadd [#allocation7], %s46
      %s48 = sshll.u32 [#allocation8], 4
      %s49 = int_to_ptr.vmem [resolvable:$true] %s48
      %54 = dma.hbm_to_vmem [thread:$0]  %s2, 8192, %s49, [#allocation7], 512, 512, 32
    $region13: #{tpu_custom_call.1} parent=1 // pred_fallthru
      _
    // Predicated region
    $region14: #{tpu_custom_call.1} parent=1 // pred_check
      _
    $region15: #{tpu_custom_call.1} parent=1 // pred_check_branch
      %56 = sbr.rel (0) target = $region17
    $region16: #{tpu_custom_call.1} parent=1 // pred_region
      _
    $region17: #{tpu_custom_call.1} parent=1 // pred_fallthru
      _
    // Predicated region
    $region18: #{tpu_custom_call.1} parent=1 // pred_check
      _
    $region19: #{tpu_custom_call.1} parent=1 // pred_check_branch
      %58 = sbr.rel (0) target = $region21
    $region20: #{tpu_custom_call.1} parent=1 // pred_region
      %s60 = ssub.s32 8192, 8192
      %61 = vsyncadd [#allocation10], %s60
      %s62 = sshll.u32 [#allocation9], 4
      %s63 = int_to_ptr.vmem [resolvable:$true] %s62
      %68 = dma.hbm_to_vmem [thread:$0]  %s4, 8192, %s63, [#allocation10], 512, 512, 32
    $region21: #{tpu_custom_call.1} parent=1 // pred_fallthru
      _
    // Predicated region
    $region22: #{tpu_custom_call.1} parent=1 // pred_check
      _
    $region23: #{tpu_custom_call.1} parent=1 // pred_check_branch
      %70 = sbr.rel (0) target = $region25
    $region24: #{tpu_custom_call.1} parent=1 // pred_region
      %s72 = ssub.s32 8192, 8192
      %73 = vsyncadd [#allocation10], %s72
      %s74 = sshll.u32 [#allocation11], 4
      %s75 = int_to_ptr.vmem [resolvable:$true] %s74
      %80 = dma.hbm_to_vmem [thread:$0]  %s5, 8192, %s75, [#allocation10], 512, 512, 32
    $region25: #{tpu_custom_call.1} parent=1 // pred_fallthru
      _
    // Predicated region
    $region26: #{tpu_custom_call.1} parent=1 // pred_check
      _
    $region27: #{tpu_custom_call.1} parent=1 // pred_check_branch
      %82 = sbr.rel (0) target = $region29
    $region28: #{tpu_custom_call.1} parent=1 // pred_region
      _
    $region29: #{tpu_custom_call.1} parent=1 // pred_fallthru
      _
    // Predicated region
    $region30: #{tpu_custom_call.1} parent=1 // pred_check
      _
    $region31: #{tpu_custom_call.1} parent=1 // pred_check_branch
      %84 = sbr.rel (0) target = $region33
    $region32: #{tpu_custom_call.1} parent=1 // pred_region
      %s86 = ssub.s32 2048, 2048
      %87 = vsyncadd [#allocation13], %s86
      %s88 = sshll.u32 [#allocation12], 4
      %s89 = int_to_ptr.vmem [resolvable:$true] %s88
      %94 = dma.hbm_to_vmem [thread:$0]  %s7, 2048, %s89, [#allocation13], 128, 128, 8
    $region33: #{tpu_custom_call.1} parent=1 // pred_fallthru
      _
    // Predicated region
    $region34: #{tpu_custom_call.1} parent=1 // pred_check
      _
    $region35: #{tpu_custom_call.1} parent=1 // pred_check_branch
      %96 = sbr.rel (0) target = $region37
    $region36: #{tpu_custom_call.1} parent=1 // pred_region
      _
    $region37: #{tpu_custom_call.1} parent=1 // pred_fallthru
      _
    // Predicated region
    $region38: #{tpu_custom_call.1} parent=1 // pred_check
      _
    $region39: #{tpu_custom_call.1} parent=1 // pred_check_branch
      %98 = sbr.rel (0) target = $region41
    $region40: #{tpu_custom_call.1} parent=1 // pred_region
      %99 = dma.done [#allocation4], 1024
    $region41: #{tpu_custom_call.1} parent=1 // pred_fallthru
      _
    // Predicated region
    $region42: #{tpu_custom_call.1} parent=1 // pred_check
      _
    $region43: #{tpu_custom_call.1} parent=1 // pred_check_branch
      %101 = sbr.rel (0) target = $region45
    $region44: #{tpu_custom_call.1} parent=1 // pred_region
      %102 = dma.done [#allocation7], 8192
    $region45: #{tpu_custom_call.1} parent=1 // pred_fallthru
      _
    // Predicated region
    $region46: #{tpu_custom_call.1} parent=1 // pred_check
      _
    $region47: #{tpu_custom_call.1} parent=1 // pred_check_branch
      %104 = sbr.rel (0) target = $region49
    $region48: #{tpu_custom_call.1} parent=1 // pred_region
      %105 = dma.done [#allocation7], 8192
    $region49: #{tpu_custom_call.1} parent=1 // pred_fallthru
      _
    // Predicated region
    $region50: #{tpu_custom_call.1} parent=1 // pred_check
      _
    $region51: #{tpu_custom_call.1} parent=1 // pred_check_branch
      %107 = sbr.rel (0) target = $region53
    $region52: #{tpu_custom_call.1} parent=1 // pred_region
      %108 = dma.done [#allocation10], 8192
    $region53: #{tpu_custom_call.1} parent=1 // pred_fallthru
      _
    // Predicated region
    $region54: #{tpu_custom_call.1} parent=1 // pred_check
      _
    $region55: #{tpu_custom_call.1} parent=1 // pred_check_branch
      %110 = sbr.rel (0) target = $region57
    $region56: #{tpu_custom_call.1} parent=1 // pred_region
      %111 = dma.done [#allocation10], 8192
    $region57: #{tpu_custom_call.1} parent=1 // pred_fallthru
      _
    // Predicated region
    $region58: #{tpu_custom_call.1} parent=1 // pred_check
      _
    $region59: #{tpu_custom_call.1} parent=1 // pred_check_branch
      %113 = sbr.rel (0) target = $region61
    $region60: #{tpu_custom_call.1} parent=1 // pred_region
      %114 = dma.done [#allocation13], 2048
    $region61: #{tpu_custom_call.1} parent=1 // pred_fallthru
      _
    %v115 = vld [vmem:[#allocation3] sm:$0xff]
    %v116 = vld [vmem:[#allocation3 + $0x8] sm:$0xff]
    %v117 = vld [vmem:[#allocation3 + $0x10] sm:$0xff]
    %v118 = vld [vmem:[#allocation3 + $0x18] sm:$0xff]
    %v119 = vld [vmem:[#allocation3 + $0x20] sm:$0xff]
    %v120 = vld [vmem:[#allocation3 + $0x28] sm:$0xff]
    %v121 = vld [vmem:[#allocation3 + $0x30] sm:$0xff]
    %v122 = vld [vmem:[#allocation3 + $0x38] sm:$0xff]
    %v123 = vld [vmem:[#allocation6] sm:$0xff]
    %v124 = vld [vmem:[#allocation6 + $0x8] sm:$0xff]
    %v125 = vld [vmem:[#allocation6 + $0x10] sm:$0xff]
    %v126 = vld [vmem:[#allocation6 + $0x18] sm:$0xff]
    %v127 = vld [vmem:[#allocation6 + $0x20] sm:$0xff]
    %v128 = vld [vmem:[#allocation6 + $0x28] sm:$0xff]
    %v129 = vld [vmem:[#allocation6 + $0x30] sm:$0xff]
    %v130 = vld [vmem:[#allocation6 + $0x38] sm:$0xff]
    %v131 = vld [vmem:[#allocation6 + $0x40] sm:$0xff]
    %v132 = vld [vmem:[#allocation6 + $0x48] sm:$0xff]
    %v133 = vld [vmem:[#allocation6 + $0x50] sm:$0xff]
    %v134 = vld [vmem:[#allocation6 + $0x58] sm:$0xff]
    %v135 = vld [vmem:[#allocation6 + $0x60] sm:$0xff]
    %v136 = vld [vmem:[#allocation6 + $0x68] sm:$0xff]
    %v137 = vld [vmem:[#allocation6 + $0x70] sm:$0xff]
    %v138 = vld [vmem:[#allocation6 + $0x78] sm:$0xff]
    %v139 = vld [vmem:[#allocation6 + $0x80] sm:$0xff]
    %v140 = vld [vmem:[#allocation6 + $0x88] sm:$0xff]
    %v141 = vld [vmem:[#allocation6 + $0x90] sm:$0xff]
    %v142 = vld [vmem:[#allocation6 + $0x98] sm:$0xff]
    %v143 = vld [vmem:[#allocation6 + $0xa0] sm:$0xff]
    %v144 = vld [vmem:[#allocation6 + $0xa8] sm:$0xff]
    %v145 = vld [vmem:[#allocation6 + $0xb0] sm:$0xff]
    %v146 = vld [vmem:[#allocation6 + $0xb8] sm:$0xff]
    %v147 = vld [vmem:[#allocation6 + $0xc0] sm:$0xff]
    %v148 = vld [vmem:[#allocation6 + $0xc8] sm:$0xff]
    %v149 = vld [vmem:[#allocation6 + $0xd0] sm:$0xff]
    %v150 = vld [vmem:[#allocation6 + $0xd8] sm:$0xff]
    %v151 = vld [vmem:[#allocation6 + $0xe0] sm:$0xff]
    %v152 = vld [vmem:[#allocation6 + $0xe8] sm:$0xff]
    %v153 = vld [vmem:[#allocation6 + $0xf0] sm:$0xff]
    %v154 = vld [vmem:[#allocation6 + $0xf8] sm:$0xff]
    %v155 = vld [vmem:[#allocation6 + $0x100] sm:$0xff]
    %v156 = vld [vmem:[#allocation6 + $0x108] sm:$0xff]
    %v157 = vld [vmem:[#allocation6 + $0x110] sm:$0xff]
    %v158 = vld [vmem:[#allocation6 + $0x118] sm:$0xff]
    %v159 = vld [vmem:[#allocation6 + $0x120] sm:$0xff]
    %v160 = vld [vmem:[#allocation6 + $0x128] sm:$0xff]
    %v161 = vld [vmem:[#allocation6 + $0x130] sm:$0xff]
    %v162 = vld [vmem:[#allocation6 + $0x138] sm:$0xff]
    %v163 = vld [vmem:[#allocation6 + $0x140] sm:$0xff]
    %v164 = vld [vmem:[#allocation6 + $0x148] sm:$0xff]
    %v165 = vld [vmem:[#allocation6 + $0x150] sm:$0xff]
    %v166 = vld [vmem:[#allocation6 + $0x158] sm:$0xff]
    %v167 = vld [vmem:[#allocation6 + $0x160] sm:$0xff]
    %v168 = vld [vmem:[#allocation6 + $0x168] sm:$0xff]
    %v169 = vld [vmem:[#allocation6 + $0x170] sm:$0xff]
    %v170 = vld [vmem:[#allocation6 + $0x178] sm:$0xff]
    %v171 = vld [vmem:[#allocation6 + $0x180] sm:$0xff]
    %v172 = vld [vmem:[#allocation6 + $0x188] sm:$0xff]
    %v173 = vld [vmem:[#allocation6 + $0x190] sm:$0xff]
    %v174 = vld [vmem:[#allocation6 + $0x198] sm:$0xff]
    %v175 = vld [vmem:[#allocation6 + $0x1a0] sm:$0xff]
    %v176 = vld [vmem:[#allocation6 + $0x1a8] sm:$0xff]
    %v177 = vld [vmem:[#allocation6 + $0x1b0] sm:$0xff]
    %v178 = vld [vmem:[#allocation6 + $0x1b8] sm:$0xff]
    %v179 = vld [vmem:[#allocation6 + $0x1c0] sm:$0xff]
    %v180 = vld [vmem:[#allocation6 + $0x1c8] sm:$0xff]
    %v181 = vld [vmem:[#allocation6 + $0x1d0] sm:$0xff]
    %v182 = vld [vmem:[#allocation6 + $0x1d8] sm:$0xff]
    %v183 = vld [vmem:[#allocation6 + $0x1e0] sm:$0xff]
    %v184 = vld [vmem:[#allocation6 + $0x1e8] sm:$0xff]
    %v185 = vld [vmem:[#allocation6 + $0x1f0] sm:$0xff]
    %v186 = vld [vmem:[#allocation6 + $0x1f8] sm:$0xff]
    %v187 = vld [vmem:[%s3] sm:$0xf]
    %v189 = vlaneseq
    %v190 = vshrl.u32 %v189, 7
    %v191 = vsub.s32 0, %v190
    %v192 = vrot.slane %v187, %v191
    %v193 = vlaneseq
    %v194 = vshrl.u32 %v193, 7
    %v195 = vsub.s32 1, %v194
    %v196 = vrot.slane %v187, %v195
    %v197 = vlaneseq
    %v198 = vshrl.u32 %v197, 7
    %v199 = vsub.s32 2, %v198
    %v200 = vrot.slane %v187, %v199
    %v201 = vlaneseq
    %v202 = vshrl.u32 %v201, 7
    %v203 = vsub.s32 3, %v202
    %v204 = vrot.slane %v187, %v203
    %209 = vmatprep.subr.mxu0 %v184
    %210 = vmatpush1.msra.mxu0 %v183
    %211 = vmatprep.subr.mxu0 %v180
    %212 = vmatpush1.msra.mxu0 %v179
    %213 = vmatprep.subr.mxu0 %v176
    %214 = vmatpush1.msra.mxu0 %v175
    %215 = vmatprep.subr.mxu0 %v172
    %216 = vmatpush1.msra.mxu0 %v171
    %217 = vmatprep.subr.mxu0 %v168
    %218 = vmatpush1.msra.mxu0 %v167
    %219 = vmatprep.subr.mxu0 %v164
    %220 = vmatpush1.msra.mxu0 %v163
    %221 = vmatprep.subr.mxu0 %v160
    %222 = vmatpush1.msra.mxu0 %v159
    %223 = vmatprep.subr.mxu0 %v156
    %224 = vmatpush1.msra.mxu0 %v155
    %225 = vmatprep.subr.mxu0 %v152
    %226 = vmatpush1.msra.mxu0 %v151
    %227 = vmatprep.subr.mxu0 %v148
    %228 = vmatpush1.msra.mxu0 %v147
    %229 = vmatprep.subr.mxu0 %v144
    %230 = vmatpush1.msra.mxu0 %v143
    %231 = vmatprep.subr.mxu0 %v140
    %232 = vmatpush1.msra.mxu0 %v139
    %233 = vmatprep.subr.mxu0 %v136
    %234 = vmatpush1.msra.mxu0 %v135
    %235 = vmatprep.subr.mxu0 %v132
    %236 = vmatpush1.msra.mxu0 %v131
    %237 = vmatprep.subr.mxu0 %v128
    %238 = vmatpush1.msra.mxu0 %v127
    %239 = vmatprep.subr.mxu0 %v124
    %240 = vmatpush1.msra.mxu0 %v123
    %241 = vmatprep.subr.mxu0 0.0
    %242 = vmatpush2.msra.mxu0 0.0
    %243 = vmatprep.subr.mxu0 0.0
    %244 = vmatpush2.msra.mxu0 0.0
    %245 = vmatprep.subr.mxu0 0.0
    %246 = vmatpush2.msra.mxu0 0.0
    %247 = vmatprep.subr.mxu0 0.0
    %248 = vmatpush2.msra.mxu0 0.0
    %249 = vmatprep.subr.mxu0 0.0
    %250 = vmatpush2.msra.mxu0 0.0
    %251 = vmatprep.subr.mxu0 0.0
    %252 = vmatpush2.msra.mxu0 0.0
    %253 = vmatprep.subr.mxu0 0.0
    %254 = vmatpush2.msra.mxu0 0.0
    %255 = vmatprep.subr.mxu0 0.0
    %256 = vmatpush2.msra.mxu0 0.0
    %257 = vmatprep.subr.mxu0 0.0
    %258 = vmatpush2.msra.mxu0 0.0
    %259 = vmatprep.subr.mxu0 0.0
    %260 = vmatpush2.msra.mxu0 0.0
    %261 = vmatprep.subr.mxu0 0.0
    %262 = vmatpush2.msra.mxu0 0.0
    %263 = vmatprep.subr.mxu0 0.0
    %264 = vmatpush2.msra.mxu0 0.0
    %265 = vmatprep.subr.mxu0 0.0
    %266 = vmatpush2.msra.mxu0 0.0
    %267 = vmatprep.subr.mxu0 0.0
    %268 = vmatpush2.msra.mxu0 0.0
    %269 = vmatprep.subr.mxu0 0.0
    %270 = vmatpush2.msra.mxu0 0.0
    %271 = vmatprep.subr.mxu0 0.0
    %272 = vmatpush2.msra.mxu0 0.0
    %273 = vmatprep.mubr.f32.mxu0 0.0
    %274 = vmatmul.mubr.f32.gmra.mxu0 %v115
    %v275 = vpop.f32.mrf.mxu0
    %v276 = vadd.f32 %v192, %v275
    %v277 = vpop.f32.mrf.mxu0
    %v278 = vadd.f32 %v196, %v277
    %279 = vmatprep.mubr.f32.mxu0 0.0
    %280 = vmatmul.mubr.f32.gmra.mxu0 %v116
    %v281 = vpop.f32.mrf.mxu0
    %v282 = vadd.f32 %v192, %v281
    %v283 = vpop.f32.mrf.mxu0
    %v284 = vadd.f32 %v196, %v283
    %285 = vmatprep.mubr.f32.mxu0 0.0
    %286 = vmatmul.mubr.f32.gmra.mxu0 %v117
    %v287 = vpop.f32.mrf.mxu0
    %v288 = vadd.f32 %v192, %v287
    %v289 = vpop.f32.mrf.mxu0
    %v290 = vadd.f32 %v196, %v289
    %291 = vmatprep.mubr.f32.mxu0 0.0
    %292 = vmatmul.mubr.f32.gmra.mxu0 %v118
    %v293 = vpop.f32.mrf.mxu0
    %v294 = vadd.f32 %v192, %v293
    %v295 = vpop.f32.mrf.mxu0
    %v296 = vadd.f32 %v196, %v295
    %297 = vmatprep.mubr.f32.mxu0 0.0
    %298 = vmatmul.mubr.f32.gmra.mxu0 %v119
    %v299 = vpop.f32.mrf.mxu0
    %v300 = vadd.f32 %v192, %v299
    %v301 = vpop.f32.mrf.mxu0
    %v302 = vadd.f32 %v196, %v301
    %303 = vmatprep.mubr.f32.mxu0 0.0
    %304 = vmatmul.mubr.f32.gmra.mxu0 %v120
    %v305 = vpop.f32.mrf.mxu0
    %v306 = vadd.f32 %v192, %v305
    %v307 = vpop.f32.mrf.mxu0
    %v308 = vadd.f32 %v196, %v307
    %309 = vmatprep.mubr.f32.mxu0 0.0
    %310 = vmatmul.mubr.f32.gmra.mxu0 %v121
    %v311 = vpop.f32.mrf.mxu0
    %v312 = vadd.f32 %v192, %v311
    %v313 = vpop.f32.mrf.mxu0
    %v314 = vadd.f32 %v196, %v313
    %315 = vmatprep.mubr.f32.mxu0 0.0
    %316 = vmatmul.mubr.f32.gmra.mxu0 %v122
    %v317 = vpop.f32.mrf.mxu0
    %v318 = vadd.f32 %v192, %v317
    %v319 = vpop.f32.mrf.mxu0
    %v320 = vadd.f32 %v196, %v319
    %321 = vdwg.mxu0
    %322 = vmatprep.subr.mxu0 %v186
    %323 = vmatpush1.msra.mxu0 %v185
    %324 = vmatprep.subr.mxu0 %v182
    %325 = vmatpush1.msra.mxu0 %v181
    %326 = vmatprep.subr.mxu0 %v178
    %327 = vmatpush1.msra.mxu0 %v177
    %328 = vmatprep.subr.mxu0 %v174
    %329 = vmatpush1.msra.mxu0 %v173
    %330 = vmatprep.subr.mxu0 %v170
    %331 = vmatpush1.msra.mxu0 %v169
    %332 = vmatprep.subr.mxu0 %v166
    %333 = vmatpush1.msra.mxu0 %v165
    %334 = vmatprep.subr.mxu0 %v162
    %335 = vmatpush1.msra.mxu0 %v161
    %336 = vmatprep.subr.mxu0 %v158
    %337 = vmatpush1.msra.mxu0 %v157
    %338 = vmatprep.subr.mxu0 %v154
    %339 = vmatpush1.msra.mxu0 %v153
    %340 = vmatprep.subr.mxu0 %v150
    %341 = vmatpush1.msra.mxu0 %v149
    %342 = vmatprep.subr.mxu0 %v146
    %343 = vmatpush1.msra.mxu0 %v145
    %344 = vmatprep.subr.mxu0 %v142
    %345 = vmatpush1.msra.mxu0 %v141
    %346 = vmatprep.subr.mxu0 %v138
    %347 = vmatpush1.msra.mxu0 %v137
    %348 = vmatprep.subr.mxu0 %v134
    %349 = vmatpush1.msra.mxu0 %v133
    %350 = vmatprep.subr.mxu0 %v130
    %351 = vmatpush1.msra.mxu0 %v129
    %352 = vmatprep.subr.mxu0 %v126
    %353 = vmatpush1.msra.mxu0 %v125
    %354 = vmatprep.subr.mxu0 0.0
    %355 = vmatpush2.msra.mxu0 0.0
    %356 = vmatprep.subr.mxu0 0.0
    %357 = vmatpush2.msra.mxu0 0.0
    %358 = vmatprep.subr.mxu0 0.0
    %359 = vmatpush2.msra.mxu0 0.0
    %360 = vmatprep.subr.mxu0 0.0
    %361 = vmatpush2.msra.mxu0 0.0
    %362 = vmatprep.subr.mxu0 0.0
    %363 = vmatpush2.msra.mxu0 0.0
    %364 = vmatprep.subr.mxu0 0.0
    %365 = vmatpush2.msra.mxu0 0.0
    %366 = vmatprep.subr.mxu0 0.0
    %367 = vmatpush2.msra.mxu0 0.0
    %368 = vmatprep.subr.mxu0 0.0
    %369 = vmatpush2.msra.mxu0 0.0
    %370 = vmatprep.subr.mxu0 0.0
    %371 = vmatpush2.msra.mxu0 0.0
    %372 = vmatprep.subr.mxu0 0.0
    %373 = vmatpush2.msra.mxu0 0.0
    %374 = vmatprep.subr.mxu0 0.0
    %375 = vmatpush2.msra.mxu0 0.0
    %376 = vmatprep.subr.mxu0 0.0
    %377 = vmatpush2.msra.mxu0 0.0
    %378 = vmatprep.subr.mxu0 0.0
    %379 = vmatpush2.msra.mxu0 0.0
    %380 = vmatprep.subr.mxu0 0.0
    %381 = vmatpush2.msra.mxu0 0.0
    %382 = vmatprep.subr.mxu0 0.0
    %383 = vmatpush2.msra.mxu0 0.0
    %384 = vmatprep.subr.mxu0 0.0
    %385 = vmatpush2.msra.mxu0 0.0
    %386 = vmatprep.mubr.f32.mxu0 0.0
    %387 = vmatmul.mubr.f32.gmra.mxu0 %v115
    %v388 = vpop.f32.mrf.mxu0
    %v389 = vadd.f32 %v200, %v388
    %v390 = vpop.f32.mrf.mxu0
    %v391 = vadd.f32 %v204, %v390
    %392 = vmatprep.mubr.f32.mxu0 0.0
    %393 = vmatmul.mubr.f32.gmra.mxu0 %v116
    %v394 = vpop.f32.mrf.mxu0
    %v395 = vadd.f32 %v200, %v394
    %v396 = vpop.f32.mrf.mxu0
    %v397 = vadd.f32 %v204, %v396
    %398 = vmatprep.mubr.f32.mxu0 0.0
    %399 = vmatmul.mubr.f32.gmra.mxu0 %v117
    %v400 = vpop.f32.mrf.mxu0
    %v401 = vadd.f32 %v200, %v400
    %v402 = vpop.f32.mrf.mxu0
    %v403 = vadd.f32 %v204, %v402
    %404 = vmatprep.mubr.f32.mxu0 0.0
    %405 = vmatmul.mubr.f32.gmra.mxu0 %v118
    %v406 = vpop.f32.mrf.mxu0
    %v407 = vadd.f32 %v200, %v406
    %v408 = vpop.f32.mrf.mxu0
    %v409 = vadd.f32 %v204, %v408
    %410 = vmatprep.mubr.f32.mxu0 0.0
    %411 = vmatmul.mubr.f32.gmra.mxu0 %v119
    %v412 = vpop.f32.mrf.mxu0
    %v413 = vadd.f32 %v200, %v412
    %v414 = vpop.f32.mrf.mxu0
    %v415 = vadd.f32 %v204, %v414
    %416 = vmatprep.mubr.f32.mxu0 0.0
    %417 = vmatmul.mubr.f32.gmra.mxu0 %v120
    %v418 = vpop.f32.mrf.mxu0
    %v419 = vadd.f32 %v200, %v418
    %v420 = vpop.f32.mrf.mxu0
    %v421 = vadd.f32 %v204, %v420
    %422 = vmatprep.mubr.f32.mxu0 0.0
    %423 = vmatmul.mubr.f32.gmra.mxu0 %v121
    %v424 = vpop.f32.mrf.mxu0
    %v425 = vadd.f32 %v200, %v424
    %v426 = vpop.f32.mrf.mxu0
    %v427 = vadd.f32 %v204, %v426
    %428 = vmatprep.mubr.f32.mxu0 0.0
    %429 = vmatmul.mubr.f32.gmra.mxu0 %v122
    %v430 = vpop.f32.mrf.mxu0
    %v431 = vadd.f32 %v200, %v430
    %v432 = vpop.f32.mrf.mxu0
    %v433 = vadd.f32 %v204, %v432
    %434 = vdwg.mxu0
    %435 = vst [vmem:[#allocation2] sm:$0xff] %v276
    %436 = vst [vmem:[#allocation2 + $0x8] sm:$0xff] %v278
    %437 = vst [vmem:[#allocation2 + $0x10] sm:$0xff] %v389
    %438 = vst [vmem:[#allocation2 + $0x18] sm:$0xff] %v391
    %439 = vst [vmem:[#allocation2 + $0x20] sm:$0xff] %v282
    %440 = vst [vmem:[#allocation2 + $0x28] sm:$0xff] %v284
    %441 = vst [vmem:[#allocation2 + $0x30] sm:$0xff] %v395
    %442 = vst [vmem:[#allocation2 + $0x38] sm:$0xff] %v397
    %443 = vst [vmem:[#allocation2 + $0x40] sm:$0xff] %v288
    %444 = vst [vmem:[#allocation2 + $0x48] sm:$0xff] %v290
    %445 = vst [vmem:[#allocation2 + $0x50] sm:$0xff] %v401
    %446 = vst [vmem:[#allocation2 + $0x58] sm:$0xff] %v403
    %447 = vst [vmem:[#allocation2 + $0x60] sm:$0xff] %v294
    %448 = vst [vmem:[#allocation2 + $0x68] sm:$0xff] %v296
    %449 = vst [vmem:[#allocation2 + $0x70] sm:$0xff] %v407
    %450 = vst [vmem:[#allocation2 + $0x78] sm:$0xff] %v409
    %451 = vst [vmem:[#allocation2 + $0x80] sm:$0xff] %v300
    %452 = vst [vmem:[#allocation2 + $0x88] sm:$0xff] %v302
    %453 = vst [vmem:[#allocation2 + $0x90] sm:$0xff] %v413
    %454 = vst [vmem:[#allocation2 + $0x98] sm:$0xff] %v415
    %455 = vst [vmem:[#allocation2 + $0xa0] sm:$0xff] %v306
    %456 = vst [vmem:[#allocation2 + $0xa8] sm:$0xff] %v308
    %457 = vst [vmem:[#allocation2 + $0xb0] sm:$0xff] %v419
    %458 = vst [vmem:[#allocation2 + $0xb8] sm:$0xff] %v421
    %459 = vst [vmem:[#allocation2 + $0xc0] sm:$0xff] %v312
    %460 = vst [vmem:[#allocation2 + $0xc8] sm:$0xff] %v314
    %461 = vst [vmem:[#allocation2 + $0xd0] sm:$0xff] %v425
    %462 = vst [vmem:[#allocation2 + $0xd8] sm:$0xff] %v427
    %463 = vst [vmem:[#allocation2 + $0xe0] sm:$0xff] %v318
    %464 = vst [vmem:[#allocation2 + $0xe8] sm:$0xff] %v320
    %465 = vst [vmem:[#allocation2 + $0xf0] sm:$0xff] %v431
    %466 = vst [vmem:[#allocation2 + $0xf8] sm:$0xff] %v433
    %s467 = smul.u32 0, 4
    %s468 = smul.addr %s467, 8
    %s469 = scalar_lea.vmem [#allocation2], %s468
    %v470 = vld [vmem:[%s469] sm:$0xff]
    %v471 = vld [vmem:[%s469 + $0x8] sm:$0xff]
    %v472 = vld [vmem:[%s469 + $0x10] sm:$0xff]
    %v473 = vld [vmem:[%s469 + $0x18] sm:$0xff]
    %v474 = vld [vmem:[#allocation8] sm:$0xff]
    %v475 = vld [vmem:[#allocation8 + $0x8] sm:$0xff]
    %v476 = vld [vmem:[#allocation8 + $0x10] sm:$0xff]
    %v477 = vld [vmem:[#allocation8 + $0x18] sm:$0xff]
    %v478 = vld [vmem:[#allocation8 + $0x20] sm:$0xff]
    %v479 = vld [vmem:[#allocation8 + $0x28] sm:$0xff]
    %v480 = vld [vmem:[#allocation8 + $0x30] sm:$0xff]
    %v481 = vld [vmem:[#allocation8 + $0x38] sm:$0xff]
    %v482 = vld [vmem:[#allocation8 + $0x40] sm:$0xff]
    %v483 = vld [vmem:[#allocation8 + $0x48] sm:$0xff]
    %v484 = vld [vmem:[#allocation8 + $0x50] sm:$0xff]
    %v485 = vld [vmem:[#allocation8 + $0x58] sm:$0xff]
    %v486 = vld [vmem:[#allocation8 + $0x60] sm:$0xff]
    %v487 = vld [vmem:[#allocation8 + $0x68] sm:$0xff]
    %v488 = vld [vmem:[#allocation8 + $0x70] sm:$0xff]
    %v489 = vld [vmem:[#allocation8 + $0x78] sm:$0xff]
    %v490 = vld [vmem:[#allocation8 + $0x80] sm:$0xff]
    %v491 = vld [vmem:[#allocation8 + $0x88] sm:$0xff]
    %v492 = vld [vmem:[#allocation8 + $0x90] sm:$0xff]
    %v493 = vld [vmem:[#allocation8 + $0x98] sm:$0xff]
    %v494 = vld [vmem:[#allocation8 + $0xa0] sm:$0xff]
    %v495 = vld [vmem:[#allocation8 + $0xa8] sm:$0xff]
    %v496 = vld [vmem:[#allocation8 + $0xb0] sm:$0xff]
    %v497 = vld [vmem:[#allocation8 + $0xb8] sm:$0xff]
    %v498 = vld [vmem:[#allocation8 + $0xc0] sm:$0xff]
    %v499 = vld [vmem:[#allocation8 + $0xc8] sm:$0xff]
    %v500 = vld [vmem:[#allocation8 + $0xd0] sm:$0xff]
    %v501 = vld [vmem:[#allocation8 + $0xd8] sm:$0xff]
    %v502 = vld [vmem:[#allocation8 + $0xe0] sm:$0xff]
    %v503 = vld [vmem:[#allocation8 + $0xe8] sm:$0xff]
    %v504 = vld [vmem:[#allocation8 + $0xf0] sm:$0xff]
    %v505 = vld [vmem:[#allocation8 + $0xf8] sm:$0xff]
    %v506 = vld [vmem:[#allocation8 + $0x100] sm:$0xff]
    %v507 = vld [vmem:[#allocation8 + $0x108] sm:$0xff]
    %v508 = vld [vmem:[#allocation8 + $0x110] sm:$0xff]
    %v509 = vld [vmem:[#allocation8 + $0x118] sm:$0xff]
    %v510 = vld [vmem:[#allocation8 + $0x120] sm:$0xff]
    %v511 = vld [vmem:[#allocation8 + $0x128] sm:$0xff]
    %v512 = vld [vmem:[#allocation8 + $0x130] sm:$0xff]
    %v513 = vld [vmem:[#allocation8 + $0x138] sm:$0xff]
    %v514 = vld [vmem:[#allocation8 + $0x140] sm:$0xff]
    %v515 = vld [vmem:[#allocation8 + $0x148] sm:$0xff]
    %v516 = vld [vmem:[#allocation8 + $0x150] sm:$0xff]
    %v517 = vld [vmem:[#allocation8 + $0x158] sm:$0xff]
    %v518 = vld [vmem:[#allocation8 + $0x160] sm:$0xff]
    %v519 = vld [vmem:[#allocation8 + $0x168] sm:$0xff]
    %v520 = vld [vmem:[#allocation8 + $0x170] sm:$0xff]
    %v521 = vld [vmem:[#allocation8 + $0x178] sm:$0xff]
    %v522 = vld [vmem:[#allocation8 + $0x180] sm:$0xff]
    %v523 = vld [vmem:[#allocation8 + $0x188] sm:$0xff]
    %v524 = vld [vmem:[#allocation8 + $0x190] sm:$0xff]
    %v525 = vld [vmem:[#allocation8 + $0x198] sm:$0xff]
    %v526 = vld [vmem:[#allocation8 + $0x1a0] sm:$0xff]
    %v527 = vld [vmem:[#allocation8 + $0x1a8] sm:$0xff]
    %v528 = vld [vmem:[#allocation8 + $0x1b0] sm:$0xff]
    %v529 = vld [vmem:[#allocation8 + $0x1b8] sm:$0xff]
    %v530 = vld [vmem:[#allocation8 + $0x1c0] sm:$0xff]
    %v531 = vld [vmem:[#allocation8 + $0x1c8] sm:$0xff]
    %v532 = vld [vmem:[#allocation8 + $0x1d0] sm:$0xff]
    %v533 = vld [vmem:[#allocation8 + $0x1d8] sm:$0xff]
    %v534 = vld [vmem:[#allocation8 + $0x1e0] sm:$0xff]
    %v535 = vld [vmem:[#allocation8 + $0x1e8] sm:$0xff]
    %v536 = vld [vmem:[#allocation8 + $0x1f0] sm:$0xff]
    %v537 = vld [vmem:[#allocation8 + $0x1f8] sm:$0xff]
    %538 = vmatprep.subr.mxu0 %v535
    %539 = vmatpush1.msra.mxu0 %v534
    %540 = vmatprep.subr.mxu0 %v531
    %541 = vmatpush1.msra.mxu0 %v530
    %542 = vmatprep.subr.mxu0 %v527
    %543 = vmatpush1.msra.mxu0 %v526
    %544 = vmatprep.subr.mxu0 %v523
    %545 = vmatpush1.msra.mxu0 %v522
    %546 = vmatprep.subr.mxu0 %v519
    %547 = vmatpush1.msra.mxu0 %v518
    %548 = vmatprep.subr.mxu0 %v515
    %549 = vmatpush1.msra.mxu0 %v514
    %550 = vmatprep.subr.mxu0 %v511
    %551 = vmatpush1.msra.mxu0 %v510
    %552 = vmatprep.subr.mxu0 %v507
    %553 = vmatpush1.msra.mxu0 %v506
    %554 = vmatprep.subr.mxu0 %v503
    %555 = vmatpush1.msra.mxu0 %v502
    %556 = vmatprep.subr.mxu0 %v499
    %557 = vmatpush1.msra.mxu0 %v498
    %558 = vmatprep.subr.mxu0 %v495
    %559 = vmatpush1.msra.mxu0 %v494
    %560 = vmatprep.subr.mxu0 %v491
    %561 = vmatpush1.msra.mxu0 %v490
    %562 = vmatprep.subr.mxu0 %v487
    %563 = vmatpush1.msra.mxu0 %v486
    %564 = vmatprep.subr.mxu0 %v483
    %565 = vmatpush1.msra.mxu0 %v482
    %566 = vmatprep.subr.mxu0 %v479
    %567 = vmatpush1.msra.mxu0 %v478
    %568 = vmatprep.subr.mxu0 %v475
    %569 = vmatpush1.msra.mxu0 %v474
    %570 = vmatprep.subr.mxu0 0.0
    %571 = vmatpush2.msra.mxu0 0.0
    %572 = vmatprep.subr.mxu0 0.0
    %573 = vmatpush2.msra.mxu0 0.0
    %574 = vmatprep.subr.mxu0 0.0
    %575 = vmatpush2.msra.mxu0 0.0
    %576 = vmatprep.subr.mxu0 0.0
    %577 = vmatpush2.msra.mxu0 0.0
    %578 = vmatprep.subr.mxu0 0.0
    %579 = vmatpush2.msra.mxu0 0.0
    %580 = vmatprep.subr.mxu0 0.0
    %581 = vmatpush2.msra.mxu0 0.0
    %582 = vmatprep.subr.mxu0 0.0
    %583 = vmatpush2.msra.mxu0 0.0
    %584 = vmatprep.subr.mxu0 0.0
    %585 = vmatpush2.msra.mxu0 0.0
    %586 = vmatprep.subr.mxu0 0.0
    %587 = vmatpush2.msra.mxu0 0.0
    %588 = vmatprep.subr.mxu0 0.0
    %589 = vmatpush2.msra.mxu0 0.0
    %590 = vmatprep.subr.mxu0 0.0
    %591 = vmatpush2.msra.mxu0 0.0
    %592 = vmatprep.subr.mxu0 0.0
    %593 = vmatpush2.msra.mxu0 0.0
    %594 = vmatprep.subr.mxu0 0.0
    %595 = vmatpush2.msra.mxu0 0.0
    %596 = vmatprep.subr.mxu0 0.0
    %597 = vmatpush2.msra.mxu0 0.0
    %598 = vmatprep.subr.mxu0 0.0
    %599 = vmatpush2.msra.mxu0 0.0
    %600 = vmatprep.subr.mxu0 0.0
    %601 = vmatpush2.msra.mxu0 0.0
    %602 = vmatprep.mubr.f32.mxu0 0.0
    %603 = vmatmul.mubr.f32.gmra.mxu0 0.0
    %v604 = vpop.f32.mrf.mxu0
    %v605 = vadd.f32 0.0, %v604
    %v606 = vpop.f32.mrf.mxu0
    %v607 = vadd.f32 0.0, %v606
    %608 = vdwg.mxu0
    %609 = vmatprep.subr.mxu0 %v537
    %610 = vmatpush1.msra.mxu0 %v536
    %611 = vmatprep.subr.mxu0 %v533
    %612 = vmatpush1.msra.mxu0 %v532
    %613 = vmatprep.subr.mxu0 %v529
    %614 = vmatpush1.msra.mxu0 %v528
    %615 = vmatprep.subr.mxu0 %v525
    %616 = vmatpush1.msra.mxu0 %v524
    %617 = vmatprep.subr.mxu0 %v521
    %618 = vmatpush1.msra.mxu0 %v520
    %619 = vmatprep.subr.mxu0 %v517
    %620 = vmatpush1.msra.mxu0 %v516
    %621 = vmatprep.subr.mxu0 %v513
    %622 = vmatpush1.msra.mxu0 %v512
    %623 = vmatprep.subr.mxu0 %v509
    %624 = vmatpush1.msra.mxu0 %v508
    %625 = vmatprep.subr.mxu0 %v505
    %626 = vmatpush1.msra.mxu0 %v504
    %627 = vmatprep.subr.mxu0 %v501
    %628 = vmatpush1.msra.mxu0 %v500
    %629 = vmatprep.subr.mxu0 %v497
    %630 = vmatpush1.msra.mxu0 %v496
    %631 = vmatprep.subr.mxu0 %v493
    %632 = vmatpush1.msra.mxu0 %v492
    %633 = vmatprep.subr.mxu0 %v489
    %634 = vmatpush1.msra.mxu0 %v488
    %635 = vmatprep.subr.mxu0 %v485
    %636 = vmatpush1.msra.mxu0 %v484
    %637 = vmatprep.subr.mxu0 %v481
    %638 = vmatpush1.msra.mxu0 %v480
    %639 = vmatprep.subr.mxu0 %v477
    %640 = vmatpush1.msra.mxu0 %v476
    %641 = vmatprep.subr.mxu0 0.0
    %642 = vmatpush2.msra.mxu0 0.0
    %643 = vmatprep.subr.mxu0 0.0
    %644 = vmatpush2.msra.mxu0 0.0
    %645 = vmatprep.subr.mxu0 0.0
    %646 = vmatpush2.msra.mxu0 0.0
    %647 = vmatprep.subr.mxu0 0.0
    %648 = vmatpush2.msra.mxu0 0.0
    %649 = vmatprep.subr.mxu0 0.0
    %650 = vmatpush2.msra.mxu0 0.0
    %651 = vmatprep.subr.mxu0 0.0
    %652 = vmatpush2.msra.mxu0 0.0
    %653 = vmatprep.subr.mxu0 0.0
    %654 = vmatpush2.msra.mxu0 0.0
    %655 = vmatprep.subr.mxu0 0.0
    %656 = vmatpush2.msra.mxu0 0.0
    %657 = vmatprep.subr.mxu0 0.0
    %658 = vmatpush2.msra.mxu0 0.0
    %659 = vmatprep.subr.mxu0 0.0
    %660 = vmatpush2.msra.mxu0 0.0
    %661 = vmatprep.subr.mxu0 0.0
    %662 = vmatpush2.msra.mxu0 0.0
    %663 = vmatprep.subr.mxu0 0.0
    %664 = vmatpush2.msra.mxu0 0.0
    %665 = vmatprep.subr.mxu0 0.0
    %666 = vmatpush2.msra.mxu0 0.0
    %667 = vmatprep.subr.mxu0 0.0
    %668 = vmatpush2.msra.mxu0 0.0
    %669 = vmatprep.subr.mxu0 0.0
    %670 = vmatpush2.msra.mxu0 0.0
    %671 = vmatprep.subr.mxu0 0.0
    %672 = vmatpush2.msra.mxu0 0.0
    %673 = vmatprep.mubr.f32.mxu0 0.0
    %674 = vmatmul.mubr.f32.gmra.mxu0 0.0
    %v675 = vpop.f32.mrf.mxu0
    %v676 = vadd.f32 0.0, %v675
    %v677 = vpop.f32.mrf.mxu0
    %v678 = vadd.f32 0.0, %v677
    %679 = vdwg.mxu0
    %v680 = vadd.f32 %v470, %v605
    %v681 = vadd.f32 %v471, %v607
    %v682 = vadd.f32 %v472, %v676
    %v683 = vadd.f32 %v473, %v678
    %v684 = vxor.u32 %v680, 2147483648
    %v685 = vxor.u32 %v681, 2147483648
    %v686 = vxor.u32 %v682, 2147483648
    %v687 = vmul.f32 %v684, 1.442695
    %v688 = vpow.pop %v687
    %v689 = vmul.f32 %v685, 1.442695
    %v690 = vpow.pop %v689
    %v691 = vmul.f32 %v686, 1.442695
    %v692 = vpow.pop %v691
    %v693 = vadd.f32 %v688, 1.0
    %v694 = vadd.f32 %v690, 1.0
    %v695 = vadd.f32 %v692, 1.0
    %v696 = vrcp.pop %v693
    %v697 = vmul.f32 1.0, %v696
    %v698 = vrcp.pop %v694
    %v699 = vmul.f32 1.0, %v698
    %v700 = vrcp.pop %v695
    %v701 = vmul.f32 1.0, %v700
    %v702 = vtanh.pop %v683
    %v703 = vmul.f32 %v699, 0.0
    %v704 = vmul.f32 %v697, %v702
    %v705 = vadd.f32 %v703, %v704
    %v706 = vtanh.pop %v705
    %v707 = vmul.f32 %v701, %v706
    %v708 = vld [vmem:[#allocation9] sm:$0xff]
    %v709 = vld [vmem:[#allocation9 + $0x8] sm:$0xff]
    %v710 = vld [vmem:[#allocation9 + $0x10] sm:$0xff]
    %v711 = vld [vmem:[#allocation9 + $0x18] sm:$0xff]
    %v712 = vld [vmem:[#allocation9 + $0x20] sm:$0xff]
    %v713 = vld [vmem:[#allocation9 + $0x28] sm:$0xff]
    %v714 = vld [vmem:[#allocation9 + $0x30] sm:$0xff]
    %v715 = vld [vmem:[#allocation9 + $0x38] sm:$0xff]
    %v716 = vld [vmem:[#allocation9 + $0x40] sm:$0xff]
    %v717 = vld [vmem:[#allocation9 + $0x48] sm:$0xff]
    %v718 = vld [vmem:[#allocation9 + $0x50] sm:$0xff]
    %v719 = vld [vmem:[#allocation9 + $0x58] sm:$0xff]
    %v720 = vld [vmem:[#allocation9 + $0x60] sm:$0xff]
    %v721 = vld [vmem:[#allocation9 + $0x68] sm:$0xff]
    %v722 = vld [vmem:[#allocation9 + $0x70] sm:$0xff]
    %v723 = vld [vmem:[#allocation9 + $0x78] sm:$0xff]
    %v724 = vld [vmem:[#allocation9 + $0x80] sm:$0xff]
    %v725 = vld [vmem:[#allocation9 + $0x88] sm:$0xff]
    %v726 = vld [vmem:[#allocation9 + $0x90] sm:$0xff]
    %v727 = vld [vmem:[#allocation9 + $0x98] sm:$0xff]
    %v728 = vld [vmem:[#allocation9 + $0xa0] sm:$0xff]
    %v729 = vld [vmem:[#allocation9 + $0xa8] sm:$0xff]
    %v730 = vld [vmem:[#allocation9 + $0xb0] sm:$0xff]
    %v731 = vld [vmem:[#allocation9 + $0xb8] sm:$0xff]
    %v732 = vld [vmem:[#allocation9 + $0xc0] sm:$0xff]
    %v733 = vld [vmem:[#allocation9 + $0xc8] sm:$0xff]
    %v734 = vld [vmem:[#allocation9 + $0xd0] sm:$0xff]
    %v735 = vld [vmem:[#allocation9 + $0xd8] sm:$0xff]
    %v736 = vld [vmem:[#allocation9 + $0xe0] sm:$0xff]
    %v737 = vld [vmem:[#allocation9 + $0xe8] sm:$0xff]
    %v738 = vld [vmem:[#allocation9 + $0xf0] sm:$0xff]
    %v739 = vld [vmem:[#allocation9 + $0xf8] sm:$0xff]
    %v740 = vld [vmem:[#allocation9 + $0x100] sm:$0xff]
    %v741 = vld [vmem:[#allocation9 + $0x108] sm:$0xff]
    %v742 = vld [vmem:[#allocation9 + $0x110] sm:$0xff]
    %v743 = vld [vmem:[#allocation9 + $0x118] sm:$0xff]
    %v744 = vld [vmem:[#allocation9 + $0x120] sm:$0xff]
    %v745 = vld [vmem:[#allocation9 + $0x128] sm:$0xff]
    %v746 = vld [vmem:[#allocation9 + $0x130] sm:$0xff]
    %v747 = vld [vmem:[#allocation9 + $0x138] sm:$0xff]
    %v748 = vld [vmem:[#allocation9 + $0x140] sm:$0xff]
    %v749 = vld [vmem:[#allocation9 + $0x148] sm:$0xff]
    %v750 = vld [vmem:[#allocation9 + $0x150] sm:$0xff]
    %v751 = vld [vmem:[#allocation9 + $0x158] sm:$0xff]
    %v752 = vld [vmem:[#allocation9 + $0x160] sm:$0xff]
    %v753 = vld [vmem:[#allocation9 + $0x168] sm:$0xff]
    %v754 = vld [vmem:[#allocation9 + $0x170] sm:$0xff]
    %v755 = vld [vmem:[#allocation9 + $0x178] sm:$0xff]
    %v756 = vld [vmem:[#allocation9 + $0x180] sm:$0xff]
    %v757 = vld [vmem:[#allocation9 + $0x188] sm:$0xff]
    %v758 = vld [vmem:[#allocation9 + $0x190] sm:$0xff]
    %v759 = vld [vmem:[#allocation9 + $0x198] sm:$0xff]
    %v760 = vld [vmem:[#allocation9 + $0x1a0] sm:$0xff]
    %v761 = vld [vmem:[#allocation9 + $0x1a8] sm:$0xff]
    %v762 = vld [vmem:[#allocation9 + $0x1b0] sm:$0xff]
    %v763 = vld [vmem:[#allocation9 + $0x1b8] sm:$0xff]
    %v764 = vld [vmem:[#allocation9 + $0x1c0] sm:$0xff]
    %v765 = vld [vmem:[#allocation9 + $0x1c8] sm:$0xff]
    %v766 = vld [vmem:[#allocation9 + $0x1d0] sm:$0xff]
    %v767 = vld [vmem:[#allocation9 + $0x1d8] sm:$0xff]
    %v768 = vld [vmem:[#allocation9 + $0x1e0] sm:$0xff]
    %v769 = vld [vmem:[#allocation9 + $0x1e8] sm:$0xff]
    %v770 = vld [vmem:[#allocation9 + $0x1f0] sm:$0xff]
    %v771 = vld [vmem:[#allocation9 + $0x1f8] sm:$0xff]
    %v772 = vld [vmem:[#allocation11] sm:$0xff]
    %v773 = vld [vmem:[#allocation11 + $0x8] sm:$0xff]
    %v774 = vld [vmem:[#allocation11 + $0x10] sm:$0xff]
    %v775 = vld [vmem:[#allocation11 + $0x18] sm:$0xff]
    %v776 = vld [vmem:[#allocation11 + $0x20] sm:$0xff]
    %v777 = vld [vmem:[#allocation11 + $0x28] sm:$0xff]
    %v778 = vld [vmem:[#allocation11 + $0x30] sm:$0xff]
    %v779 = vld [vmem:[#allocation11 + $0x38] sm:$0xff]
    %v780 = vld [vmem:[#allocation11 + $0x40] sm:$0xff]
    %v781 = vld [vmem:[#allocation11 + $0x48] sm:$0xff]
    %v782 = vld [vmem:[#allocation11 + $0x50] sm:$0xff]
    %v783 = vld [vmem:[#allocation11 + $0x58] sm:$0xff]
    %v784 = vld [vmem:[#allocation11 + $0x60] sm:$0xff]
    %v785 = vld [vmem:[#allocation11 + $0x68] sm:$0xff]
    %v786 = vld [vmem:[#allocation11 + $0x70] sm:$0xff]
    %v787 = vld [vmem:[#allocation11 + $0x78] sm:$0xff]
    %v788 = vld [vmem:[#allocation11 + $0x80] sm:$0xff]
    %v789 = vld [vmem:[#allocation11 + $0x88] sm:$0xff]
    %v790 = vld [vmem:[#allocation11 + $0x90] sm:$0xff]
    %v791 = vld [vmem:[#allocation11 + $0x98] sm:$0xff]
    %v792 = vld [vmem:[#allocation11 + $0xa0] sm:$0xff]
    %v793 = vld [vmem:[#allocation11 + $0xa8] sm:$0xff]
    %v794 = vld [vmem:[#allocation11 + $0xb0] sm:$0xff]
    %v795 = vld [vmem:[#allocation11 + $0xb8] sm:$0xff]
    %v796 = vld [vmem:[#allocation11 + $0xc0] sm:$0xff]
    %v797 = vld [vmem:[#allocation11 + $0xc8] sm:$0xff]
    %v798 = vld [vmem:[#allocation11 + $0xd0] sm:$0xff]
    %v799 = vld [vmem:[#allocation11 + $0xd8] sm:$0xff]
    %v800 = vld [vmem:[#allocation11 + $0xe0] sm:$0xff]
    %v801 = vld [vmem:[#allocation11 + $0xe8] sm:$0xff]
    %v802 = vld [vmem:[#allocation11 + $0xf0] sm:$0xff]
    %v803 = vld [vmem:[#allocation11 + $0xf8] sm:$0xff]
    %v804 = vld [vmem:[#allocation11 + $0x100] sm:$0xff]
    %v805 = vld [vmem:[#allocation11 + $0x108] sm:$0xff]
    %v806 = vld [vmem:[#allocation11 + $0x110] sm:$0xff]
    %v807 = vld [vmem:[#allocation11 + $0x118] sm:$0xff]
    %v808 = vld [vmem:[#allocation11 + $0x120] sm:$0xff]
    %v809 = vld [vmem:[#allocation11 + $0x128] sm:$0xff]
    %v810 = vld [vmem:[#allocation11 + $0x130] sm:$0xff]
    %v811 = vld [vmem:[#allocation11 + $0x138] sm:$0xff]
    %v812 = vld [vmem:[#allocation11 + $0x140] sm:$0xff]
    %v813 = vld [vmem:[#allocation11 + $0x148] sm:$0xff]
    %v814 = vld [vmem:[#allocation11 + $0x150] sm:$0xff]
    %v815 = vld [vmem:[#allocation11 + $0x158] sm:$0xff]
    %v816 = vld [vmem:[#allocation11 + $0x160] sm:$0xff]
    %v817 = vld [vmem:[#allocation11 + $0x168] sm:$0xff]
    %v818 = vld [vmem:[#allocation11 + $0x170] sm:$0xff]
    %v819 = vld [vmem:[#allocation11 + $0x178] sm:$0xff]
    %v820 = vld [vmem:[#allocation11 + $0x180] sm:$0xff]
    %v821 = vld [vmem:[#allocation11 + $0x188] sm:$0xff]
    %v822 = vld [vmem:[#allocation11 + $0x190] sm:$0xff]
    %v823 = vld [vmem:[#allocation11 + $0x198] sm:$0xff]
    %v824 = vld [vmem:[#allocation11 + $0x1a0] sm:$0xff]
    %v825 = vld [vmem:[#allocation11 + $0x1a8] sm:$0xff]
    %v826 = vld [vmem:[#allocation11 + $0x1b0] sm:$0xff]
    %v827 = vld [vmem:[#allocation11 + $0x1b8] sm:$0xff]
    %v828 = vld [vmem:[#allocation11 + $0x1c0] sm:$0xff]
    %v829 = vld [vmem:[#allocation11 + $0x1c8] sm:$0xff]
    %v830 = vld [vmem:[#allocation11 + $0x1d0] sm:$0xff]
    %v831 = vld [vmem:[#allocation11 + $0x1d8] sm:$0xff]
    %v832 = vld [vmem:[#allocation11 + $0x1e0] sm:$0xff]
    %v833 = vld [vmem:[#allocation11 + $0x1e8] sm:$0xff]
    %v834 = vld [vmem:[#allocation11 + $0x1f0] sm:$0xff]
    %v835 = vld [vmem:[#allocation11 + $0x1f8] sm:$0xff]
    %836 = vmatprep.subr.mxu0 %v833
    %837 = vmatpush1.msra.mxu0 %v832
    %838 = vmatprep.subr.mxu0 %v829
    %839 = vmatpush1.msra.mxu0 %v828
    %840 = vmatprep.subr.mxu0 %v825
    %841 = vmatpush1.msra.mxu0 %v824
    %842 = vmatprep.subr.mxu0 %v821
    %843 = vmatpush1.msra.mxu0 %v820
    %844 = vmatprep.subr.mxu0 %v817
    %845 = vmatpush1.msra.mxu0 %v816
    %846 = vmatprep.subr.mxu0 %v813
    %847 = vmatpush1.msra.mxu0 %v812
    %848 = vmatprep.subr.mxu0 %v809
    %849 = vmatpush1.msra.mxu0 %v808
    %850 = vmatprep.subr.mxu0 %v805
    %851 = vmatpush1.msra.mxu0 %v804
    %852 = vmatprep.subr.mxu0 %v801
    %853 = vmatpush1.msra.mxu0 %v800
    %854 = vmatprep.subr.mxu0 %v797
    %855 = vmatpush1.msra.mxu0 %v796
    %856 = vmatprep.subr.mxu0 %v793
    %857 = vmatpush1.msra.mxu0 %v792
    %858 = vmatprep.subr.mxu0 %v789
    %859 = vmatpush1.msra.mxu0 %v788
    %860 = vmatprep.subr.mxu0 %v785
    %861 = vmatpush1.msra.mxu0 %v784
    %862 = vmatprep.subr.mxu0 %v781
    %863 = vmatpush1.msra.mxu0 %v780
    %864 = vmatprep.subr.mxu0 %v777
    %865 = vmatpush1.msra.mxu0 %v776
    %866 = vmatprep.subr.mxu0 %v773
    %867 = vmatpush1.msra.mxu0 %v772
    %868 = vmatprep.subr.mxu0 0.0
    %869 = vmatpush2.msra.mxu0 0.0
    %870 = vmatprep.subr.mxu0 0.0
    %871 = vmatpush2.msra.mxu0 0.0
    %872 = vmatprep.subr.mxu0 0.0
    %873 = vmatpush2.msra.mxu0 0.0
    %874 = vmatprep.subr.mxu0 0.0
    %875 = vmatpush2.msra.mxu0 0.0
    %876 = vmatprep.subr.mxu0 0.0
    %877 = vmatpush2.msra.mxu0 0.0
    %878 = vmatprep.subr.mxu0 0.0
    %879 = vmatpush2.msra.mxu0 0.0
    %880 = vmatprep.subr.mxu0 0.0
    %881 = vmatpush2.msra.mxu0 0.0
    %882 = vmatprep.subr.mxu0 0.0
    %883 = vmatpush2.msra.mxu0 0.0
    %884 = vmatprep.subr.mxu0 0.0
    %885 = vmatpush2.msra.mxu0 0.0
    %886 = vmatprep.subr.mxu0 0.0
    %887 = vmatpush2.msra.mxu0 0.0
    %888 = vmatprep.subr.mxu0 0.0
    %889 = vmatpush2.msra.mxu0 0.0
    %890 = vmatprep.subr.mxu0 0.0
    %891 = vmatpush2.msra.mxu0 0.0
    %892 = vmatprep.subr.mxu0 0.0
    %893 = vmatpush2.msra.mxu0 0.0
    %894 = vmatprep.subr.mxu0 0.0
    %895 = vmatpush2.msra.mxu0 0.0
    %896 = vmatprep.subr.mxu0 0.0
    %897 = vmatpush2.msra.mxu0 0.0
    %898 = vmatprep.subr.mxu0 0.0
    %899 = vmatpush2.msra.mxu0 0.0
    %900 = vmatprep.mubr.f32.mxu0 0.0
    %901 = vmatmul.mubr.f32.gmra.mxu0 0.0
    %v902 = vpop.f32.mrf.mxu0
    %v903 = vadd.f32 0.0, %v902
    %v904 = vpop.f32.mrf.mxu0
    %v905 = vadd.f32 0.0, %v904
    %906 = vdwg.mxu0
    %907 = vmatprep.subr.mxu0 %v835
    %908 = vmatpush1.msra.mxu0 %v834
    %909 = vmatprep.subr.mxu0 %v831
    %910 = vmatpush1.msra.mxu0 %v830
    %911 = vmatprep.subr.mxu0 %v827
    %912 = vmatpush1.msra.mxu0 %v826
    %913 = vmatprep.subr.mxu0 %v823
    %914 = vmatpush1.msra.mxu0 %v822
    %915 = vmatprep.subr.mxu0 %v819
    %916 = vmatpush1.msra.mxu0 %v818
    %917 = vmatprep.subr.mxu0 %v815
    %918 = vmatpush1.msra.mxu0 %v814
    %919 = vmatprep.subr.mxu0 %v811
    %920 = vmatpush1.msra.mxu0 %v810
    %921 = vmatprep.subr.mxu0 %v807
    %922 = vmatpush1.msra.mxu0 %v806
    %923 = vmatprep.subr.mxu0 %v803
    %924 = vmatpush1.msra.mxu0 %v802
    %925 = vmatprep.subr.mxu0 %v799
    %926 = vmatpush1.msra.mxu0 %v798
    %927 = vmatprep.subr.mxu0 %v795
    %928 = vmatpush1.msra.mxu0 %v794
    %929 = vmatprep.subr.mxu0 %v791
    %930 = vmatpush1.msra.mxu0 %v790
    %931 = vmatprep.subr.mxu0 %v787
    %932 = vmatpush1.msra.mxu0 %v786
    %933 = vmatprep.subr.mxu0 %v783
    %934 = vmatpush1.msra.mxu0 %v782
    %935 = vmatprep.subr.mxu0 %v779
    %936 = vmatpush1.msra.mxu0 %v778
    %937 = vmatprep.subr.mxu0 %v775
    %938 = vmatpush1.msra.mxu0 %v774
    %939 = vmatprep.subr.mxu0 0.0
    %940 = vmatpush2.msra.mxu0 0.0
    %941 = vmatprep.subr.mxu0 0.0
    %942 = vmatpush2.msra.mxu0 0.0
    %943 = vmatprep.subr.mxu0 0.0
    %944 = vmatpush2.msra.mxu0 0.0
    %945 = vmatprep.subr.mxu0 0.0
    %946 = vmatpush2.msra.mxu0 0.0
    %947 = vmatprep.subr.mxu0 0.0
    %948 = vmatpush2.msra.mxu0 0.0
    %949 = vmatprep.subr.mxu0 0.0
    %950 = vmatpush2.msra.mxu0 0.0
    %951 = vmatprep.subr.mxu0 0.0
    %952 = vmatpush2.msra.mxu0 0.0
    %953 = vmatprep.subr.mxu0 0.0
    %954 = vmatpush2.msra.mxu0 0.0
    %955 = vmatprep.subr.mxu0 0.0
    %956 = vmatpush2.msra.mxu0 0.0
    %957 = vmatprep.subr.mxu0 0.0
    %958 = vmatpush2.msra.mxu0 0.0
    %959 = vmatprep.subr.mxu0 0.0
    %960 = vmatpush2.msra.mxu0 0.0
    %961 = vmatprep.subr.mxu0 0.0
    %962 = vmatpush2.msra.mxu0 0.0
    %963 = vmatprep.subr.mxu0 0.0
    %964 = vmatpush2.msra.mxu0 0.0
    %965 = vmatprep.subr.mxu0 0.0
    %966 = vmatpush2.msra.mxu0 0.0
    %967 = vmatprep.subr.mxu0 0.0
    %968 = vmatpush2.msra.mxu0 0.0
    %969 = vmatprep.subr.mxu0 0.0
    %970 = vmatpush2.msra.mxu0 0.0
    %971 = vmatprep.mubr.f32.mxu0 0.0
    %972 = vmatmul.mubr.f32.gmra.mxu0 0.0
    %v973 = vpop.f32.mrf.mxu0
    %v974 = vadd.f32 0.0, %v973
    %v975 = vpop.f32.mrf.mxu0
    %v976 = vadd.f32 0.0, %v975
    %977 = vdwg.mxu0
    %978 = vmatprep.subr.mxu0 %v769
    %979 = vmatpush1.msra.mxu0 %v768
    %980 = vmatprep.subr.mxu0 %v765
    %981 = vmatpush1.msra.mxu0 %v764
    %982 = vmatprep.subr.mxu0 %v761
    %983 = vmatpush1.msra.mxu0 %v760
    %984 = vmatprep.subr.mxu0 %v757
    %985 = vmatpush1.msra.mxu0 %v756
    %986 = vmatprep.subr.mxu0 %v753
    %987 = vmatpush1.msra.mxu0 %v752
    %988 = vmatprep.subr.mxu0 %v749
    %989 = vmatpush1.msra.mxu0 %v748
    %990 = vmatprep.subr.mxu0 %v745
    %991 = vmatpush1.msra.mxu0 %v744
    %992 = vmatprep.subr.mxu0 %v741
    %993 = vmatpush1.msra.mxu0 %v740
    %994 = vmatprep.subr.mxu0 %v737
    %995 = vmatpush1.msra.mxu0 %v736
    %996 = vmatprep.subr.mxu0 %v733
    %997 = vmatpush1.msra.mxu0 %v732
    %998 = vmatprep.subr.mxu0 %v729
    %999 = vmatpush1.msra.mxu0 %v728
    %1000 = vmatprep.subr.mxu0 %v725
    %1001 = vmatpush1.msra.mxu0 %v724
    %1002 = vmatprep.subr.mxu0 %v721
    %1003 = vmatpush1.msra.mxu0 %v720
    %1004 = vmatprep.subr.mxu0 %v717
    %1005 = vmatpush1.msra.mxu0 %v716
    %1006 = vmatprep.subr.mxu0 %v713
    %1007 = vmatpush1.msra.mxu0 %v712
    %1008 = vmatprep.subr.mxu0 %v709
    %1009 = vmatpush1.msra.mxu0 %v708
    %1010 = vmatprep.subr.mxu0 0.0
    %1011 = vmatpush2.msra.mxu0 0.0
    %1012 = vmatprep.subr.mxu0 0.0
    %1013 = vmatpush2.msra.mxu0 0.0
    %1014 = vmatprep.subr.mxu0 0.0
    %1015 = vmatpush2.msra.mxu0 0.0
    %1016 = vmatprep.subr.mxu0 0.0
    %1017 = vmatpush2.msra.mxu0 0.0
    %1018 = vmatprep.subr.mxu0 0.0
    %1019 = vmatpush2.msra.mxu0 0.0
    %1020 = vmatprep.subr.mxu0 0.0
    %1021 = vmatpush2.msra.mxu0 0.0
    %1022 = vmatprep.subr.mxu0 0.0
    %1023 = vmatpush2.msra.mxu0 0.0
    %1024 = vmatprep.subr.mxu0 0.0
    %1025 = vmatpush2.msra.mxu0 0.0
    %1026 = vmatprep.subr.mxu0 0.0
    %1027 = vmatpush2.msra.mxu0 0.0
    %1028 = vmatprep.subr.mxu0 0.0
    %1029 = vmatpush2.msra.mxu0 0.0
    %1030 = vmatprep.subr.mxu0 0.0
    %1031 = vmatpush2.msra.mxu0 0.0
    %1032 = vmatprep.subr.mxu0 0.0
    %1033 = vmatpush2.msra.mxu0 0.0
    %1034 = vmatprep.subr.mxu0 0.0
    %1035 = vmatpush2.msra.mxu0 0.0
    %1036 = vmatprep.subr.mxu0 0.0
    %1037 = vmatpush2.msra.mxu0 0.0
    %1038 = vmatprep.subr.mxu0 0.0
    %1039 = vmatpush2.msra.mxu0 0.0
    %1040 = vmatprep.subr.mxu0 0.0
    %1041 = vmatpush2.msra.mxu0 0.0
    %1042 = vmatprep.mubr.f32.mxu0 0.0
    %1043 = vmatmul.mubr.f32.gmra.mxu0 %v707
    %v1044 = vpop.f32.mrf.mxu0
    %v1045 = vadd.f32 %v903, %v1044
    %v1046 = vpop.f32.mrf.mxu0
    %v1047 = vadd.f32 %v905, %v1046
    %1048 = vdwg.mxu0
    %1049 = vmatprep.subr.mxu0 %v771
    %1050 = vmatpush1.msra.mxu0 %v770
    %1051 = vmatprep.subr.mxu0 %v767
    %1052 = vmatpush1.msra.mxu0 %v766
    %1053 = vmatprep.subr.mxu0 %v763
    %1054 = vmatpush1.msra.mxu0 %v762
    %1055 = vmatprep.subr.mxu0 %v759
    %1056 = vmatpush1.msra.mxu0 %v758
    %1057 = vmatprep.subr.mxu0 %v755
    %1058 = vmatpush1.msra.mxu0 %v754
    %1059 = vmatprep.subr.mxu0 %v751
    %1060 = vmatpush1.msra.mxu0 %v750
    %1061 = vmatprep.subr.mxu0 %v747
    %1062 = vmatpush1.msra.mxu0 %v746
    %1063 = vmatprep.subr.mxu0 %v743
    %1064 = vmatpush1.msra.mxu0 %v742
    %1065 = vmatprep.subr.mxu0 %v739
    %1066 = vmatpush1.msra.mxu0 %v738
    %1067 = vmatprep.subr.mxu0 %v735
    %1068 = vmatpush1.msra.mxu0 %v734
    %1069 = vmatprep.subr.mxu0 %v731
    %1070 = vmatpush1.msra.mxu0 %v730
    %1071 = vmatprep.subr.mxu0 %v727
    %1072 = vmatpush1.msra.mxu0 %v726
    %1073 = vmatprep.subr.mxu0 %v723
    %1074 = vmatpush1.msra.mxu0 %v722
    %1075 = vmatprep.subr.mxu0 %v719
    %1076 = vmatpush1.msra.mxu0 %v718
    %1077 = vmatprep.subr.mxu0 %v715
    %1078 = vmatpush1.msra.mxu0 %v714
    %1079 = vmatprep.subr.mxu0 %v711
    %1080 = vmatpush1.msra.mxu0 %v710
    %1081 = vmatprep.subr.mxu0 0.0
    %1082 = vmatpush2.msra.mxu0 0.0
    %1083 = vmatprep.subr.mxu0 0.0
    %1084 = vmatpush2.msra.mxu0 0.0
    %1085 = vmatprep.subr.mxu0 0.0
    %1086 = vmatpush2.msra.mxu0 0.0
    %1087 = vmatprep.subr.mxu0 0.0
    %1088 = vmatpush2.msra.mxu0 0.0
    %1089 = vmatprep.subr.mxu0 0.0
    %1090 = vmatpush2.msra.mxu0 0.0
    %1091 = vmatprep.subr.mxu0 0.0
    %1092 = vmatpush2.msra.mxu0 0.0
    %1093 = vmatprep.subr.mxu0 0.0
    %1094 = vmatpush2.msra.mxu0 0.0
    %1095 = vmatprep.subr.mxu0 0.0
    %1096 = vmatpush2.msra.mxu0 0.0
    %1097 = vmatprep.subr.mxu0 0.0
    %1098 = vmatpush2.msra.mxu0 0.0
    %1099 = vmatprep.subr.mxu0 0.0
    %1100 = vmatpush2.msra.mxu0 0.0
    %1101 = vmatprep.subr.mxu0 0.0
    %1102 = vmatpush2.msra.mxu0 0.0
    %1103 = vmatprep.subr.mxu0 0.0
    %1104 = vmatpush2.msra.mxu0 0.0
    %1105 = vmatprep.subr.mxu0 0.0
    %1106 = vmatpush2.msra.mxu0 0.0
    %1107 = vmatprep.subr.mxu0 0.0
    %1108 = vmatpush2.msra.mxu0 0.0
    %1109 = vmatprep.subr.mxu0 0.0
    %1110 = vmatpush2.msra.mxu0 0.0
    %1111 = vmatprep.subr.mxu0 0.0
    %1112 = vmatpush2.msra.mxu0 0.0
    %1113 = vmatprep.mubr.f32.mxu0 0.0
    %1114 = vmatmul.mubr.f32.gmra.mxu0 %v707
    %v1115 = vpop.f32.mrf.mxu0
    %v1116 = vadd.f32 %v974, %v1115
    %v1117 = vpop.f32.mrf.mxu0
    %v1118 = vadd.f32 %v976, %v1117
    %1119 = vdwg.mxu0
    %v1120 = vld [vmem:[%s6] sm:$0xf]
    %v1122 = vlaneseq
    %v1123 = vshrl.u32 %v1122, 7
    %v1124 = vsub.s32 0, %v1123
    %v1125 = vrot.slane %v1120, %v1124
    %v1126 = vlaneseq
    %v1127 = vshrl.u32 %v1126, 7
    %v1128 = vsub.s32 1, %v1127
    %v1129 = vrot.slane %v1120, %v1128
    %v1130 = vlaneseq
    %v1131 = vshrl.u32 %v1130, 7
    %v1132 = vsub.s32 2, %v1131
    %v1133 = vrot.slane %v1120, %v1132
    %v1134 = vlaneseq
    %v1135 = vshrl.u32 %v1134, 7
    %v1136 = vsub.s32 3, %v1135
    %v1137 = vrot.slane %v1120, %v1136
    %v1142 = vadd.f32 %v1045, %v1125
    %v1143 = vadd.f32 %v1047, %v1129
    %v1144 = vadd.f32 %v1116, %v1133
    %v1145 = vadd.f32 %v1118, %v1137
    %v1146 = vxor.u32 %v1142, 2147483648
    %v1147 = vxor.u32 %v1143, 2147483648
    %v1148 = vxor.u32 %v1144, 2147483648
    %v1149 = vmul.f32 %v1146, 1.442695
    %v1150 = vpow.pop %v1149
    %v1151 = vmul.f32 %v1147, 1.442695
    %v1152 = vpow.pop %v1151
    %v1153 = vmul.f32 %v1148, 1.442695
    %v1154 = vpow.pop %v1153
    %v1155 = vadd.f32 %v1150, 1.0
    %v1156 = vadd.f32 %v1152, 1.0
    %v1157 = vadd.f32 %v1154, 1.0
    %v1158 = vrcp.pop %v1155
    %v1159 = vmul.f32 1.0, %v1158
    %v1160 = vrcp.pop %v1156
    %v1161 = vmul.f32 1.0, %v1160
    %v1162 = vrcp.pop %v1157
    %v1163 = vmul.f32 1.0, %v1162
    %v1164 = vtanh.pop %v1145
    %v1165 = vmul.f32 %v1161, 0.0
    %v1166 = vmul.f32 %v1159, %v1164
    %v1167 = vadd.f32 %v1165, %v1166
    %v1168 = vtanh.pop %v1167
    %v1169 = vmul.f32 %v1163, %v1168
    %s1170 = smul.u32 1, 4
    %s1171 = smul.addr %s1170, 8
    %s1172 = scalar_lea.vmem [#allocation2], %s1171
    %v1173 = vld [vmem:[%s1172] sm:$0xff]
    %v1174 = vld [vmem:[%s1172 + $0x8] sm:$0xff]
    %v1175 = vld [vmem:[%s1172 + $0x10] sm:$0xff]
    %v1176 = vld [vmem:[%s1172 + $0x18] sm:$0xff]
    %1177 = vmatprep.subr.mxu0 %v535
    %1178 = vmatpush1.msra.mxu0 %v534
    %1179 = vmatprep.subr.mxu0 %v531
    %1180 = vmatpush1.msra.mxu0 %v530
    %1181 = vmatprep.subr.mxu0 %v527
    %1182 = vmatpush1.msra.mxu0 %v526
    %1183 = vmatprep.subr.mxu0 %v523
    %1184 = vmatpush1.msra.mxu0 %v522
    %1185 = vmatprep.subr.mxu0 %v519
    %1186 = vmatpush1.msra.mxu0 %v518
    %1187 = vmatprep.subr.mxu0 %v515
    %1188 = vmatpush1.msra.mxu0 %v514
    %1189 = vmatprep.subr.mxu0 %v511
    %1190 = vmatpush1.msra.mxu0 %v510
    %1191 = vmatprep.subr.mxu0 %v507
    %1192 = vmatpush1.msra.mxu0 %v506
    %1193 = vmatprep.subr.mxu0 %v503
    %1194 = vmatpush1.msra.mxu0 %v502
    %1195 = vmatprep.subr.mxu0 %v499
    %1196 = vmatpush1.msra.mxu0 %v498
    %1197 = vmatprep.subr.mxu0 %v495
    %1198 = vmatpush1.msra.mxu0 %v494
    %1199 = vmatprep.subr.mxu0 %v491
    %1200 = vmatpush1.msra.mxu0 %v490
    %1201 = vmatprep.subr.mxu0 %v487
    %1202 = vmatpush1.msra.mxu0 %v486
    %1203 = vmatprep.subr.mxu0 %v483
    %1204 = vmatpush1.msra.mxu0 %v482
    %1205 = vmatprep.subr.mxu0 %v479
    %1206 = vmatpush1.msra.mxu0 %v478
    %1207 = vmatprep.subr.mxu0 %v475
    %1208 = vmatpush1.msra.mxu0 %v474
    %1209 = vmatprep.subr.mxu0 0.0
    %1210 = vmatpush2.msra.mxu0 0.0
    %1211 = vmatprep.subr.mxu0 0.0
    %1212 = vmatpush2.msra.mxu0 0.0
    %1213 = vmatprep.subr.mxu0 0.0
    %1214 = vmatpush2.msra.mxu0 0.0
    %1215 = vmatprep.subr.mxu0 0.0
    %1216 = vmatpush2.msra.mxu0 0.0
    %1217 = vmatprep.subr.mxu0 0.0
    %1218 = vmatpush2.msra.mxu0 0.0
    %1219 = vmatprep.subr.mxu0 0.0
    %1220 = vmatpush2.msra.mxu0 0.0
    %1221 = vmatprep.subr.mxu0 0.0
    %1222 = vmatpush2.msra.mxu0 0.0
    %1223 = vmatprep.subr.mxu0 0.0
    %1224 = vmatpush2.msra.mxu0 0.0
    %1225 = vmatprep.subr.mxu0 0.0
    %1226 = vmatpush2.msra.mxu0 0.0
    %1227 = vmatprep.subr.mxu0 0.0
    %1228 = vmatpush2.msra.mxu0 0.0
    %1229 = vmatprep.subr.mxu0 0.0
    %1230 = vmatpush2.msra.mxu0 0.0
    %1231 = vmatprep.subr.mxu0 0.0
    %1232 = vmatpush2.msra.mxu0 0.0
    %1233 = vmatprep.subr.mxu0 0.0
    %1234 = vmatpush2.msra.mxu0 0.0
    %1235 = vmatprep.subr.mxu0 0.0
    %1236 = vmatpush2.msra.mxu0 0.0
    %1237 = vmatprep.subr.mxu0 0.0
    %1238 = vmatpush2.msra.mxu0 0.0
    %1239 = vmatprep.subr.mxu0 0.0
    %1240 = vmatpush2.msra.mxu0 0.0
    %1241 = vmatprep.mubr.f32.mxu0 0.0
    %1242 = vmatmul.mubr.f32.gmra.mxu0 %v707
    %v1243 = vpop.f32.mrf.mxu0
    %v1244 = vadd.f32 0.0, %v1243
    %v1245 = vpop.f32.mrf.mxu0
    %v1246 = vadd.f32 0.0, %v1245
    %1247 = vdwg.mxu0
    %1248 = vmatprep.subr.mxu0 %v537
    %1249 = vmatpush1.msra.mxu0 %v536
    %1250 = vmatprep.subr.mxu0 %v533
    %1251 = vmatpush1.msra.mxu0 %v532
    %1252 = vmatprep.subr.mxu0 %v529
    %1253 = vmatpush1.msra.mxu0 %v528
    %1254 = vmatprep.subr.mxu0 %v525
    %1255 = vmatpush1.msra.mxu0 %v524
    %1256 = vmatprep.subr.mxu0 %v521
    %1257 = vmatpush1.msra.mxu0 %v520
    %1258 = vmatprep.subr.mxu0 %v517
    %1259 = vmatpush1.msra.mxu0 %v516
    %1260 = vmatprep.subr.mxu0 %v513
    %1261 = vmatpush1.msra.mxu0 %v512
    %1262 = vmatprep.subr.mxu0 %v509
    %1263 = vmatpush1.msra.mxu0 %v508
    %1264 = vmatprep.subr.mxu0 %v505
    %1265 = vmatpush1.msra.mxu0 %v504
    %1266 = vmatprep.subr.mxu0 %v501
    %1267 = vmatpush1.msra.mxu0 %v500
    %1268 = vmatprep.subr.mxu0 %v497
    %1269 = vmatpush1.msra.mxu0 %v496
    %1270 = vmatprep.subr.mxu0 %v493
    %1271 = vmatpush1.msra.mxu0 %v492
    %1272 = vmatprep.subr.mxu0 %v489
    %1273 = vmatpush1.msra.mxu0 %v488
    %1274 = vmatprep.subr.mxu0 %v485
    %1275 = vmatpush1.msra.mxu0 %v484
    %1276 = vmatprep.subr.mxu0 %v481
    %1277 = vmatpush1.msra.mxu0 %v480
    %1278 = vmatprep.subr.mxu0 %v477
    %1279 = vmatpush1.msra.mxu0 %v476
    %1280 = vmatprep.subr.mxu0 0.0
    %1281 = vmatpush2.msra.mxu0 0.0
    %1282 = vmatprep.subr.mxu0 0.0
    %1283 = vmatpush2.msra.mxu0 0.0
    %1284 = vmatprep.subr.mxu0 0.0
    %1285 = vmatpush2.msra.mxu0 0.0
    %1286 = vmatprep.subr.mxu0 0.0
    %1287 = vmatpush2.msra.mxu0 0.0
    %1288 = vmatprep.subr.mxu0 0.0
    %1289 = vmatpush2.msra.mxu0 0.0
    %1290 = vmatprep.subr.mxu0 0.0
    %1291 = vmatpush2.msra.mxu0 0.0
    %1292 = vmatprep.subr.mxu0 0.0
    %1293 = vmatpush2.msra.mxu0 0.0
    %1294 = vmatprep.subr.mxu0 0.0
    %1295 = vmatpush2.msra.mxu0 0.0
    %1296 = vmatprep.subr.mxu0 0.0
    %1297 = vmatpush2.msra.mxu0 0.0
    %1298 = vmatprep.subr.mxu0 0.0
    %1299 = vmatpush2.msra.mxu0 0.0
    %1300 = vmatprep.subr.mxu0 0.0
    %1301 = vmatpush2.msra.mxu0 0.0
    %1302 = vmatprep.subr.mxu0 0.0
    %1303 = vmatpush2.msra.mxu0 0.0
    %1304 = vmatprep.subr.mxu0 0.0
    %1305 = vmatpush2.msra.mxu0 0.0
    %1306 = vmatprep.subr.mxu0 0.0
    %1307 = vmatpush2.msra.mxu0 0.0
    %1308 = vmatprep.subr.mxu0 0.0
    %1309 = vmatpush2.msra.mxu0 0.0
    %1310 = vmatprep.subr.mxu0 0.0
    %1311 = vmatpush2.msra.mxu0 0.0
    %1312 = vmatprep.mubr.f32.mxu0 0.0
    %1313 = vmatmul.mubr.f32.gmra.mxu0 %v707
    %v1314 = vpop.f32.mrf.mxu0
    %v1315 = vadd.f32 0.0, %v1314
    %v1316 = vpop.f32.mrf.mxu0
    %v1317 = vadd.f32 0.0, %v1316
    %1318 = vdwg.mxu0
    %v1319 = vadd.f32 %v1173, %v1244
    %v1320 = vadd.f32 %v1174, %v1246
    %v1321 = vadd.f32 %v1175, %v1315
    %v1322 = vadd.f32 %v1176, %v1317
    %v1323 = vxor.u32 %v1319, 2147483648
    %v1324 = vxor.u32 %v1320, 2147483648
    %v1325 = vxor.u32 %v1321, 2147483648
    %v1326 = vmul.f32 %v1323, 1.442695
    %v1327 = vpow.pop %v1326
    %v1328 = vmul.f32 %v1324, 1.442695
    %v1329 = vpow.pop %v1328
    %v1330 = vmul.f32 %v1325, 1.442695
    %v1331 = vpow.pop %v1330
    %v1332 = vadd.f32 %v1327, 1.0
    %v1333 = vadd.f32 %v1329, 1.0
    %v1334 = vadd.f32 %v1331, 1.0
    %v1335 = vrcp.pop %v1332
    %v1336 = vmul.f32 1.0, %v1335
    %v1337 = vrcp.pop %v1333
    %v1338 = vmul.f32 1.0, %v1337
    %v1339 = vrcp.pop %v1334
    %v1340 = vmul.f32 1.0, %v1339
    %v1341 = vtanh.pop %v1322
    %v1342 = vmul.f32 %v1338, %v705
    %v1343 = vmul.f32 %v1336, %v1341
    %v1344 = vadd.f32 %v1342, %v1343
    %v1345 = vtanh.pop %v1344
    %v1346 = vmul.f32 %v1340, %v1345
    %1347 = vmatprep.subr.mxu0 %v833
    %1348 = vmatpush1.msra.mxu0 %v832
    %1349 = vmatprep.subr.mxu0 %v829
    %1350 = vmatpush1.msra.mxu0 %v828
    %1351 = vmatprep.subr.mxu0 %v825
    %1352 = vmatpush1.msra.mxu0 %v824
    %1353 = vmatprep.subr.mxu0 %v821
    %1354 = vmatpush1.msra.mxu0 %v820
    %1355 = vmatprep.subr.mxu0 %v817
    %1356 = vmatpush1.msra.mxu0 %v816
    %1357 = vmatprep.subr.mxu0 %v813
    %1358 = vmatpush1.msra.mxu0 %v812
    %1359 = vmatprep.subr.mxu0 %v809
    %1360 = vmatpush1.msra.mxu0 %v808
    %1361 = vmatprep.subr.mxu0 %v805
    %1362 = vmatpush1.msra.mxu0 %v804
    %1363 = vmatprep.subr.mxu0 %v801
    %1364 = vmatpush1.msra.mxu0 %v800
    %1365 = vmatprep.subr.mxu0 %v797
    %1366 = vmatpush1.msra.mxu0 %v796
    %1367 = vmatprep.subr.mxu0 %v793
    %1368 = vmatpush1.msra.mxu0 %v792
    %1369 = vmatprep.subr.mxu0 %v789
    %1370 = vmatpush1.msra.mxu0 %v788
    %1371 = vmatprep.subr.mxu0 %v785
    %1372 = vmatpush1.msra.mxu0 %v784
    %1373 = vmatprep.subr.mxu0 %v781
    %1374 = vmatpush1.msra.mxu0 %v780
    %1375 = vmatprep.subr.mxu0 %v777
    %1376 = vmatpush1.msra.mxu0 %v776
    %1377 = vmatprep.subr.mxu0 %v773
    %1378 = vmatpush1.msra.mxu0 %v772
    %1379 = vmatprep.subr.mxu0 0.0
    %1380 = vmatpush2.msra.mxu0 0.0
    %1381 = vmatprep.subr.mxu0 0.0
    %1382 = vmatpush2.msra.mxu0 0.0
    %1383 = vmatprep.subr.mxu0 0.0
    %1384 = vmatpush2.msra.mxu0 0.0
    %1385 = vmatprep.subr.mxu0 0.0
    %1386 = vmatpush2.msra.mxu0 0.0
    %1387 = vmatprep.subr.mxu0 0.0
    %1388 = vmatpush2.msra.mxu0 0.0
    %1389 = vmatprep.subr.mxu0 0.0
    %1390 = vmatpush2.msra.mxu0 0.0
    %1391 = vmatprep.subr.mxu0 0.0
    %1392 = vmatpush2.msra.mxu0 0.0
    %1393 = vmatprep.subr.mxu0 0.0
    %1394 = vmatpush2.msra.mxu0 0.0
    %1395 = vmatprep.subr.mxu0 0.0
    %1396 = vmatpush2.msra.mxu0 0.0
    %1397 = vmatprep.subr.mxu0 0.0
    %1398 = vmatpush2.msra.mxu0 0.0
    %1399 = vmatprep.subr.mxu0 0.0
    %1400 = vmatpush2.msra.mxu0 0.0
    %1401 = vmatprep.subr.mxu0 0.0
    %1402 = vmatpush2.msra.mxu0 0.0
    %1403 = vmatprep.subr.mxu0 0.0
    %1404 = vmatpush2.msra.mxu0 0.0
    %1405 = vmatprep.subr.mxu0 0.0
    %1406 = vmatpush2.msra.mxu0 0.0
    %1407 = vmatprep.subr.mxu0 0.0
    %1408 = vmatpush2.msra.mxu0 0.0
    %1409 = vmatprep.subr.mxu0 0.0
    %1410 = vmatpush2.msra.mxu0 0.0
    %1411 = vmatprep.mubr.f32.mxu0 0.0
    %1412 = vmatmul.mubr.f32.gmra.mxu0 %v1169
    %v1413 = vpop.f32.mrf.mxu0
    %v1414 = vadd.f32 0.0, %v1413
    %v1415 = vpop.f32.mrf.mxu0
    %v1416 = vadd.f32 0.0, %v1415
    %1417 = vdwg.mxu0
    %1418 = vmatprep.subr.mxu0 %v835
    %1419 = vmatpush1.msra.mxu0 %v834
    %1420 = vmatprep.subr.mxu0 %v831
    %1421 = vmatpush1.msra.mxu0 %v830
    %1422 = vmatprep.subr.mxu0 %v827
    %1423 = vmatpush1.msra.mxu0 %v826
    %1424 = vmatprep.subr.mxu0 %v823
    %1425 = vmatpush1.msra.mxu0 %v822
    %1426 = vmatprep.subr.mxu0 %v819
    %1427 = vmatpush1.msra.mxu0 %v818
    %1428 = vmatprep.subr.mxu0 %v815
    %1429 = vmatpush1.msra.mxu0 %v814
    %1430 = vmatprep.subr.mxu0 %v811
    %1431 = vmatpush1.msra.mxu0 %v810
    %1432 = vmatprep.subr.mxu0 %v807
    %1433 = vmatpush1.msra.mxu0 %v806
    %1434 = vmatprep.subr.mxu0 %v803
    %1435 = vmatpush1.msra.mxu0 %v802
    %1436 = vmatprep.subr.mxu0 %v799
    %1437 = vmatpush1.msra.mxu0 %v798
    %1438 = vmatprep.subr.mxu0 %v795
    %1439 = vmatpush1.msra.mxu0 %v794
    %1440 = vmatprep.subr.mxu0 %v791
    %1441 = vmatpush1.msra.mxu0 %v790
    %1442 = vmatprep.subr.mxu0 %v787
    %1443 = vmatpush1.msra.mxu0 %v786
    %1444 = vmatprep.subr.mxu0 %v783
    %1445 = vmatpush1.msra.mxu0 %v782
    %1446 = vmatprep.subr.mxu0 %v779
    %1447 = vmatpush1.msra.mxu0 %v778
    %1448 = vmatprep.subr.mxu0 %v775
    %1449 = vmatpush1.msra.mxu0 %v774
    %1450 = vmatprep.subr.mxu0 0.0
    %1451 = vmatpush2.msra.mxu0 0.0
    %1452 = vmatprep.subr.mxu0 0.0
    %1453 = vmatpush2.msra.mxu0 0.0
    %1454 = vmatprep.subr.mxu0 0.0
    %1455 = vmatpush2.msra.mxu0 0.0
    %1456 = vmatprep.subr.mxu0 0.0
    %1457 = vmatpush2.msra.mxu0 0.0
    %1458 = vmatprep.subr.mxu0 0.0
    %1459 = vmatpush2.msra.mxu0 0.0
    %1460 = vmatprep.subr.mxu0 0.0
    %1461 = vmatpush2.msra.mxu0 0.0
    %1462 = vmatprep.subr.mxu0 0.0
    %1463 = vmatpush2.msra.mxu0 0.0
    %1464 = vmatprep.subr.mxu0 0.0
    %1465 = vmatpush2.msra.mxu0 0.0
    %1466 = vmatprep.subr.mxu0 0.0
    %1467 = vmatpush2.msra.mxu0 0.0
    %1468 = vmatprep.subr.mxu0 0.0
    %1469 = vmatpush2.msra.mxu0 0.0
    %1470 = vmatprep.subr.mxu0 0.0
    %1471 = vmatpush2.msra.mxu0 0.0
    %1472 = vmatprep.subr.mxu0 0.0
    %1473 = vmatpush2.msra.mxu0 0.0
    %1474 = vmatprep.subr.mxu0 0.0
    %1475 = vmatpush2.msra.mxu0 0.0
    %1476 = vmatprep.subr.mxu0 0.0
    %1477 = vmatpush2.msra.mxu0 0.0
    %1478 = vmatprep.subr.mxu0 0.0
    %1479 = vmatpush2.msra.mxu0 0.0
    %1480 = vmatprep.subr.mxu0 0.0
    %1481 = vmatpush2.msra.mxu0 0.0
    %1482 = vmatprep.mubr.f32.mxu0 0.0
    %1483 = vmatmul.mubr.f32.gmra.mxu0 %v1169
    %v1484 = vpop.f32.mrf.mxu0
    %v1485 = vadd.f32 0.0, %v1484
    %v1486 = vpop.f32.mrf.mxu0
    %v1487 = vadd.f32 0.0, %v1486
    %1488 = vdwg.mxu0
    %1489 = vmatprep.subr.mxu0 %v769
    %1490 = vmatpush1.msra.mxu0 %v768
    %1491 = vmatprep.subr.mxu0 %v765
    %1492 = vmatpush1.msra.mxu0 %v764
    %1493 = vmatprep.subr.mxu0 %v761
    %1494 = vmatpush1.msra.mxu0 %v760
    %1495 = vmatprep.subr.mxu0 %v757
    %1496 = vmatpush1.msra.mxu0 %v756
    %1497 = vmatprep.subr.mxu0 %v753
    %1498 = vmatpush1.msra.mxu0 %v752
    %1499 = vmatprep.subr.mxu0 %v749
    %1500 = vmatpush1.msra.mxu0 %v748
    %1501 = vmatprep.subr.mxu0 %v745
    %1502 = vmatpush1.msra.mxu0 %v744
    %1503 = vmatprep.subr.mxu0 %v741
    %1504 = vmatpush1.msra.mxu0 %v740
    %1505 = vmatprep.subr.mxu0 %v737
    %1506 = vmatpush1.msra.mxu0 %v736
    %1507 = vmatprep.subr.mxu0 %v733
    %1508 = vmatpush1.msra.mxu0 %v732
    %1509 = vmatprep.subr.mxu0 %v729
    %1510 = vmatpush1.msra.mxu0 %v728
    %1511 = vmatprep.subr.mxu0 %v725
    %1512 = vmatpush1.msra.mxu0 %v724
    %1513 = vmatprep.subr.mxu0 %v721
    %1514 = vmatpush1.msra.mxu0 %v720
    %1515 = vmatprep.subr.mxu0 %v717
    %1516 = vmatpush1.msra.mxu0 %v716
    %1517 = vmatprep.subr.mxu0 %v713
    %1518 = vmatpush1.msra.mxu0 %v712
    %1519 = vmatprep.subr.mxu0 %v709
    %1520 = vmatpush1.msra.mxu0 %v708
    %1521 = vmatprep.subr.mxu0 0.0
    %1522 = vmatpush2.msra.mxu0 0.0
    %1523 = vmatprep.subr.mxu0 0.0
    %1524 = vmatpush2.msra.mxu0 0.0
    %1525 = vmatprep.subr.mxu0 0.0
    %1526 = vmatpush2.msra.mxu0 0.0
    %1527 = vmatprep.subr.mxu0 0.0
    %1528 = vmatpush2.msra.mxu0 0.0
    %1529 = vmatprep.subr.mxu0 0.0
    %1530 = vmatpush2.msra.mxu0 0.0
    %1531 = vmatprep.subr.mxu0 0.0
    %1532 = vmatpush2.msra.mxu0 0.0
    %1533 = vmatprep.subr.mxu0 0.0
    %1534 = vmatpush2.msra.mxu0 0.0
    %1535 = vmatprep.subr.mxu0 0.0
    %1536 = vmatpush2.msra.mxu0 0.0
    %1537 = vmatprep.subr.mxu0 0.0
    %1538 = vmatpush2.msra.mxu0 0.0
    %1539 = vmatprep.subr.mxu0 0.0
    %1540 = vmatpush2.msra.mxu0 0.0
    %1541 = vmatprep.subr.mxu0 0.0
    %1542 = vmatpush2.msra.mxu0 0.0
    %1543 = vmatprep.subr.mxu0 0.0
    %1544 = vmatpush2.msra.mxu0 0.0
    %1545 = vmatprep.subr.mxu0 0.0
    %1546 = vmatpush2.msra.mxu0 0.0
    %1547 = vmatprep.subr.mxu0 0.0
    %1548 = vmatpush2.msra.mxu0 0.0
    %1549 = vmatprep.subr.mxu0 0.0
    %1550 = vmatpush2.msra.mxu0 0.0
    %1551 = vmatprep.subr.mxu0 0.0
    %1552 = vmatpush2.msra.mxu0 0.0
    %1553 = vmatprep.mubr.f32.mxu0 0.0
    %1554 = vmatmul.mubr.f32.gmra.mxu0 %v1346
    %v1555 = vpop.f32.mrf.mxu0
    %v1556 = vadd.f32 %v1414, %v1555
    %v1557 = vpop.f32.mrf.mxu0
    %v1558 = vadd.f32 %v1416, %v1557
    %1559 = vdwg.mxu0
    %1560 = vmatprep.subr.mxu0 %v771
    %1561 = vmatpush1.msra.mxu0 %v770
    %1562 = vmatprep.subr.mxu0 %v767
    %1563 = vmatpush1.msra.mxu0 %v766
    %1564 = vmatprep.subr.mxu0 %v763
    %1565 = vmatpush1.msra.mxu0 %v762
    %1566 = vmatprep.subr.mxu0 %v759
    %1567 = vmatpush1.msra.mxu0 %v758
    %1568 = vmatprep.subr.mxu0 %v755
    %1569 = vmatpush1.msra.mxu0 %v754
    %1570 = vmatprep.subr.mxu0 %v751
    %1571 = vmatpush1.msra.mxu0 %v750
    %1572 = vmatprep.subr.mxu0 %v747
    %1573 = vmatpush1.msra.mxu0 %v746
    %1574 = vmatprep.subr.mxu0 %v743
    %1575 = vmatpush1.msra.mxu0 %v742
    %1576 = vmatprep.subr.mxu0 %v739
    %1577 = vmatpush1.msra.mxu0 %v738
    %1578 = vmatprep.subr.mxu0 %v735
    %1579 = vmatpush1.msra.mxu0 %v734
    %1580 = vmatprep.subr.mxu0 %v731
    %1581 = vmatpush1.msra.mxu0 %v730
    %1582 = vmatprep.subr.mxu0 %v727
    %1583 = vmatpush1.msra.mxu0 %v726
    %1584 = vmatprep.subr.mxu0 %v723
    %1585 = vmatpush1.msra.mxu0 %v722
    %1586 = vmatprep.subr.mxu0 %v719
    %1587 = vmatpush1.msra.mxu0 %v718
    %1588 = vmatprep.subr.mxu0 %v715
    %1589 = vmatpush1.msra.mxu0 %v714
    %1590 = vmatprep.subr.mxu0 %v711
    %1591 = vmatpush1.msra.mxu0 %v710
    %1592 = vmatprep.subr.mxu0 0.0
    %1593 = vmatpush2.msra.mxu0 0.0
    %1594 = vmatprep.subr.mxu0 0.0
    %1595 = vmatpush2.msra.mxu0 0.0
    %1596 = vmatprep.subr.mxu0 0.0
    %1597 = vmatpush2.msra.mxu0 0.0
    %1598 = vmatprep.subr.mxu0 0.0
    %1599 = vmatpush2.msra.mxu0 0.0
    %1600 = vmatprep.subr.mxu0 0.0
    %1601 = vmatpush2.msra.mxu0 0.0
    %1602 = vmatprep.subr.mxu0 0.0
    %1603 = vmatpush2.msra.mxu0 0.0
    %1604 = vmatprep.subr.mxu0 0.0
    %1605 = vmatpush2.msra.mxu0 0.0
    %1606 = vmatprep.subr.mxu0 0.0
    %1607 = vmatpush2.msra.mxu0 0.0
    %1608 = vmatprep.subr.mxu0 0.0
    %1609 = vmatpush2.msra.mxu0 0.0
    %1610 = vmatprep.subr.mxu0 0.0
    %1611 = vmatpush2.msra.mxu0 0.0
    %1612 = vmatprep.subr.mxu0 0.0
    %1613 = vmatpush2.msra.mxu0 0.0
    %1614 = vmatprep.subr.mxu0 0.0
    %1615 = vmatpush2.msra.mxu0 0.0
    %1616 = vmatprep.subr.mxu0 0.0
    %1617 = vmatpush2.msra.mxu0 0.0
    %1618 = vmatprep.subr.mxu0 0.0
    %1619 = vmatpush2.msra.mxu0 0.0
    %1620 = vmatprep.subr.mxu0 0.0
    %1621 = vmatpush2.msra.mxu0 0.0
    %1622 = vmatprep.subr.mxu0 0.0
    %1623 = vmatpush2.msra.mxu0 0.0
    %1624 = vmatprep.mubr.f32.mxu0 0.0
    %1625 = vmatmul.mubr.f32.gmra.mxu0 %v1346
    %v1626 = vpop.f32.mrf.mxu0
    %v1627 = vadd.f32 %v1485, %v1626
    %v1628 = vpop.f32.mrf.mxu0
    %v1629 = vadd.f32 %v1487, %v1628
    %1630 = vdwg.mxu0
    %v1631 = vadd.f32 %v1556, %v1125
    %v1632 = vadd.f32 %v1558, %v1129
    %v1633 = vadd.f32 %v1627, %v1133
    %v1634 = vadd.f32 %v1629, %v1137
    %v1635 = vxor.u32 %v1631, 2147483648
    %v1636 = vxor.u32 %v1632, 2147483648
    %v1637 = vxor.u32 %v1633, 2147483648
    %v1638 = vmul.f32 %v1635, 1.442695
    %v1639 = vpow.pop %v1638
    %v1640 = vmul.f32 %v1636, 1.442695
    %v1641 = vpow.pop %v1640
    %v1642 = vmul.f32 %v1637, 1.442695
    %v1643 = vpow.pop %v1642
    %v1644 = vadd.f32 %v1639, 1.0
    %v1645 = vadd.f32 %v1641, 1.0
    %v1646 = vadd.f32 %v1643, 1.0
    %v1647 = vrcp.pop %v1644
    %v1648 = vmul.f32 1.0, %v1647
    %v1649 = vrcp.pop %v1645
    %v1650 = vmul.f32 1.0, %v1649
    %v1651 = vrcp.pop %v1646
    %v1652 = vmul.f32 1.0, %v1651
    %v1653 = vtanh.pop %v1634
    %v1654 = vmul.f32 %v1650, %v1167
    %v1655 = vmul.f32 %v1648, %v1653
    %v1656 = vadd.f32 %v1654, %v1655
    %v1657 = vtanh.pop %v1656
    %v1658 = vmul.f32 %v1652, %v1657
    %s1659 = smul.u32 2, 4
    %s1660 = smul.addr %s1659, 8
    %s1661 = scalar_lea.vmem [#allocation2], %s1660
    %v1662 = vld [vmem:[%s1661] sm:$0xff]
    %v1663 = vld [vmem:[%s1661 + $0x8] sm:$0xff]
    %v1664 = vld [vmem:[%s1661 + $0x10] sm:$0xff]
    %v1665 = vld [vmem:[%s1661 + $0x18] sm:$0xff]
    %1666 = vmatprep.subr.mxu0 %v535
    %1667 = vmatpush1.msra.mxu0 %v534
    %1668 = vmatprep.subr.mxu0 %v531
    %1669 = vmatpush1.msra.mxu0 %v530
    %1670 = vmatprep.subr.mxu0 %v527
    %1671 = vmatpush1.msra.mxu0 %v526
    %1672 = vmatprep.subr.mxu0 %v523
    %1673 = vmatpush1.msra.mxu0 %v522
    %1674 = vmatprep.subr.mxu0 %v519
    %1675 = vmatpush1.msra.mxu0 %v518
    %1676 = vmatprep.subr.mxu0 %v515
    %1677 = vmatpush1.msra.mxu0 %v514
    %1678 = vmatprep.subr.mxu0 %v511
    %1679 = vmatpush1.msra.mxu0 %v510
    %1680 = vmatprep.subr.mxu0 %v507
    %1681 = vmatpush1.msra.mxu0 %v506
    %1682 = vmatprep.subr.mxu0 %v503
    %1683 = vmatpush1.msra.mxu0 %v502
    %1684 = vmatprep.subr.mxu0 %v499
    %1685 = vmatpush1.msra.mxu0 %v498
    %1686 = vmatprep.subr.mxu0 %v495
    %1687 = vmatpush1.msra.mxu0 %v494
    %1688 = vmatprep.subr.mxu0 %v491
    %1689 = vmatpush1.msra.mxu0 %v490
    %1690 = vmatprep.subr.mxu0 %v487
    %1691 = vmatpush1.msra.mxu0 %v486
    %1692 = vmatprep.subr.mxu0 %v483
    %1693 = vmatpush1.msra.mxu0 %v482
    %1694 = vmatprep.subr.mxu0 %v479
    %1695 = vmatpush1.msra.mxu0 %v478
    %1696 = vmatprep.subr.mxu0 %v475
    %1697 = vmatpush1.msra.mxu0 %v474
    %1698 = vmatprep.subr.mxu0 0.0
    %1699 = vmatpush2.msra.mxu0 0.0
    %1700 = vmatprep.subr.mxu0 0.0
    %1701 = vmatpush2.msra.mxu0 0.0
    %1702 = vmatprep.subr.mxu0 0.0
    %1703 = vmatpush2.msra.mxu0 0.0
    %1704 = vmatprep.subr.mxu0 0.0
    %1705 = vmatpush2.msra.mxu0 0.0
    %1706 = vmatprep.subr.mxu0 0.0
    %1707 = vmatpush2.msra.mxu0 0.0
    %1708 = vmatprep.subr.mxu0 0.0
    %1709 = vmatpush2.msra.mxu0 0.0
    %1710 = vmatprep.subr.mxu0 0.0
    %1711 = vmatpush2.msra.mxu0 0.0
    %1712 = vmatprep.subr.mxu0 0.0
    %1713 = vmatpush2.msra.mxu0 0.0
    %1714 = vmatprep.subr.mxu0 0.0
    %1715 = vmatpush2.msra.mxu0 0.0
    %1716 = vmatprep.subr.mxu0 0.0
    %1717 = vmatpush2.msra.mxu0 0.0
    %1718 = vmatprep.subr.mxu0 0.0
    %1719 = vmatpush2.msra.mxu0 0.0
    %1720 = vmatprep.subr.mxu0 0.0
    %1721 = vmatpush2.msra.mxu0 0.0
    %1722 = vmatprep.subr.mxu0 0.0
    %1723 = vmatpush2.msra.mxu0 0.0
    %1724 = vmatprep.subr.mxu0 0.0
    %1725 = vmatpush2.msra.mxu0 0.0
    %1726 = vmatprep.subr.mxu0 0.0
    %1727 = vmatpush2.msra.mxu0 0.0
    %1728 = vmatprep.subr.mxu0 0.0
    %1729 = vmatpush2.msra.mxu0 0.0
    %1730 = vmatprep.mubr.f32.mxu0 0.0
    %1731 = vmatmul.mubr.f32.gmra.mxu0 %v1346
    %v1732 = vpop.f32.mrf.mxu0
    %v1733 = vadd.f32 0.0, %v1732
    %v1734 = vpop.f32.mrf.mxu0
    %v1735 = vadd.f32 0.0, %v1734
    %1736 = vdwg.mxu0
    %1737 = vmatprep.subr.mxu0 %v537
    %1738 = vmatpush1.msra.mxu0 %v536
    %1739 = vmatprep.subr.mxu0 %v533
    %1740 = vmatpush1.msra.mxu0 %v532
    %1741 = vmatprep.subr.mxu0 %v529
    %1742 = vmatpush1.msra.mxu0 %v528
    %1743 = vmatprep.subr.mxu0 %v525
    %1744 = vmatpush1.msra.mxu0 %v524
    %1745 = vmatprep.subr.mxu0 %v521
    %1746 = vmatpush1.msra.mxu0 %v520
    %1747 = vmatprep.subr.mxu0 %v517
    %1748 = vmatpush1.msra.mxu0 %v516
    %1749 = vmatprep.subr.mxu0 %v513
    %1750 = vmatpush1.msra.mxu0 %v512
    %1751 = vmatprep.subr.mxu0 %v509
    %1752 = vmatpush1.msra.mxu0 %v508
    %1753 = vmatprep.subr.mxu0 %v505
    %1754 = vmatpush1.msra.mxu0 %v504
    %1755 = vmatprep.subr.mxu0 %v501
    %1756 = vmatpush1.msra.mxu0 %v500
    %1757 = vmatprep.subr.mxu0 %v497
    %1758 = vmatpush1.msra.mxu0 %v496
    %1759 = vmatprep.subr.mxu0 %v493
    %1760 = vmatpush1.msra.mxu0 %v492
    %1761 = vmatprep.subr.mxu0 %v489
    %1762 = vmatpush1.msra.mxu0 %v488
    %1763 = vmatprep.subr.mxu0 %v485
    %1764 = vmatpush1.msra.mxu0 %v484
    %1765 = vmatprep.subr.mxu0 %v481
    %1766 = vmatpush1.msra.mxu0 %v480
    %1767 = vmatprep.subr.mxu0 %v477
    %1768 = vmatpush1.msra.mxu0 %v476
    %1769 = vmatprep.subr.mxu0 0.0
    %1770 = vmatpush2.msra.mxu0 0.0
    %1771 = vmatprep.subr.mxu0 0.0
    %1772 = vmatpush2.msra.mxu0 0.0
    %1773 = vmatprep.subr.mxu0 0.0
    %1774 = vmatpush2.msra.mxu0 0.0
    %1775 = vmatprep.subr.mxu0 0.0
    %1776 = vmatpush2.msra.mxu0 0.0
    %1777 = vmatprep.subr.mxu0 0.0
    %1778 = vmatpush2.msra.mxu0 0.0
    %1779 = vmatprep.subr.mxu0 0.0
    %1780 = vmatpush2.msra.mxu0 0.0
    %1781 = vmatprep.subr.mxu0 0.0
    %1782 = vmatpush2.msra.mxu0 0.0
    %1783 = vmatprep.subr.mxu0 0.0
    %1784 = vmatpush2.msra.mxu0 0.0
    %1785 = vmatprep.subr.mxu0 0.0
    %1786 = vmatpush2.msra.mxu0 0.0
    %1787 = vmatprep.subr.mxu0 0.0
    %1788 = vmatpush2.msra.mxu0 0.0
    %1789 = vmatprep.subr.mxu0 0.0
    %1790 = vmatpush2.msra.mxu0 0.0
    %1791 = vmatprep.subr.mxu0 0.0
    %1792 = vmatpush2.msra.mxu0 0.0
    %1793 = vmatprep.subr.mxu0 0.0
    %1794 = vmatpush2.msra.mxu0 0.0
    %1795 = vmatprep.subr.mxu0 0.0
    %1796 = vmatpush2.msra.mxu0 0.0
    %1797 = vmatprep.subr.mxu0 0.0
    %1798 = vmatpush2.msra.mxu0 0.0
    %1799 = vmatprep.subr.mxu0 0.0
    %1800 = vmatpush2.msra.mxu0 0.0
    %1801 = vmatprep.mubr.f32.mxu0 0.0
    %1802 = vmatmul.mubr.f32.gmra.mxu0 %v1346
    %v1803 = vpop.f32.mrf.mxu0
    %v1804 = vadd.f32 0.0, %v1803
    %v1805 = vpop.f32.mrf.mxu0
    %v1806 = vadd.f32 0.0, %v1805
    %1807 = vdwg.mxu0
    %v1808 = vadd.f32 %v1662, %v1733
    %v1809 = vadd.f32 %v1663, %v1735
    %v1810 = vadd.f32 %v1664, %v1804
    %v1811 = vadd.f32 %v1665, %v1806
    %v1812 = vxor.u32 %v1808, 2147483648
    %v1813 = vxor.u32 %v1809, 2147483648
    %v1814 = vxor.u32 %v1810, 2147483648
    %v1815 = vmul.f32 %v1812, 1.442695
    %v1816 = vpow.pop %v1815
    %v1817 = vmul.f32 %v1813, 1.442695
    %v1818 = vpow.pop %v1817
    %v1819 = vmul.f32 %v1814, 1.442695
    %v1820 = vpow.pop %v1819
    %v1821 = vadd.f32 %v1816, 1.0
    %v1822 = vadd.f32 %v1818, 1.0
    %v1823 = vadd.f32 %v1820, 1.0
    %v1824 = vrcp.pop %v1821
    %v1825 = vmul.f32 1.0, %v1824
    %v1826 = vrcp.pop %v1822
    %v1827 = vmul.f32 1.0, %v1826
    %v1828 = vrcp.pop %v1823
    %v1829 = vmul.f32 1.0, %v1828
    %v1830 = vtanh.pop %v1811
    %v1831 = vmul.f32 %v1827, %v1344
    %v1832 = vmul.f32 %v1825, %v1830
    %v1833 = vadd.f32 %v1831, %v1832
    %v1834 = vtanh.pop %v1833
    %v1835 = vmul.f32 %v1829, %v1834
    %1836 = vmatprep.subr.mxu0 %v833
    %1837 = vmatpush1.msra.mxu0 %v832
    %1838 = vmatprep.subr.mxu0 %v829
    %1839 = vmatpush1.msra.mxu0 %v828
    %1840 = vmatprep.subr.mxu0 %v825
    %1841 = vmatpush1.msra.mxu0 %v824
    %1842 = vmatprep.subr.mxu0 %v821
    %1843 = vmatpush1.msra.mxu0 %v820
    %1844 = vmatprep.subr.mxu0 %v817
    %1845 = vmatpush1.msra.mxu0 %v816
    %1846 = vmatprep.subr.mxu0 %v813
    %1847 = vmatpush1.msra.mxu0 %v812
    %1848 = vmatprep.subr.mxu0 %v809
    %1849 = vmatpush1.msra.mxu0 %v808
    %1850 = vmatprep.subr.mxu0 %v805
    %1851 = vmatpush1.msra.mxu0 %v804
    %1852 = vmatprep.subr.mxu0 %v801
    %1853 = vmatpush1.msra.mxu0 %v800
    %1854 = vmatprep.subr.mxu0 %v797
    %1855 = vmatpush1.msra.mxu0 %v796
    %1856 = vmatprep.subr.mxu0 %v793
    %1857 = vmatpush1.msra.mxu0 %v792
    %1858 = vmatprep.subr.mxu0 %v789
    %1859 = vmatpush1.msra.mxu0 %v788
    %1860 = vmatprep.subr.mxu0 %v785
    %1861 = vmatpush1.msra.mxu0 %v784
    %1862 = vmatprep.subr.mxu0 %v781
    %1863 = vmatpush1.msra.mxu0 %v780
    %1864 = vmatprep.subr.mxu0 %v777
    %1865 = vmatpush1.msra.mxu0 %v776
    %1866 = vmatprep.subr.mxu0 %v773
    %1867 = vmatpush1.msra.mxu0 %v772
    %1868 = vmatprep.subr.mxu0 0.0
    %1869 = vmatpush2.msra.mxu0 0.0
    %1870 = vmatprep.subr.mxu0 0.0
    %1871 = vmatpush2.msra.mxu0 0.0
    %1872 = vmatprep.subr.mxu0 0.0
    %1873 = vmatpush2.msra.mxu0 0.0
    %1874 = vmatprep.subr.mxu0 0.0
    %1875 = vmatpush2.msra.mxu0 0.0
    %1876 = vmatprep.subr.mxu0 0.0
    %1877 = vmatpush2.msra.mxu0 0.0
    %1878 = vmatprep.subr.mxu0 0.0
    %1879 = vmatpush2.msra.mxu0 0.0
    %1880 = vmatprep.subr.mxu0 0.0
    %1881 = vmatpush2.msra.mxu0 0.0
    %1882 = vmatprep.subr.mxu0 0.0
    %1883 = vmatpush2.msra.mxu0 0.0
    %1884 = vmatprep.subr.mxu0 0.0
    %1885 = vmatpush2.msra.mxu0 0.0
    %1886 = vmatprep.subr.mxu0 0.0
    %1887 = vmatpush2.msra.mxu0 0.0
    %1888 = vmatprep.subr.mxu0 0.0
    %1889 = vmatpush2.msra.mxu0 0.0
    %1890 = vmatprep.subr.mxu0 0.0
    %1891 = vmatpush2.msra.mxu0 0.0
    %1892 = vmatprep.subr.mxu0 0.0
    %1893 = vmatpush2.msra.mxu0 0.0
    %1894 = vmatprep.subr.mxu0 0.0
    %1895 = vmatpush2.msra.mxu0 0.0
    %1896 = vmatprep.subr.mxu0 0.0
    %1897 = vmatpush2.msra.mxu0 0.0
    %1898 = vmatprep.subr.mxu0 0.0
    %1899 = vmatpush2.msra.mxu0 0.0
    %1900 = vmatprep.mubr.f32.mxu0 0.0
    %1901 = vmatmul.mubr.f32.gmra.mxu0 %v1658
    %v1902 = vpop.f32.mrf.mxu0
    %v1903 = vadd.f32 0.0, %v1902
    %v1904 = vpop.f32.mrf.mxu0
    %v1905 = vadd.f32 0.0, %v1904
    %1906 = vdwg.mxu0
    %1907 = vmatprep.subr.mxu0 %v835
    %1908 = vmatpush1.msra.mxu0 %v834
    %1909 = vmatprep.subr.mxu0 %v831
    %1910 = vmatpush1.msra.mxu0 %v830
    %1911 = vmatprep.subr.mxu0 %v827
    %1912 = vmatpush1.msra.mxu0 %v826
    %1913 = vmatprep.subr.mxu0 %v823
    %1914 = vmatpush1.msra.mxu0 %v822
    %1915 = vmatprep.subr.mxu0 %v819
    %1916 = vmatpush1.msra.mxu0 %v818
    %1917 = vmatprep.subr.mxu0 %v815
    %1918 = vmatpush1.msra.mxu0 %v814
    %1919 = vmatprep.subr.mxu0 %v811
    %1920 = vmatpush1.msra.mxu0 %v810
    %1921 = vmatprep.subr.mxu0 %v807
    %1922 = vmatpush1.msra.mxu0 %v806
    %1923 = vmatprep.subr.mxu0 %v803
    %1924 = vmatpush1.msra.mxu0 %v802
    %1925 = vmatprep.subr.mxu0 %v799
    %1926 = vmatpush1.msra.mxu0 %v798
    %1927 = vmatprep.subr.mxu0 %v795
    %1928 = vmatpush1.msra.mxu0 %v794
    %1929 = vmatprep.subr.mxu0 %v791
    %1930 = vmatpush1.msra.mxu0 %v790
    %1931 = vmatprep.subr.mxu0 %v787
    %1932 = vmatpush1.msra.mxu0 %v786
    %1933 = vmatprep.subr.mxu0 %v783
    %1934 = vmatpush1.msra.mxu0 %v782
    %1935 = vmatprep.subr.mxu0 %v779
    %1936 = vmatpush1.msra.mxu0 %v778
    %1937 = vmatprep.subr.mxu0 %v775
    %1938 = vmatpush1.msra.mxu0 %v774
    %1939 = vmatprep.subr.mxu0 0.0
    %1940 = vmatpush2.msra.mxu0 0.0
    %1941 = vmatprep.subr.mxu0 0.0
    %1942 = vmatpush2.msra.mxu0 0.0
    %1943 = vmatprep.subr.mxu0 0.0
    %1944 = vmatpush2.msra.mxu0 0.0
    %1945 = vmatprep.subr.mxu0 0.0
    %1946 = vmatpush2.msra.mxu0 0.0
    %1947 = vmatprep.subr.mxu0 0.0
    %1948 = vmatpush2.msra.mxu0 0.0
    %1949 = vmatprep.subr.mxu0 0.0
    %1950 = vmatpush2.msra.mxu0 0.0
    %1951 = vmatprep.subr.mxu0 0.0
    %1952 = vmatpush2.msra.mxu0 0.0
    %1953 = vmatprep.subr.mxu0 0.0
    %1954 = vmatpush2.msra.mxu0 0.0
    %1955 = vmatprep.subr.mxu0 0.0
    %1956 = vmatpush2.msra.mxu0 0.0
    %1957 = vmatprep.subr.mxu0 0.0
    %1958 = vmatpush2.msra.mxu0 0.0
    %1959 = vmatprep.subr.mxu0 0.0
    %1960 = vmatpush2.msra.mxu0 0.0
    %1961 = vmatprep.subr.mxu0 0.0
    %1962 = vmatpush2.msra.mxu0 0.0
    %1963 = vmatprep.subr.mxu0 0.0
    %1964 = vmatpush2.msra.mxu0 0.0
    %1965 = vmatprep.subr.mxu0 0.0
    %1966 = vmatpush2.msra.mxu0 0.0
    %1967 = vmatprep.subr.mxu0 0.0
    %1968 = vmatpush2.msra.mxu0 0.0
    %1969 = vmatprep.subr.mxu0 0.0
    %1970 = vmatpush2.msra.mxu0 0.0
    %1971 = vmatprep.mubr.f32.mxu0 0.0
    %1972 = vmatmul.mubr.f32.gmra.mxu0 %v1658
    %v1973 = vpop.f32.mrf.mxu0
    %v1974 = vadd.f32 0.0, %v1973
    %v1975 = vpop.f32.mrf.mxu0
    %v1976 = vadd.f32 0.0, %v1975
    %1977 = vdwg.mxu0
    %1978 = vmatprep.subr.mxu0 %v769
    %1979 = vmatpush1.msra.mxu0 %v768
    %1980 = vmatprep.subr.mxu0 %v765
    %1981 = vmatpush1.msra.mxu0 %v764
    %1982 = vmatprep.subr.mxu0 %v761
    %1983 = vmatpush1.msra.mxu0 %v760
    %1984 = vmatprep.subr.mxu0 %v757
    %1985 = vmatpush1.msra.mxu0 %v756
    %1986 = vmatprep.subr.mxu0 %v753
    %1987 = vmatpush1.msra.mxu0 %v752
    %1988 = vmatprep.subr.mxu0 %v749
    %1989 = vmatpush1.msra.mxu0 %v748
    %1990 = vmatprep.subr.mxu0 %v745
    %1991 = vmatpush1.msra.mxu0 %v744
    %1992 = vmatprep.subr.mxu0 %v741
    %1993 = vmatpush1.msra.mxu0 %v740
    %1994 = vmatprep.subr.mxu0 %v737
    %1995 = vmatpush1.msra.mxu0 %v736
    %1996 = vmatprep.subr.mxu0 %v733
    %1997 = vmatpush1.msra.mxu0 %v732
    %1998 = vmatprep.subr.mxu0 %v729
    %1999 = vmatpush1.msra.mxu0 %v728
    %2000 = vmatprep.subr.mxu0 %v725
    %2001 = vmatpush1.msra.mxu0 %v724
    %2002 = vmatprep.subr.mxu0 %v721
    %2003 = vmatpush1.msra.mxu0 %v720
    %2004 = vmatprep.subr.mxu0 %v717
    %2005 = vmatpush1.msra.mxu0 %v716
    %2006 = vmatprep.subr.mxu0 %v713
    %2007 = vmatpush1.msra.mxu0 %v712
    %2008 = vmatprep.subr.mxu0 %v709
    %2009 = vmatpush1.msra.mxu0 %v708
    %2010 = vmatprep.subr.mxu0 0.0
    %2011 = vmatpush2.msra.mxu0 0.0
    %2012 = vmatprep.subr.mxu0 0.0
    %2013 = vmatpush2.msra.mxu0 0.0
    %2014 = vmatprep.subr.mxu0 0.0
    %2015 = vmatpush2.msra.mxu0 0.0
    %2016 = vmatprep.subr.mxu0 0.0
    %2017 = vmatpush2.msra.mxu0 0.0
    %2018 = vmatprep.subr.mxu0 0.0
    %2019 = vmatpush2.msra.mxu0 0.0
    %2020 = vmatprep.subr.mxu0 0.0
    %2021 = vmatpush2.msra.mxu0 0.0
    %2022 = vmatprep.subr.mxu0 0.0
    %2023 = vmatpush2.msra.mxu0 0.0
    %2024 = vmatprep.subr.mxu0 0.0
    %2025 = vmatpush2.msra.mxu0 0.0
    %2026 = vmatprep.subr.mxu0 0.0
    %2027 = vmatpush2.msra.mxu0 0.0
    %2028 = vmatprep.subr.mxu0 0.0
    %2029 = vmatpush2.msra.mxu0 0.0
    %2030 = vmatprep.subr.mxu0 0.0
    %2031 = vmatpush2.msra.mxu0 0.0
    %2032 = vmatprep.subr.mxu0 0.0
    %2033 = vmatpush2.msra.mxu0 0.0
    %2034 = vmatprep.subr.mxu0 0.0
    %2035 = vmatpush2.msra.mxu0 0.0
    %2036 = vmatprep.subr.mxu0 0.0
    %2037 = vmatpush2.msra.mxu0 0.0
    %2038 = vmatprep.subr.mxu0 0.0
    %2039 = vmatpush2.msra.mxu0 0.0
    %2040 = vmatprep.subr.mxu0 0.0
    %2041 = vmatpush2.msra.mxu0 0.0
    %2042 = vmatprep.mubr.f32.mxu0 0.0
    %2043 = vmatmul.mubr.f32.gmra.mxu0 %v1835
    %v2044 = vpop.f32.mrf.mxu0
    %v2045 = vadd.f32 %v1903, %v2044
    %v2046 = vpop.f32.mrf.mxu0
    %v2047 = vadd.f32 %v1905, %v2046
    %2048 = vdwg.mxu0
    %2049 = vmatprep.subr.mxu0 %v771
    %2050 = vmatpush1.msra.mxu0 %v770
    %2051 = vmatprep.subr.mxu0 %v767
    %2052 = vmatpush1.msra.mxu0 %v766
    %2053 = vmatprep.subr.mxu0 %v763
    %2054 = vmatpush1.msra.mxu0 %v762
    %2055 = vmatprep.subr.mxu0 %v759
    %2056 = vmatpush1.msra.mxu0 %v758
    %2057 = vmatprep.subr.mxu0 %v755
    %2058 = vmatpush1.msra.mxu0 %v754
    %2059 = vmatprep.subr.mxu0 %v751
    %2060 = vmatpush1.msra.mxu0 %v750
    %2061 = vmatprep.subr.mxu0 %v747
    %2062 = vmatpush1.msra.mxu0 %v746
    %2063 = vmatprep.subr.mxu0 %v743
    %2064 = vmatpush1.msra.mxu0 %v742
    %2065 = vmatprep.subr.mxu0 %v739
    %2066 = vmatpush1.msra.mxu0 %v738
    %2067 = vmatprep.subr.mxu0 %v735
    %2068 = vmatpush1.msra.mxu0 %v734
    %2069 = vmatprep.subr.mxu0 %v731
    %2070 = vmatpush1.msra.mxu0 %v730
    %2071 = vmatprep.subr.mxu0 %v727
    %2072 = vmatpush1.msra.mxu0 %v726
    %2073 = vmatprep.subr.mxu0 %v723
    %2074 = vmatpush1.msra.mxu0 %v722
    %2075 = vmatprep.subr.mxu0 %v719
    %2076 = vmatpush1.msra.mxu0 %v718
    %2077 = vmatprep.subr.mxu0 %v715
    %2078 = vmatpush1.msra.mxu0 %v714
    %2079 = vmatprep.subr.mxu0 %v711
    %2080 = vmatpush1.msra.mxu0 %v710
    %2081 = vmatprep.subr.mxu0 0.0
    %2082 = vmatpush2.msra.mxu0 0.0
    %2083 = vmatprep.subr.mxu0 0.0
    %2084 = vmatpush2.msra.mxu0 0.0
    %2085 = vmatprep.subr.mxu0 0.0
    %2086 = vmatpush2.msra.mxu0 0.0
    %2087 = vmatprep.subr.mxu0 0.0
    %2088 = vmatpush2.msra.mxu0 0.0
    %2089 = vmatprep.subr.mxu0 0.0
    %2090 = vmatpush2.msra.mxu0 0.0
    %2091 = vmatprep.subr.mxu0 0.0
    %2092 = vmatpush2.msra.mxu0 0.0
    %2093 = vmatprep.subr.mxu0 0.0
    %2094 = vmatpush2.msra.mxu0 0.0
    %2095 = vmatprep.subr.mxu0 0.0
    %2096 = vmatpush2.msra.mxu0 0.0
    %2097 = vmatprep.subr.mxu0 0.0
    %2098 = vmatpush2.msra.mxu0 0.0
    %2099 = vmatprep.subr.mxu0 0.0
    %2100 = vmatpush2.msra.mxu0 0.0
    %2101 = vmatprep.subr.mxu0 0.0
    %2102 = vmatpush2.msra.mxu0 0.0
    %2103 = vmatprep.subr.mxu0 0.0
    %2104 = vmatpush2.msra.mxu0 0.0
    %2105 = vmatprep.subr.mxu0 0.0
    %2106 = vmatpush2.msra.mxu0 0.0
    %2107 = vmatprep.subr.mxu0 0.0
    %2108 = vmatpush2.msra.mxu0 0.0
    %2109 = vmatprep.subr.mxu0 0.0
    %2110 = vmatpush2.msra.mxu0 0.0
    %2111 = vmatprep.subr.mxu0 0.0
    %2112 = vmatpush2.msra.mxu0 0.0
    %2113 = vmatprep.mubr.f32.mxu0 0.0
    %2114 = vmatmul.mubr.f32.gmra.mxu0 %v1835
    %v2115 = vpop.f32.mrf.mxu0
    %v2116 = vadd.f32 %v1974, %v2115
    %v2117 = vpop.f32.mrf.mxu0
    %v2118 = vadd.f32 %v1976, %v2117
    %2119 = vdwg.mxu0
    %v2120 = vadd.f32 %v2045, %v1125
    %v2121 = vadd.f32 %v2047, %v1129
    %v2122 = vadd.f32 %v2116, %v1133
    %v2123 = vadd.f32 %v2118, %v1137
    %v2124 = vxor.u32 %v2120, 2147483648
    %v2125 = vxor.u32 %v2121, 2147483648
    %v2126 = vxor.u32 %v2122, 2147483648
    %v2127 = vmul.f32 %v2124, 1.442695
    %v2128 = vpow.pop %v2127
    %v2129 = vmul.f32 %v2125, 1.442695
    %v2130 = vpow.pop %v2129
    %v2131 = vmul.f32 %v2126, 1.442695
    %v2132 = vpow.pop %v2131
    %v2133 = vadd.f32 %v2128, 1.0
    %v2134 = vadd.f32 %v2130, 1.0
    %v2135 = vadd.f32 %v2132, 1.0
    %v2136 = vrcp.pop %v2133
    %v2137 = vmul.f32 1.0, %v2136
    %v2138 = vrcp.pop %v2134
    %v2139 = vmul.f32 1.0, %v2138
    %v2140 = vrcp.pop %v2135
    %v2141 = vmul.f32 1.0, %v2140
    %v2142 = vtanh.pop %v2123
    %v2143 = vmul.f32 %v2139, %v1656
    %v2144 = vmul.f32 %v2137, %v2142
    %v2145 = vadd.f32 %v2143, %v2144
    %v2146 = vtanh.pop %v2145
    %v2147 = vmul.f32 %v2141, %v2146
    %s2148 = smul.u32 3, 4
    %s2149 = smul.addr %s2148, 8
    %s2150 = scalar_lea.vmem [#allocation2], %s2149
    %v2151 = vld [vmem:[%s2150] sm:$0xff]
    %v2152 = vld [vmem:[%s2150 + $0x8] sm:$0xff]
    %v2153 = vld [vmem:[%s2150 + $0x10] sm:$0xff]
    %v2154 = vld [vmem:[%s2150 + $0x18] sm:$0xff]
    %2155 = vmatprep.subr.mxu0 %v535
    %2156 = vmatpush1.msra.mxu0 %v534
    %2157 = vmatprep.subr.mxu0 %v531
    %2158 = vmatpush1.msra.mxu0 %v530
    %2159 = vmatprep.subr.mxu0 %v527
    %2160 = vmatpush1.msra.mxu0 %v526
    %2161 = vmatprep.subr.mxu0 %v523
    %2162 = vmatpush1.msra.mxu0 %v522
    %2163 = vmatprep.subr.mxu0 %v519
    %2164 = vmatpush1.msra.mxu0 %v518
    %2165 = vmatprep.subr.mxu0 %v515
    %2166 = vmatpush1.msra.mxu0 %v514
    %2167 = vmatprep.subr.mxu0 %v511
    %2168 = vmatpush1.msra.mxu0 %v510
    %2169 = vmatprep.subr.mxu0 %v507
    %2170 = vmatpush1.msra.mxu0 %v506
    %2171 = vmatprep.subr.mxu0 %v503
    %2172 = vmatpush1.msra.mxu0 %v502
    %2173 = vmatprep.subr.mxu0 %v499
    %2174 = vmatpush1.msra.mxu0 %v498
    %2175 = vmatprep.subr.mxu0 %v495
    %2176 = vmatpush1.msra.mxu0 %v494
    %2177 = vmatprep.subr.mxu0 %v491
    %2178 = vmatpush1.msra.mxu0 %v490
    %2179 = vmatprep.subr.mxu0 %v487
    %2180 = vmatpush1.msra.mxu0 %v486
    %2181 = vmatprep.subr.mxu0 %v483
    %2182 = vmatpush1.msra.mxu0 %v482
    %2183 = vmatprep.subr.mxu0 %v479
    %2184 = vmatpush1.msra.mxu0 %v478
    %2185 = vmatprep.subr.mxu0 %v475
    %2186 = vmatpush1.msra.mxu0 %v474
    %2187 = vmatprep.subr.mxu0 0.0
    %2188 = vmatpush2.msra.mxu0 0.0
    %2189 = vmatprep.subr.mxu0 0.0
    %2190 = vmatpush2.msra.mxu0 0.0
    %2191 = vmatprep.subr.mxu0 0.0
    %2192 = vmatpush2.msra.mxu0 0.0
    %2193 = vmatprep.subr.mxu0 0.0
    %2194 = vmatpush2.msra.mxu0 0.0
    %2195 = vmatprep.subr.mxu0 0.0
    %2196 = vmatpush2.msra.mxu0 0.0
    %2197 = vmatprep.subr.mxu0 0.0
    %2198 = vmatpush2.msra.mxu0 0.0
    %2199 = vmatprep.subr.mxu0 0.0
    %2200 = vmatpush2.msra.mxu0 0.0
    %2201 = vmatprep.subr.mxu0 0.0
    %2202 = vmatpush2.msra.mxu0 0.0
    %2203 = vmatprep.subr.mxu0 0.0
    %2204 = vmatpush2.msra.mxu0 0.0
    %2205 = vmatprep.subr.mxu0 0.0
    %2206 = vmatpush2.msra.mxu0 0.0
    %2207 = vmatprep.subr.mxu0 0.0
    %2208 = vmatpush2.msra.mxu0 0.0
    %2209 = vmatprep.subr.mxu0 0.0
    %2210 = vmatpush2.msra.mxu0 0.0
    %2211 = vmatprep.subr.mxu0 0.0
    %2212 = vmatpush2.msra.mxu0 0.0
    %2213 = vmatprep.subr.mxu0 0.0
    %2214 = vmatpush2.msra.mxu0 0.0
    %2215 = vmatprep.subr.mxu0 0.0
    %2216 = vmatpush2.msra.mxu0 0.0
    %2217 = vmatprep.subr.mxu0 0.0
    %2218 = vmatpush2.msra.mxu0 0.0
    %2219 = vmatprep.mubr.f32.mxu0 0.0
    %2220 = vmatmul.mubr.f32.gmra.mxu0 %v1835
    %v2221 = vpop.f32.mrf.mxu0
    %v2222 = vadd.f32 0.0, %v2221
    %v2223 = vpop.f32.mrf.mxu0
    %v2224 = vadd.f32 0.0, %v2223
    %2225 = vdwg.mxu0
    %2226 = vmatprep.subr.mxu0 %v537
    %2227 = vmatpush1.msra.mxu0 %v536
    %2228 = vmatprep.subr.mxu0 %v533
    %2229 = vmatpush1.msra.mxu0 %v532
    %2230 = vmatprep.subr.mxu0 %v529
    %2231 = vmatpush1.msra.mxu0 %v528
    %2232 = vmatprep.subr.mxu0 %v525
    %2233 = vmatpush1.msra.mxu0 %v524
    %2234 = vmatprep.subr.mxu0 %v521
    %2235 = vmatpush1.msra.mxu0 %v520
    %2236 = vmatprep.subr.mxu0 %v517
    %2237 = vmatpush1.msra.mxu0 %v516
    %2238 = vmatprep.subr.mxu0 %v513
    %2239 = vmatpush1.msra.mxu0 %v512
    %2240 = vmatprep.subr.mxu0 %v509
    %2241 = vmatpush1.msra.mxu0 %v508
    %2242 = vmatprep.subr.mxu0 %v505
    %2243 = vmatpush1.msra.mxu0 %v504
    %2244 = vmatprep.subr.mxu0 %v501
    %2245 = vmatpush1.msra.mxu0 %v500
    %2246 = vmatprep.subr.mxu0 %v497
    %2247 = vmatpush1.msra.mxu0 %v496
    %2248 = vmatprep.subr.mxu0 %v493
    %2249 = vmatpush1.msra.mxu0 %v492
    %2250 = vmatprep.subr.mxu0 %v489
    %2251 = vmatpush1.msra.mxu0 %v488
    %2252 = vmatprep.subr.mxu0 %v485
    %2253 = vmatpush1.msra.mxu0 %v484
    %2254 = vmatprep.subr.mxu0 %v481
    %2255 = vmatpush1.msra.mxu0 %v480
    %2256 = vmatprep.subr.mxu0 %v477
    %2257 = vmatpush1.msra.mxu0 %v476
    %2258 = vmatprep.subr.mxu0 0.0
    %2259 = vmatpush2.msra.mxu0 0.0
    %2260 = vmatprep.subr.mxu0 0.0
    %2261 = vmatpush2.msra.mxu0 0.0
    %2262 = vmatprep.subr.mxu0 0.0
    %2263 = vmatpush2.msra.mxu0 0.0
    %2264 = vmatprep.subr.mxu0 0.0
    %2265 = vmatpush2.msra.mxu0 0.0
    %2266 = vmatprep.subr.mxu0 0.0
    %2267 = vmatpush2.msra.mxu0 0.0
    %2268 = vmatprep.subr.mxu0 0.0
    %2269 = vmatpush2.msra.mxu0 0.0
    %2270 = vmatprep.subr.mxu0 0.0
    %2271 = vmatpush2.msra.mxu0 0.0
    %2272 = vmatprep.subr.mxu0 0.0
    %2273 = vmatpush2.msra.mxu0 0.0
    %2274 = vmatprep.subr.mxu0 0.0
    %2275 = vmatpush2.msra.mxu0 0.0
    %2276 = vmatprep.subr.mxu0 0.0
    %2277 = vmatpush2.msra.mxu0 0.0
    %2278 = vmatprep.subr.mxu0 0.0
    %2279 = vmatpush2.msra.mxu0 0.0
    %2280 = vmatprep.subr.mxu0 0.0
    %2281 = vmatpush2.msra.mxu0 0.0
    %2282 = vmatprep.subr.mxu0 0.0
    %2283 = vmatpush2.msra.mxu0 0.0
    %2284 = vmatprep.subr.mxu0 0.0
    %2285 = vmatpush2.msra.mxu0 0.0
    %2286 = vmatprep.subr.mxu0 0.0
    %2287 = vmatpush2.msra.mxu0 0.0
    %2288 = vmatprep.subr.mxu0 0.0
    %2289 = vmatpush2.msra.mxu0 0.0
    %2290 = vmatprep.mubr.f32.mxu0 0.0
    %2291 = vmatmul.mubr.f32.gmra.mxu0 %v1835
    %v2292 = vpop.f32.mrf.mxu0
    %v2293 = vadd.f32 0.0, %v2292
    %v2294 = vpop.f32.mrf.mxu0
    %v2295 = vadd.f32 0.0, %v2294
    %2296 = vdwg.mxu0
    %v2297 = vadd.f32 %v2151, %v2222
    %v2298 = vadd.f32 %v2152, %v2224
    %v2299 = vadd.f32 %v2153, %v2293
    %v2300 = vadd.f32 %v2154, %v2295
    %v2301 = vxor.u32 %v2297, 2147483648
    %v2302 = vxor.u32 %v2298, 2147483648
    %v2303 = vxor.u32 %v2299, 2147483648
    %v2304 = vmul.f32 %v2301, 1.442695
    %v2305 = vpow.pop %v2304
    %v2306 = vmul.f32 %v2302, 1.442695
    %v2307 = vpow.pop %v2306
    %v2308 = vmul.f32 %v2303, 1.442695
    %v2309 = vpow.pop %v2308
    %v2310 = vadd.f32 %v2305, 1.0
    %v2311 = vadd.f32 %v2307, 1.0
    %v2312 = vadd.f32 %v2309, 1.0
    %v2313 = vrcp.pop %v2310
    %v2314 = vmul.f32 1.0, %v2313
    %v2315 = vrcp.pop %v2311
    %v2316 = vmul.f32 1.0, %v2315
    %v2317 = vrcp.pop %v2312
    %v2318 = vmul.f32 1.0, %v2317
    %v2319 = vtanh.pop %v2300
    %v2320 = vmul.f32 %v2316, %v1833
    %v2321 = vmul.f32 %v2314, %v2319
    %v2322 = vadd.f32 %v2320, %v2321
    %v2323 = vtanh.pop %v2322
    %v2324 = vmul.f32 %v2318, %v2323
    %2325 = vmatprep.subr.mxu0 %v833
    %2326 = vmatpush1.msra.mxu0 %v832
    %2327 = vmatprep.subr.mxu0 %v829
    %2328 = vmatpush1.msra.mxu0 %v828
    %2329 = vmatprep.subr.mxu0 %v825
    %2330 = vmatpush1.msra.mxu0 %v824
    %2331 = vmatprep.subr.mxu0 %v821
    %2332 = vmatpush1.msra.mxu0 %v820
    %2333 = vmatprep.subr.mxu0 %v817
    %2334 = vmatpush1.msra.mxu0 %v816
    %2335 = vmatprep.subr.mxu0 %v813
    %2336 = vmatpush1.msra.mxu0 %v812
    %2337 = vmatprep.subr.mxu0 %v809
    %2338 = vmatpush1.msra.mxu0 %v808
    %2339 = vmatprep.subr.mxu0 %v805
    %2340 = vmatpush1.msra.mxu0 %v804
    %2341 = vmatprep.subr.mxu0 %v801
    %2342 = vmatpush1.msra.mxu0 %v800
    %2343 = vmatprep.subr.mxu0 %v797
    %2344 = vmatpush1.msra.mxu0 %v796
    %2345 = vmatprep.subr.mxu0 %v793
    %2346 = vmatpush1.msra.mxu0 %v792
    %2347 = vmatprep.subr.mxu0 %v789
    %2348 = vmatpush1.msra.mxu0 %v788
    %2349 = vmatprep.subr.mxu0 %v785
    %2350 = vmatpush1.msra.mxu0 %v784
    %2351 = vmatprep.subr.mxu0 %v781
    %2352 = vmatpush1.msra.mxu0 %v780
    %2353 = vmatprep.subr.mxu0 %v777
    %2354 = vmatpush1.msra.mxu0 %v776
    %2355 = vmatprep.subr.mxu0 %v773
    %2356 = vmatpush1.msra.mxu0 %v772
    %2357 = vmatprep.subr.mxu0 0.0
    %2358 = vmatpush2.msra.mxu0 0.0
    %2359 = vmatprep.subr.mxu0 0.0
    %2360 = vmatpush2.msra.mxu0 0.0
    %2361 = vmatprep.subr.mxu0 0.0
    %2362 = vmatpush2.msra.mxu0 0.0
    %2363 = vmatprep.subr.mxu0 0.0
    %2364 = vmatpush2.msra.mxu0 0.0
    %2365 = vmatprep.subr.mxu0 0.0
    %2366 = vmatpush2.msra.mxu0 0.0
    %2367 = vmatprep.subr.mxu0 0.0
    %2368 = vmatpush2.msra.mxu0 0.0
    %2369 = vmatprep.subr.mxu0 0.0
    %2370 = vmatpush2.msra.mxu0 0.0
    %2371 = vmatprep.subr.mxu0 0.0
    %2372 = vmatpush2.msra.mxu0 0.0
    %2373 = vmatprep.subr.mxu0 0.0
    %2374 = vmatpush2.msra.mxu0 0.0
    %2375 = vmatprep.subr.mxu0 0.0
    %2376 = vmatpush2.msra.mxu0 0.0
    %2377 = vmatprep.subr.mxu0 0.0
    %2378 = vmatpush2.msra.mxu0 0.0
    %2379 = vmatprep.subr.mxu0 0.0
    %2380 = vmatpush2.msra.mxu0 0.0
    %2381 = vmatprep.subr.mxu0 0.0
    %2382 = vmatpush2.msra.mxu0 0.0
    %2383 = vmatprep.subr.mxu0 0.0
    %2384 = vmatpush2.msra.mxu0 0.0
    %2385 = vmatprep.subr.mxu0 0.0
    %2386 = vmatpush2.msra.mxu0 0.0
    %2387 = vmatprep.subr.mxu0 0.0
    %2388 = vmatpush2.msra.mxu0 0.0
    %2389 = vmatprep.mubr.f32.mxu0 0.0
    %2390 = vmatmul.mubr.f32.gmra.mxu0 %v2147
    %v2391 = vpop.f32.mrf.mxu0
    %v2392 = vadd.f32 0.0, %v2391
    %v2393 = vpop.f32.mrf.mxu0
    %v2394 = vadd.f32 0.0, %v2393
    %2395 = vdwg.mxu0
    %2396 = vmatprep.subr.mxu0 %v835
    %2397 = vmatpush1.msra.mxu0 %v834
    %2398 = vmatprep.subr.mxu0 %v831
    %2399 = vmatpush1.msra.mxu0 %v830
    %2400 = vmatprep.subr.mxu0 %v827
    %2401 = vmatpush1.msra.mxu0 %v826
    %2402 = vmatprep.subr.mxu0 %v823
    %2403 = vmatpush1.msra.mxu0 %v822
    %2404 = vmatprep.subr.mxu0 %v819
    %2405 = vmatpush1.msra.mxu0 %v818
    %2406 = vmatprep.subr.mxu0 %v815
    %2407 = vmatpush1.msra.mxu0 %v814
    %2408 = vmatprep.subr.mxu0 %v811
    %2409 = vmatpush1.msra.mxu0 %v810
    %2410 = vmatprep.subr.mxu0 %v807
    %2411 = vmatpush1.msra.mxu0 %v806
    %2412 = vmatprep.subr.mxu0 %v803
    %2413 = vmatpush1.msra.mxu0 %v802
    %2414 = vmatprep.subr.mxu0 %v799
    %2415 = vmatpush1.msra.mxu0 %v798
    %2416 = vmatprep.subr.mxu0 %v795
    %2417 = vmatpush1.msra.mxu0 %v794
    %2418 = vmatprep.subr.mxu0 %v791
    %2419 = vmatpush1.msra.mxu0 %v790
    %2420 = vmatprep.subr.mxu0 %v787
    %2421 = vmatpush1.msra.mxu0 %v786
    %2422 = vmatprep.subr.mxu0 %v783
    %2423 = vmatpush1.msra.mxu0 %v782
    %2424 = vmatprep.subr.mxu0 %v779
    %2425 = vmatpush1.msra.mxu0 %v778
    %2426 = vmatprep.subr.mxu0 %v775
    %2427 = vmatpush1.msra.mxu0 %v774
    %2428 = vmatprep.subr.mxu0 0.0
    %2429 = vmatpush2.msra.mxu0 0.0
    %2430 = vmatprep.subr.mxu0 0.0
    %2431 = vmatpush2.msra.mxu0 0.0
    %2432 = vmatprep.subr.mxu0 0.0
    %2433 = vmatpush2.msra.mxu0 0.0
    %2434 = vmatprep.subr.mxu0 0.0
    %2435 = vmatpush2.msra.mxu0 0.0
    %2436 = vmatprep.subr.mxu0 0.0
    %2437 = vmatpush2.msra.mxu0 0.0
    %2438 = vmatprep.subr.mxu0 0.0
    %2439 = vmatpush2.msra.mxu0 0.0
    %2440 = vmatprep.subr.mxu0 0.0
    %2441 = vmatpush2.msra.mxu0 0.0
    %2442 = vmatprep.subr.mxu0 0.0
    %2443 = vmatpush2.msra.mxu0 0.0
    %2444 = vmatprep.subr.mxu0 0.0
    %2445 = vmatpush2.msra.mxu0 0.0
    %2446 = vmatprep.subr.mxu0 0.0
    %2447 = vmatpush2.msra.mxu0 0.0
    %2448 = vmatprep.subr.mxu0 0.0
    %2449 = vmatpush2.msra.mxu0 0.0
    %2450 = vmatprep.subr.mxu0 0.0
    %2451 = vmatpush2.msra.mxu0 0.0
    %2452 = vmatprep.subr.mxu0 0.0
    %2453 = vmatpush2.msra.mxu0 0.0
    %2454 = vmatprep.subr.mxu0 0.0
    %2455 = vmatpush2.msra.mxu0 0.0
    %2456 = vmatprep.subr.mxu0 0.0
    %2457 = vmatpush2.msra.mxu0 0.0
    %2458 = vmatprep.subr.mxu0 0.0
    %2459 = vmatpush2.msra.mxu0 0.0
    %2460 = vmatprep.mubr.f32.mxu0 0.0
    %2461 = vmatmul.mubr.f32.gmra.mxu0 %v2147
    %v2462 = vpop.f32.mrf.mxu0
    %v2463 = vadd.f32 0.0, %v2462
    %v2464 = vpop.f32.mrf.mxu0
    %v2465 = vadd.f32 0.0, %v2464
    %2466 = vdwg.mxu0
    %2467 = vmatprep.subr.mxu0 %v769
    %2468 = vmatpush1.msra.mxu0 %v768
    %2469 = vmatprep.subr.mxu0 %v765
    %2470 = vmatpush1.msra.mxu0 %v764
    %2471 = vmatprep.subr.mxu0 %v761
    %2472 = vmatpush1.msra.mxu0 %v760
    %2473 = vmatprep.subr.mxu0 %v757
    %2474 = vmatpush1.msra.mxu0 %v756
    %2475 = vmatprep.subr.mxu0 %v753
    %2476 = vmatpush1.msra.mxu0 %v752
    %2477 = vmatprep.subr.mxu0 %v749
    %2478 = vmatpush1.msra.mxu0 %v748
    %2479 = vmatprep.subr.mxu0 %v745
    %2480 = vmatpush1.msra.mxu0 %v744
    %2481 = vmatprep.subr.mxu0 %v741
    %2482 = vmatpush1.msra.mxu0 %v740
    %2483 = vmatprep.subr.mxu0 %v737
    %2484 = vmatpush1.msra.mxu0 %v736
    %2485 = vmatprep.subr.mxu0 %v733
    %2486 = vmatpush1.msra.mxu0 %v732
    %2487 = vmatprep.subr.mxu0 %v729
    %2488 = vmatpush1.msra.mxu0 %v728
    %2489 = vmatprep.subr.mxu0 %v725
    %2490 = vmatpush1.msra.mxu0 %v724
    %2491 = vmatprep.subr.mxu0 %v721
    %2492 = vmatpush1.msra.mxu0 %v720
    %2493 = vmatprep.subr.mxu0 %v717
    %2494 = vmatpush1.msra.mxu0 %v716
    %2495 = vmatprep.subr.mxu0 %v713
    %2496 = vmatpush1.msra.mxu0 %v712
    %2497 = vmatprep.subr.mxu0 %v709
    %2498 = vmatpush1.msra.mxu0 %v708
    %2499 = vmatprep.subr.mxu0 0.0
    %2500 = vmatpush2.msra.mxu0 0.0
    %2501 = vmatprep.subr.mxu0 0.0
    %2502 = vmatpush2.msra.mxu0 0.0
    %2503 = vmatprep.subr.mxu0 0.0
    %2504 = vmatpush2.msra.mxu0 0.0
    %2505 = vmatprep.subr.mxu0 0.0
    %2506 = vmatpush2.msra.mxu0 0.0
    %2507 = vmatprep.subr.mxu0 0.0
    %2508 = vmatpush2.msra.mxu0 0.0
    %2509 = vmatprep.subr.mxu0 0.0
    %2510 = vmatpush2.msra.mxu0 0.0
    %2511 = vmatprep.subr.mxu0 0.0
    %2512 = vmatpush2.msra.mxu0 0.0
    %2513 = vmatprep.subr.mxu0 0.0
    %2514 = vmatpush2.msra.mxu0 0.0
    %2515 = vmatprep.subr.mxu0 0.0
    %2516 = vmatpush2.msra.mxu0 0.0
    %2517 = vmatprep.subr.mxu0 0.0
    %2518 = vmatpush2.msra.mxu0 0.0
    %2519 = vmatprep.subr.mxu0 0.0
    %2520 = vmatpush2.msra.mxu0 0.0
    %2521 = vmatprep.subr.mxu0 0.0
    %2522 = vmatpush2.msra.mxu0 0.0
    %2523 = vmatprep.subr.mxu0 0.0
    %2524 = vmatpush2.msra.mxu0 0.0
    %2525 = vmatprep.subr.mxu0 0.0
    %2526 = vmatpush2.msra.mxu0 0.0
    %2527 = vmatprep.subr.mxu0 0.0
    %2528 = vmatpush2.msra.mxu0 0.0
    %2529 = vmatprep.subr.mxu0 0.0
    %2530 = vmatpush2.msra.mxu0 0.0
    %2531 = vmatprep.mubr.f32.mxu0 0.0
    %2532 = vmatmul.mubr.f32.gmra.mxu0 %v2324
    %v2533 = vpop.f32.mrf.mxu0
    %v2534 = vadd.f32 %v2392, %v2533
    %v2535 = vpop.f32.mrf.mxu0
    %v2536 = vadd.f32 %v2394, %v2535
    %2537 = vdwg.mxu0
    %2538 = vmatprep.subr.mxu0 %v771
    %2539 = vmatpush1.msra.mxu0 %v770
    %2540 = vmatprep.subr.mxu0 %v767
    %2541 = vmatpush1.msra.mxu0 %v766
    %2542 = vmatprep.subr.mxu0 %v763
    %2543 = vmatpush1.msra.mxu0 %v762
    %2544 = vmatprep.subr.mxu0 %v759
    %2545 = vmatpush1.msra.mxu0 %v758
    %2546 = vmatprep.subr.mxu0 %v755
    %2547 = vmatpush1.msra.mxu0 %v754
    %2548 = vmatprep.subr.mxu0 %v751
    %2549 = vmatpush1.msra.mxu0 %v750
    %2550 = vmatprep.subr.mxu0 %v747
    %2551 = vmatpush1.msra.mxu0 %v746
    %2552 = vmatprep.subr.mxu0 %v743
    %2553 = vmatpush1.msra.mxu0 %v742
    %2554 = vmatprep.subr.mxu0 %v739
    %2555 = vmatpush1.msra.mxu0 %v738
    %2556 = vmatprep.subr.mxu0 %v735
    %2557 = vmatpush1.msra.mxu0 %v734
    %2558 = vmatprep.subr.mxu0 %v731
    %2559 = vmatpush1.msra.mxu0 %v730
    %2560 = vmatprep.subr.mxu0 %v727
    %2561 = vmatpush1.msra.mxu0 %v726
    %2562 = vmatprep.subr.mxu0 %v723
    %2563 = vmatpush1.msra.mxu0 %v722
    %2564 = vmatprep.subr.mxu0 %v719
    %2565 = vmatpush1.msra.mxu0 %v718
    %2566 = vmatprep.subr.mxu0 %v715
    %2567 = vmatpush1.msra.mxu0 %v714
    %2568 = vmatprep.subr.mxu0 %v711
    %2569 = vmatpush1.msra.mxu0 %v710
    %2570 = vmatprep.subr.mxu0 0.0
    %2571 = vmatpush2.msra.mxu0 0.0
    %2572 = vmatprep.subr.mxu0 0.0
    %2573 = vmatpush2.msra.mxu0 0.0
    %2574 = vmatprep.subr.mxu0 0.0
    %2575 = vmatpush2.msra.mxu0 0.0
    %2576 = vmatprep.subr.mxu0 0.0
    %2577 = vmatpush2.msra.mxu0 0.0
    %2578 = vmatprep.subr.mxu0 0.0
    %2579 = vmatpush2.msra.mxu0 0.0
    %2580 = vmatprep.subr.mxu0 0.0
    %2581 = vmatpush2.msra.mxu0 0.0
    %2582 = vmatprep.subr.mxu0 0.0
    %2583 = vmatpush2.msra.mxu0 0.0
    %2584 = vmatprep.subr.mxu0 0.0
    %2585 = vmatpush2.msra.mxu0 0.0
    %2586 = vmatprep.subr.mxu0 0.0
    %2587 = vmatpush2.msra.mxu0 0.0
    %2588 = vmatprep.subr.mxu0 0.0
    %2589 = vmatpush2.msra.mxu0 0.0
    %2590 = vmatprep.subr.mxu0 0.0
    %2591 = vmatpush2.msra.mxu0 0.0
    %2592 = vmatprep.subr.mxu0 0.0
    %2593 = vmatpush2.msra.mxu0 0.0
    %2594 = vmatprep.subr.mxu0 0.0
    %2595 = vmatpush2.msra.mxu0 0.0
    %2596 = vmatprep.subr.mxu0 0.0
    %2597 = vmatpush2.msra.mxu0 0.0
    %2598 = vmatprep.subr.mxu0 0.0
    %2599 = vmatpush2.msra.mxu0 0.0
    %2600 = vmatprep.subr.mxu0 0.0
    %2601 = vmatpush2.msra.mxu0 0.0
    %2602 = vmatprep.mubr.f32.mxu0 0.0
    %2603 = vmatmul.mubr.f32.gmra.mxu0 %v2324
    %v2604 = vpop.f32.mrf.mxu0
    %v2605 = vadd.f32 %v2463, %v2604
    %v2606 = vpop.f32.mrf.mxu0
    %v2607 = vadd.f32 %v2465, %v2606
    %2608 = vdwg.mxu0
    %v2609 = vadd.f32 %v2534, %v1125
    %v2610 = vadd.f32 %v2536, %v1129
    %v2611 = vadd.f32 %v2605, %v1133
    %v2612 = vadd.f32 %v2607, %v1137
    %v2613 = vxor.u32 %v2609, 2147483648
    %v2614 = vxor.u32 %v2610, 2147483648
    %v2615 = vxor.u32 %v2611, 2147483648
    %v2616 = vmul.f32 %v2613, 1.442695
    %v2617 = vpow.pop %v2616
    %v2618 = vmul.f32 %v2614, 1.442695
    %v2619 = vpow.pop %v2618
    %v2620 = vmul.f32 %v2615, 1.442695
    %v2621 = vpow.pop %v2620
    %v2622 = vadd.f32 %v2617, 1.0
    %v2623 = vadd.f32 %v2619, 1.0
    %v2624 = vadd.f32 %v2621, 1.0
    %v2625 = vrcp.pop %v2622
    %v2626 = vmul.f32 1.0, %v2625
    %v2627 = vrcp.pop %v2623
    %v2628 = vmul.f32 1.0, %v2627
    %v2629 = vrcp.pop %v2624
    %v2630 = vmul.f32 1.0, %v2629
    %v2631 = vtanh.pop %v2612
    %v2632 = vmul.f32 %v2628, %v2145
    %v2633 = vmul.f32 %v2626, %v2631
    %v2634 = vadd.f32 %v2632, %v2633
    %v2635 = vtanh.pop %v2634
    %v2636 = vmul.f32 %v2630, %v2635
    %s2637 = smul.u32 4, 4
    %s2638 = smul.addr %s2637, 8
    %s2639 = scalar_lea.vmem [#allocation2], %s2638
    %v2640 = vld [vmem:[%s2639] sm:$0xff]
    %v2641 = vld [vmem:[%s2639 + $0x8] sm:$0xff]
    %v2642 = vld [vmem:[%s2639 + $0x10] sm:$0xff]
    %v2643 = vld [vmem:[%s2639 + $0x18] sm:$0xff]
    %2644 = vmatprep.subr.mxu0 %v535
    %2645 = vmatpush1.msra.mxu0 %v534
    %2646 = vmatprep.subr.mxu0 %v531
    %2647 = vmatpush1.msra.mxu0 %v530
    %2648 = vmatprep.subr.mxu0 %v527
    %2649 = vmatpush1.msra.mxu0 %v526
    %2650 = vmatprep.subr.mxu0 %v523
    %2651 = vmatpush1.msra.mxu0 %v522
    %2652 = vmatprep.subr.mxu0 %v519
    %2653 = vmatpush1.msra.mxu0 %v518
    %2654 = vmatprep.subr.mxu0 %v515
    %2655 = vmatpush1.msra.mxu0 %v514
    %2656 = vmatprep.subr.mxu0 %v511
    %2657 = vmatpush1.msra.mxu0 %v510
    %2658 = vmatprep.subr.mxu0 %v507
    %2659 = vmatpush1.msra.mxu0 %v506
    %2660 = vmatprep.subr.mxu0 %v503
    %2661 = vmatpush1.msra.mxu0 %v502
    %2662 = vmatprep.subr.mxu0 %v499
    %2663 = vmatpush1.msra.mxu0 %v498
    %2664 = vmatprep.subr.mxu0 %v495
    %2665 = vmatpush1.msra.mxu0 %v494
    %2666 = vmatprep.subr.mxu0 %v491
    %2667 = vmatpush1.msra.mxu0 %v490
    %2668 = vmatprep.subr.mxu0 %v487
    %2669 = vmatpush1.msra.mxu0 %v486
    %2670 = vmatprep.subr.mxu0 %v483
    %2671 = vmatpush1.msra.mxu0 %v482
    %2672 = vmatprep.subr.mxu0 %v479
    %2673 = vmatpush1.msra.mxu0 %v478
    %2674 = vmatprep.subr.mxu0 %v475
    %2675 = vmatpush1.msra.mxu0 %v474
    %2676 = vmatprep.subr.mxu0 0.0
    %2677 = vmatpush2.msra.mxu0 0.0
    %2678 = vmatprep.subr.mxu0 0.0
    %2679 = vmatpush2.msra.mxu0 0.0
    %2680 = vmatprep.subr.mxu0 0.0
    %2681 = vmatpush2.msra.mxu0 0.0
    %2682 = vmatprep.subr.mxu0 0.0
    %2683 = vmatpush2.msra.mxu0 0.0
    %2684 = vmatprep.subr.mxu0 0.0
    %2685 = vmatpush2.msra.mxu0 0.0
    %2686 = vmatprep.subr.mxu0 0.0
    %2687 = vmatpush2.msra.mxu0 0.0
    %2688 = vmatprep.subr.mxu0 0.0
    %2689 = vmatpush2.msra.mxu0 0.0
    %2690 = vmatprep.subr.mxu0 0.0
    %2691 = vmatpush2.msra.mxu0 0.0
    %2692 = vmatprep.subr.mxu0 0.0
    %2693 = vmatpush2.msra.mxu0 0.0
    %2694 = vmatprep.subr.mxu0 0.0
    %2695 = vmatpush2.msra.mxu0 0.0
    %2696 = vmatprep.subr.mxu0 0.0
    %2697 = vmatpush2.msra.mxu0 0.0
    %2698 = vmatprep.subr.mxu0 0.0
    %2699 = vmatpush2.msra.mxu0 0.0
    %2700 = vmatprep.subr.mxu0 0.0
    %2701 = vmatpush2.msra.mxu0 0.0
    %2702 = vmatprep.subr.mxu0 0.0
    %2703 = vmatpush2.msra.mxu0 0.0
    %2704 = vmatprep.subr.mxu0 0.0
    %2705 = vmatpush2.msra.mxu0 0.0
    %2706 = vmatprep.subr.mxu0 0.0
    %2707 = vmatpush2.msra.mxu0 0.0
    %2708 = vmatprep.mubr.f32.mxu0 0.0
    %2709 = vmatmul.mubr.f32.gmra.mxu0 %v2324
    %v2710 = vpop.f32.mrf.mxu0
    %v2711 = vadd.f32 0.0, %v2710
    %v2712 = vpop.f32.mrf.mxu0
    %v2713 = vadd.f32 0.0, %v2712
    %2714 = vdwg.mxu0
    %2715 = vmatprep.subr.mxu0 %v537
    %2716 = vmatpush1.msra.mxu0 %v536
    %2717 = vmatprep.subr.mxu0 %v533
    %2718 = vmatpush1.msra.mxu0 %v532
    %2719 = vmatprep.subr.mxu0 %v529
    %2720 = vmatpush1.msra.mxu0 %v528
    %2721 = vmatprep.subr.mxu0 %v525
    %2722 = vmatpush1.msra.mxu0 %v524
    %2723 = vmatprep.subr.mxu0 %v521
    %2724 = vmatpush1.msra.mxu0 %v520
    %2725 = vmatprep.subr.mxu0 %v517
    %2726 = vmatpush1.msra.mxu0 %v516
    %2727 = vmatprep.subr.mxu0 %v513
    %2728 = vmatpush1.msra.mxu0 %v512
    %2729 = vmatprep.subr.mxu0 %v509
    %2730 = vmatpush1.msra.mxu0 %v508
    %2731 = vmatprep.subr.mxu0 %v505
    %2732 = vmatpush1.msra.mxu0 %v504
    %2733 = vmatprep.subr.mxu0 %v501
    %2734 = vmatpush1.msra.mxu0 %v500
    %2735 = vmatprep.subr.mxu0 %v497
    %2736 = vmatpush1.msra.mxu0 %v496
    %2737 = vmatprep.subr.mxu0 %v493
    %2738 = vmatpush1.msra.mxu0 %v492
    %2739 = vmatprep.subr.mxu0 %v489
    %2740 = vmatpush1.msra.mxu0 %v488
    %2741 = vmatprep.subr.mxu0 %v485
    %2742 = vmatpush1.msra.mxu0 %v484
    %2743 = vmatprep.subr.mxu0 %v481
    %2744 = vmatpush1.msra.mxu0 %v480
    %2745 = vmatprep.subr.mxu0 %v477
    %2746 = vmatpush1.msra.mxu0 %v476
    %2747 = vmatprep.subr.mxu0 0.0
    %2748 = vmatpush2.msra.mxu0 0.0
    %2749 = vmatprep.subr.mxu0 0.0
    %2750 = vmatpush2.msra.mxu0 0.0
    %2751 = vmatprep.subr.mxu0 0.0
    %2752 = vmatpush2.msra.mxu0 0.0
    %2753 = vmatprep.subr.mxu0 0.0
    %2754 = vmatpush2.msra.mxu0 0.0
    %2755 = vmatprep.subr.mxu0 0.0
    %2756 = vmatpush2.msra.mxu0 0.0
    %2757 = vmatprep.subr.mxu0 0.0
    %2758 = vmatpush2.msra.mxu0 0.0
    %2759 = vmatprep.subr.mxu0 0.0
    %2760 = vmatpush2.msra.mxu0 0.0
    %2761 = vmatprep.subr.mxu0 0.0
    %2762 = vmatpush2.msra.mxu0 0.0
    %2763 = vmatprep.subr.mxu0 0.0
    %2764 = vmatpush2.msra.mxu0 0.0
    %2765 = vmatprep.subr.mxu0 0.0
    %2766 = vmatpush2.msra.mxu0 0.0
    %2767 = vmatprep.subr.mxu0 0.0
    %2768 = vmatpush2.msra.mxu0 0.0
    %2769 = vmatprep.subr.mxu0 0.0
    %2770 = vmatpush2.msra.mxu0 0.0
    %2771 = vmatprep.subr.mxu0 0.0
    %2772 = vmatpush2.msra.mxu0 0.0
    %2773 = vmatprep.subr.mxu0 0.0
    %2774 = vmatpush2.msra.mxu0 0.0
    %2775 = vmatprep.subr.mxu0 0.0
    %2776 = vmatpush2.msra.mxu0 0.0
    %2777 = vmatprep.subr.mxu0 0.0
    %2778 = vmatpush2.msra.mxu0 0.0
    %2779 = vmatprep.mubr.f32.mxu0 0.0
    %2780 = vmatmul.mubr.f32.gmra.mxu0 %v2324
    %v2781 = vpop.f32.mrf.mxu0
    %v2782 = vadd.f32 0.0, %v2781
    %v2783 = vpop.f32.mrf.mxu0
    %v2784 = vadd.f32 0.0, %v2783
    %2785 = vdwg.mxu0
    %v2786 = vadd.f32 %v2640, %v2711
    %v2787 = vadd.f32 %v2641, %v2713
    %v2788 = vadd.f32 %v2642, %v2782
    %v2789 = vadd.f32 %v2643, %v2784
    %v2790 = vxor.u32 %v2786, 2147483648
    %v2791 = vxor.u32 %v2787, 2147483648
    %v2792 = vxor.u32 %v2788, 2147483648
    %v2793 = vmul.f32 %v2790, 1.442695
    %v2794 = vpow.pop %v2793
    %v2795 = vmul.f32 %v2791, 1.442695
    %v2796 = vpow.pop %v2795
    %v2797 = vmul.f32 %v2792, 1.442695
    %v2798 = vpow.pop %v2797
    %v2799 = vadd.f32 %v2794, 1.0
    %v2800 = vadd.f32 %v2796, 1.0
    %v2801 = vadd.f32 %v2798, 1.0
    %v2802 = vrcp.pop %v2799
    %v2803 = vmul.f32 1.0, %v2802
    %v2804 = vrcp.pop %v2800
    %v2805 = vmul.f32 1.0, %v2804
    %v2806 = vrcp.pop %v2801
    %v2807 = vmul.f32 1.0, %v2806
    %v2808 = vtanh.pop %v2789
    %v2809 = vmul.f32 %v2805, %v2322
    %v2810 = vmul.f32 %v2803, %v2808
    %v2811 = vadd.f32 %v2809, %v2810
    %v2812 = vtanh.pop %v2811
    %v2813 = vmul.f32 %v2807, %v2812
    %2814 = vmatprep.subr.mxu0 %v833
    %2815 = vmatpush1.msra.mxu0 %v832
    %2816 = vmatprep.subr.mxu0 %v829
    %2817 = vmatpush1.msra.mxu0 %v828
    %2818 = vmatprep.subr.mxu0 %v825
    %2819 = vmatpush1.msra.mxu0 %v824
    %2820 = vmatprep.subr.mxu0 %v821
    %2821 = vmatpush1.msra.mxu0 %v820
    %2822 = vmatprep.subr.mxu0 %v817
    %2823 = vmatpush1.msra.mxu0 %v816
    %2824 = vmatprep.subr.mxu0 %v813
    %2825 = vmatpush1.msra.mxu0 %v812
    %2826 = vmatprep.subr.mxu0 %v809
    %2827 = vmatpush1.msra.mxu0 %v808
    %2828 = vmatprep.subr.mxu0 %v805
    %2829 = vmatpush1.msra.mxu0 %v804
    %2830 = vmatprep.subr.mxu0 %v801
    %2831 = vmatpush1.msra.mxu0 %v800
    %2832 = vmatprep.subr.mxu0 %v797
    %2833 = vmatpush1.msra.mxu0 %v796
    %2834 = vmatprep.subr.mxu0 %v793
    %2835 = vmatpush1.msra.mxu0 %v792
    %2836 = vmatprep.subr.mxu0 %v789
    %2837 = vmatpush1.msra.mxu0 %v788
    %2838 = vmatprep.subr.mxu0 %v785
    %2839 = vmatpush1.msra.mxu0 %v784
    %2840 = vmatprep.subr.mxu0 %v781
    %2841 = vmatpush1.msra.mxu0 %v780
    %2842 = vmatprep.subr.mxu0 %v777
    %2843 = vmatpush1.msra.mxu0 %v776
    %2844 = vmatprep.subr.mxu0 %v773
    %2845 = vmatpush1.msra.mxu0 %v772
    %2846 = vmatprep.subr.mxu0 0.0
    %2847 = vmatpush2.msra.mxu0 0.0
    %2848 = vmatprep.subr.mxu0 0.0
    %2849 = vmatpush2.msra.mxu0 0.0
    %2850 = vmatprep.subr.mxu0 0.0
    %2851 = vmatpush2.msra.mxu0 0.0
    %2852 = vmatprep.subr.mxu0 0.0
    %2853 = vmatpush2.msra.mxu0 0.0
    %2854 = vmatprep.subr.mxu0 0.0
    %2855 = vmatpush2.msra.mxu0 0.0
    %2856 = vmatprep.subr.mxu0 0.0
    %2857 = vmatpush2.msra.mxu0 0.0
    %2858 = vmatprep.subr.mxu0 0.0
    %2859 = vmatpush2.msra.mxu0 0.0
    %2860 = vmatprep.subr.mxu0 0.0
    %2861 = vmatpush2.msra.mxu0 0.0
    %2862 = vmatprep.subr.mxu0 0.0
    %2863 = vmatpush2.msra.mxu0 0.0
    %2864 = vmatprep.subr.mxu0 0.0
    %2865 = vmatpush2.msra.mxu0 0.0
    %2866 = vmatprep.subr.mxu0 0.0
    %2867 = vmatpush2.msra.mxu0 0.0
    %2868 = vmatprep.subr.mxu0 0.0
    %2869 = vmatpush2.msra.mxu0 0.0
    %2870 = vmatprep.subr.mxu0 0.0
    %2871 = vmatpush2.msra.mxu0 0.0
    %2872 = vmatprep.subr.mxu0 0.0
    %2873 = vmatpush2.msra.mxu0 0.0
    %2874 = vmatprep.subr.mxu0 0.0
    %2875 = vmatpush2.msra.mxu0 0.0
    %2876 = vmatprep.subr.mxu0 0.0
    %2877 = vmatpush2.msra.mxu0 0.0
    %2878 = vmatprep.mubr.f32.mxu0 0.0
    %2879 = vmatmul.mubr.f32.gmra.mxu0 %v2636
    %v2880 = vpop.f32.mrf.mxu0
    %v2881 = vadd.f32 0.0, %v2880
    %v2882 = vpop.f32.mrf.mxu0
    %v2883 = vadd.f32 0.0, %v2882
    %2884 = vdwg.mxu0
    %2885 = vmatprep.subr.mxu0 %v835
    %2886 = vmatpush1.msra.mxu0 %v834
    %2887 = vmatprep.subr.mxu0 %v831
    %2888 = vmatpush1.msra.mxu0 %v830
    %2889 = vmatprep.subr.mxu0 %v827
    %2890 = vmatpush1.msra.mxu0 %v826
    %2891 = vmatprep.subr.mxu0 %v823
    %2892 = vmatpush1.msra.mxu0 %v822
    %2893 = vmatprep.subr.mxu0 %v819
    %2894 = vmatpush1.msra.mxu0 %v818
    %2895 = vmatprep.subr.mxu0 %v815
    %2896 = vmatpush1.msra.mxu0 %v814
    %2897 = vmatprep.subr.mxu0 %v811
    %2898 = vmatpush1.msra.mxu0 %v810
    %2899 = vmatprep.subr.mxu0 %v807
    %2900 = vmatpush1.msra.mxu0 %v806
    %2901 = vmatprep.subr.mxu0 %v803
    %2902 = vmatpush1.msra.mxu0 %v802
    %2903 = vmatprep.subr.mxu0 %v799
    %2904 = vmatpush1.msra.mxu0 %v798
    %2905 = vmatprep.subr.mxu0 %v795
    %2906 = vmatpush1.msra.mxu0 %v794
    %2907 = vmatprep.subr.mxu0 %v791
    %2908 = vmatpush1.msra.mxu0 %v790
    %2909 = vmatprep.subr.mxu0 %v787
    %2910 = vmatpush1.msra.mxu0 %v786
    %2911 = vmatprep.subr.mxu0 %v783
    %2912 = vmatpush1.msra.mxu0 %v782
    %2913 = vmatprep.subr.mxu0 %v779
    %2914 = vmatpush1.msra.mxu0 %v778
    %2915 = vmatprep.subr.mxu0 %v775
    %2916 = vmatpush1.msra.mxu0 %v774
    %2917 = vmatprep.subr.mxu0 0.0
    %2918 = vmatpush2.msra.mxu0 0.0
    %2919 = vmatprep.subr.mxu0 0.0
    %2920 = vmatpush2.msra.mxu0 0.0
    %2921 = vmatprep.subr.mxu0 0.0
    %2922 = vmatpush2.msra.mxu0 0.0
    %2923 = vmatprep.subr.mxu0 0.0
    %2924 = vmatpush2.msra.mxu0 0.0
    %2925 = vmatprep.subr.mxu0 0.0
    %2926 = vmatpush2.msra.mxu0 0.0
    %2927 = vmatprep.subr.mxu0 0.0
    %2928 = vmatpush2.msra.mxu0 0.0
    %2929 = vmatprep.subr.mxu0 0.0
    %2930 = vmatpush2.msra.mxu0 0.0
    %2931 = vmatprep.subr.mxu0 0.0
    %2932 = vmatpush2.msra.mxu0 0.0
    %2933 = vmatprep.subr.mxu0 0.0
    %2934 = vmatpush2.msra.mxu0 0.0
    %2935 = vmatprep.subr.mxu0 0.0
    %2936 = vmatpush2.msra.mxu0 0.0
    %2937 = vmatprep.subr.mxu0 0.0
    %2938 = vmatpush2.msra.mxu0 0.0
    %2939 = vmatprep.subr.mxu0 0.0
    %2940 = vmatpush2.msra.mxu0 0.0
    %2941 = vmatprep.subr.mxu0 0.0
    %2942 = vmatpush2.msra.mxu0 0.0
    %2943 = vmatprep.subr.mxu0 0.0
    %2944 = vmatpush2.msra.mxu0 0.0
    %2945 = vmatprep.subr.mxu0 0.0
    %2946 = vmatpush2.msra.mxu0 0.0
    %2947 = vmatprep.subr.mxu0 0.0
    %2948 = vmatpush2.msra.mxu0 0.0
    %2949 = vmatprep.mubr.f32.mxu0 0.0
    %2950 = vmatmul.mubr.f32.gmra.mxu0 %v2636
    %v2951 = vpop.f32.mrf.mxu0
    %v2952 = vadd.f32 0.0, %v2951
    %v2953 = vpop.f32.mrf.mxu0
    %v2954 = vadd.f32 0.0, %v2953
    %2955 = vdwg.mxu0
    %2956 = vmatprep.subr.mxu0 %v769
    %2957 = vmatpush1.msra.mxu0 %v768
    %2958 = vmatprep.subr.mxu0 %v765
    %2959 = vmatpush1.msra.mxu0 %v764
    %2960 = vmatprep.subr.mxu0 %v761
    %2961 = vmatpush1.msra.mxu0 %v760
    %2962 = vmatprep.subr.mxu0 %v757
    %2963 = vmatpush1.msra.mxu0 %v756
    %2964 = vmatprep.subr.mxu0 %v753
    %2965 = vmatpush1.msra.mxu0 %v752
    %2966 = vmatprep.subr.mxu0 %v749
    %2967 = vmatpush1.msra.mxu0 %v748
    %2968 = vmatprep.subr.mxu0 %v745
    %2969 = vmatpush1.msra.mxu0 %v744
    %2970 = vmatprep.subr.mxu0 %v741
    %2971 = vmatpush1.msra.mxu0 %v740
    %2972 = vmatprep.subr.mxu0 %v737
    %2973 = vmatpush1.msra.mxu0 %v736
    %2974 = vmatprep.subr.mxu0 %v733
    %2975 = vmatpush1.msra.mxu0 %v732
    %2976 = vmatprep.subr.mxu0 %v729
    %2977 = vmatpush1.msra.mxu0 %v728
    %2978 = vmatprep.subr.mxu0 %v725
    %2979 = vmatpush1.msra.mxu0 %v724
    %2980 = vmatprep.subr.mxu0 %v721
    %2981 = vmatpush1.msra.mxu0 %v720
    %2982 = vmatprep.subr.mxu0 %v717
    %2983 = vmatpush1.msra.mxu0 %v716
    %2984 = vmatprep.subr.mxu0 %v713
    %2985 = vmatpush1.msra.mxu0 %v712
    %2986 = vmatprep.subr.mxu0 %v709
    %2987 = vmatpush1.msra.mxu0 %v708
    %2988 = vmatprep.subr.mxu0 0.0
    %2989 = vmatpush2.msra.mxu0 0.0
    %2990 = vmatprep.subr.mxu0 0.0
    %2991 = vmatpush2.msra.mxu0 0.0
    %2992 = vmatprep.subr.mxu0 0.0
    %2993 = vmatpush2.msra.mxu0 0.0
    %2994 = vmatprep.subr.mxu0 0.0
    %2995 = vmatpush2.msra.mxu0 0.0
    %2996 = vmatprep.subr.mxu0 0.0
    %2997 = vmatpush2.msra.mxu0 0.0
    %2998 = vmatprep.subr.mxu0 0.0
    %2999 = vmatpush2.msra.mxu0 0.0
    %3000 = vmatprep.subr.mxu0 0.0
    %3001 = vmatpush2.msra.mxu0 0.0
    %3002 = vmatprep.subr.mxu0 0.0
    %3003 = vmatpush2.msra.mxu0 0.0
    %3004 = vmatprep.subr.mxu0 0.0
    %3005 = vmatpush2.msra.mxu0 0.0
    %3006 = vmatprep.subr.mxu0 0.0
    %3007 = vmatpush2.msra.mxu0 0.0
    %3008 = vmatprep.subr.mxu0 0.0
    %3009 = vmatpush2.msra.mxu0 0.0
    %3010 = vmatprep.subr.mxu0 0.0
    %3011 = vmatpush2.msra.mxu0 0.0
    %3012 = vmatprep.subr.mxu0 0.0
    %3013 = vmatpush2.msra.mxu0 0.0
    %3014 = vmatprep.subr.mxu0 0.0
    %3015 = vmatpush2.msra.mxu0 0.0
    %3016 = vmatprep.subr.mxu0 0.0
    %3017 = vmatpush2.msra.mxu0 0.0
    %3018 = vmatprep.subr.mxu0 0.0
    %3019 = vmatpush2.msra.mxu0 0.0
    %3020 = vmatprep.mubr.f32.mxu0 0.0
    %3021 = vmatmul.mubr.f32.gmra.mxu0 %v2813
    %v3022 = vpop.f32.mrf.mxu0
    %v3023 = vadd.f32 %v2881, %v3022
    %v3024 = vpop.f32.mrf.mxu0
    %v3025 = vadd.f32 %v2883, %v3024
    %3026 = vdwg.mxu0
    %3027 = vmatprep.subr.mxu0 %v771
    %3028 = vmatpush1.msra.mxu0 %v770
    %3029 = vmatprep.subr.mxu0 %v767
    %3030 = vmatpush1.msra.mxu0 %v766
    %3031 = vmatprep.subr.mxu0 %v763
    %3032 = vmatpush1.msra.mxu0 %v762
    %3033 = vmatprep.subr.mxu0 %v759
    %3034 = vmatpush1.msra.mxu0 %v758
    %3035 = vmatprep.subr.mxu0 %v755
    %3036 = vmatpush1.msra.mxu0 %v754
    %3037 = vmatprep.subr.mxu0 %v751
    %3038 = vmatpush1.msra.mxu0 %v750
    %3039 = vmatprep.subr.mxu0 %v747
    %3040 = vmatpush1.msra.mxu0 %v746
    %3041 = vmatprep.subr.mxu0 %v743
    %3042 = vmatpush1.msra.mxu0 %v742
    %3043 = vmatprep.subr.mxu0 %v739
    %3044 = vmatpush1.msra.mxu0 %v738
    %3045 = vmatprep.subr.mxu0 %v735
    %3046 = vmatpush1.msra.mxu0 %v734
    %3047 = vmatprep.subr.mxu0 %v731
    %3048 = vmatpush1.msra.mxu0 %v730
    %3049 = vmatprep.subr.mxu0 %v727
    %3050 = vmatpush1.msra.mxu0 %v726
    %3051 = vmatprep.subr.mxu0 %v723
    %3052 = vmatpush1.msra.mxu0 %v722
    %3053 = vmatprep.subr.mxu0 %v719
    %3054 = vmatpush1.msra.mxu0 %v718
    %3055 = vmatprep.subr.mxu0 %v715
    %3056 = vmatpush1.msra.mxu0 %v714
    %3057 = vmatprep.subr.mxu0 %v711
    %3058 = vmatpush1.msra.mxu0 %v710
    %3059 = vmatprep.subr.mxu0 0.0
    %3060 = vmatpush2.msra.mxu0 0.0
    %3061 = vmatprep.subr.mxu0 0.0
    %3062 = vmatpush2.msra.mxu0 0.0
    %3063 = vmatprep.subr.mxu0 0.0
    %3064 = vmatpush2.msra.mxu0 0.0
    %3065 = vmatprep.subr.mxu0 0.0
    %3066 = vmatpush2.msra.mxu0 0.0
    %3067 = vmatprep.subr.mxu0 0.0
    %3068 = vmatpush2.msra.mxu0 0.0
    %3069 = vmatprep.subr.mxu0 0.0
    %3070 = vmatpush2.msra.mxu0 0.0
    %3071 = vmatprep.subr.mxu0 0.0
    %3072 = vmatpush2.msra.mxu0 0.0
    %3073 = vmatprep.subr.mxu0 0.0
    %3074 = vmatpush2.msra.mxu0 0.0
    %3075 = vmatprep.subr.mxu0 0.0
    %3076 = vmatpush2.msra.mxu0 0.0
    %3077 = vmatprep.subr.mxu0 0.0
    %3078 = vmatpush2.msra.mxu0 0.0
    %3079 = vmatprep.subr.mxu0 0.0
    %3080 = vmatpush2.msra.mxu0 0.0
    %3081 = vmatprep.subr.mxu0 0.0
    %3082 = vmatpush2.msra.mxu0 0.0
    %3083 = vmatprep.subr.mxu0 0.0
    %3084 = vmatpush2.msra.mxu0 0.0
    %3085 = vmatprep.subr.mxu0 0.0
    %3086 = vmatpush2.msra.mxu0 0.0
    %3087 = vmatprep.subr.mxu0 0.0
    %3088 = vmatpush2.msra.mxu0 0.0
    %3089 = vmatprep.subr.mxu0 0.0
    %3090 = vmatpush2.msra.mxu0 0.0
    %3091 = vmatprep.mubr.f32.mxu0 0.0
    %3092 = vmatmul.mubr.f32.gmra.mxu0 %v2813
    %v3093 = vpop.f32.mrf.mxu0
    %v3094 = vadd.f32 %v2952, %v3093
    %v3095 = vpop.f32.mrf.mxu0
    %v3096 = vadd.f32 %v2954, %v3095
    %3097 = vdwg.mxu0
    %v3098 = vadd.f32 %v3023, %v1125
    %v3099 = vadd.f32 %v3025, %v1129
    %v3100 = vadd.f32 %v3094, %v1133
    %v3101 = vadd.f32 %v3096, %v1137
    %v3102 = vxor.u32 %v3098, 2147483648
    %v3103 = vxor.u32 %v3099, 2147483648
    %v3104 = vxor.u32 %v3100, 2147483648
    %v3105 = vmul.f32 %v3102, 1.442695
    %v3106 = vpow.pop %v3105
    %v3107 = vmul.f32 %v3103, 1.442695
    %v3108 = vpow.pop %v3107
    %v3109 = vmul.f32 %v3104, 1.442695
    %v3110 = vpow.pop %v3109
    %v3111 = vadd.f32 %v3106, 1.0
    %v3112 = vadd.f32 %v3108, 1.0
    %v3113 = vadd.f32 %v3110, 1.0
    %v3114 = vrcp.pop %v3111
    %v3115 = vmul.f32 1.0, %v3114
    %v3116 = vrcp.pop %v3112
    %v3117 = vmul.f32 1.0, %v3116
    %v3118 = vrcp.pop %v3113
    %v3119 = vmul.f32 1.0, %v3118
    %v3120 = vtanh.pop %v3101
    %v3121 = vmul.f32 %v3117, %v2634
    %v3122 = vmul.f32 %v3115, %v3120
    %v3123 = vadd.f32 %v3121, %v3122
    %v3124 = vtanh.pop %v3123
    %v3125 = vmul.f32 %v3119, %v3124
    %s3126 = smul.u32 5, 4
    %s3127 = smul.addr %s3126, 8
    %s3128 = scalar_lea.vmem [#allocation2], %s3127
    %v3129 = vld [vmem:[%s3128] sm:$0xff]
    %v3130 = vld [vmem:[%s3128 + $0x8] sm:$0xff]
    %v3131 = vld [vmem:[%s3128 + $0x10] sm:$0xff]
    %v3132 = vld [vmem:[%s3128 + $0x18] sm:$0xff]
    %3133 = vmatprep.subr.mxu0 %v535
    %3134 = vmatpush1.msra.mxu0 %v534
    %3135 = vmatprep.subr.mxu0 %v531
    %3136 = vmatpush1.msra.mxu0 %v530
    %3137 = vmatprep.subr.mxu0 %v527
    %3138 = vmatpush1.msra.mxu0 %v526
    %3139 = vmatprep.subr.mxu0 %v523
    %3140 = vmatpush1.msra.mxu0 %v522
    %3141 = vmatprep.subr.mxu0 %v519
    %3142 = vmatpush1.msra.mxu0 %v518
    %3143 = vmatprep.subr.mxu0 %v515
    %3144 = vmatpush1.msra.mxu0 %v514
    %3145 = vmatprep.subr.mxu0 %v511
    %3146 = vmatpush1.msra.mxu0 %v510
    %3147 = vmatprep.subr.mxu0 %v507
    %3148 = vmatpush1.msra.mxu0 %v506
    %3149 = vmatprep.subr.mxu0 %v503
    %3150 = vmatpush1.msra.mxu0 %v502
    %3151 = vmatprep.subr.mxu0 %v499
    %3152 = vmatpush1.msra.mxu0 %v498
    %3153 = vmatprep.subr.mxu0 %v495
    %3154 = vmatpush1.msra.mxu0 %v494
    %3155 = vmatprep.subr.mxu0 %v491
    %3156 = vmatpush1.msra.mxu0 %v490
    %3157 = vmatprep.subr.mxu0 %v487
    %3158 = vmatpush1.msra.mxu0 %v486
    %3159 = vmatprep.subr.mxu0 %v483
    %3160 = vmatpush1.msra.mxu0 %v482
    %3161 = vmatprep.subr.mxu0 %v479
    %3162 = vmatpush1.msra.mxu0 %v478
    %3163 = vmatprep.subr.mxu0 %v475
    %3164 = vmatpush1.msra.mxu0 %v474
    %3165 = vmatprep.subr.mxu0 0.0
    %3166 = vmatpush2.msra.mxu0 0.0
    %3167 = vmatprep.subr.mxu0 0.0
    %3168 = vmatpush2.msra.mxu0 0.0
    %3169 = vmatprep.subr.mxu0 0.0
    %3170 = vmatpush2.msra.mxu0 0.0
    %3171 = vmatprep.subr.mxu0 0.0
    %3172 = vmatpush2.msra.mxu0 0.0
    %3173 = vmatprep.subr.mxu0 0.0
    %3174 = vmatpush2.msra.mxu0 0.0
    %3175 = vmatprep.subr.mxu0 0.0
    %3176 = vmatpush2.msra.mxu0 0.0
    %3177 = vmatprep.subr.mxu0 0.0
    %3178 = vmatpush2.msra.mxu0 0.0
    %3179 = vmatprep.subr.mxu0 0.0
    %3180 = vmatpush2.msra.mxu0 0.0
    %3181 = vmatprep.subr.mxu0 0.0
    %3182 = vmatpush2.msra.mxu0 0.0
    %3183 = vmatprep.subr.mxu0 0.0
    %3184 = vmatpush2.msra.mxu0 0.0
    %3185 = vmatprep.subr.mxu0 0.0
    %3186 = vmatpush2.msra.mxu0 0.0
    %3187 = vmatprep.subr.mxu0 0.0
    %3188 = vmatpush2.msra.mxu0 0.0
    %3189 = vmatprep.subr.mxu0 0.0
    %3190 = vmatpush2.msra.mxu0 0.0
    %3191 = vmatprep.subr.mxu0 0.0
    %3192 = vmatpush2.msra.mxu0 0.0
    %3193 = vmatprep.subr.mxu0 0.0
    %3194 = vmatpush2.msra.mxu0 0.0
    %3195 = vmatprep.subr.mxu0 0.0
    %3196 = vmatpush2.msra.mxu0 0.0
    %3197 = vmatprep.mubr.f32.mxu0 0.0
    %3198 = vmatmul.mubr.f32.gmra.mxu0 %v2813
    %v3199 = vpop.f32.mrf.mxu0
    %v3200 = vadd.f32 0.0, %v3199
    %v3201 = vpop.f32.mrf.mxu0
    %v3202 = vadd.f32 0.0, %v3201
    %3203 = vdwg.mxu0
    %3204 = vmatprep.subr.mxu0 %v537
    %3205 = vmatpush1.msra.mxu0 %v536
    %3206 = vmatprep.subr.mxu0 %v533
    %3207 = vmatpush1.msra.mxu0 %v532
    %3208 = vmatprep.subr.mxu0 %v529
    %3209 = vmatpush1.msra.mxu0 %v528
    %3210 = vmatprep.subr.mxu0 %v525
    %3211 = vmatpush1.msra.mxu0 %v524
    %3212 = vmatprep.subr.mxu0 %v521
    %3213 = vmatpush1.msra.mxu0 %v520
    %3214 = vmatprep.subr.mxu0 %v517
    %3215 = vmatpush1.msra.mxu0 %v516
    %3216 = vmatprep.subr.mxu0 %v513
    %3217 = vmatpush1.msra.mxu0 %v512
    %3218 = vmatprep.subr.mxu0 %v509
    %3219 = vmatpush1.msra.mxu0 %v508
    %3220 = vmatprep.subr.mxu0 %v505
    %3221 = vmatpush1.msra.mxu0 %v504
    %3222 = vmatprep.subr.mxu0 %v501
    %3223 = vmatpush1.msra.mxu0 %v500
    %3224 = vmatprep.subr.mxu0 %v497
    %3225 = vmatpush1.msra.mxu0 %v496
    %3226 = vmatprep.subr.mxu0 %v493
    %3227 = vmatpush1.msra.mxu0 %v492
    %3228 = vmatprep.subr.mxu0 %v489
    %3229 = vmatpush1.msra.mxu0 %v488
    %3230 = vmatprep.subr.mxu0 %v485
    %3231 = vmatpush1.msra.mxu0 %v484
    %3232 = vmatprep.subr.mxu0 %v481
    %3233 = vmatpush1.msra.mxu0 %v480
    %3234 = vmatprep.subr.mxu0 %v477
    %3235 = vmatpush1.msra.mxu0 %v476
    %3236 = vmatprep.subr.mxu0 0.0
    %3237 = vmatpush2.msra.mxu0 0.0
    %3238 = vmatprep.subr.mxu0 0.0
    %3239 = vmatpush2.msra.mxu0 0.0
    %3240 = vmatprep.subr.mxu0 0.0
    %3241 = vmatpush2.msra.mxu0 0.0
    %3242 = vmatprep.subr.mxu0 0.0
    %3243 = vmatpush2.msra.mxu0 0.0
    %3244 = vmatprep.subr.mxu0 0.0
    %3245 = vmatpush2.msra.mxu0 0.0
    %3246 = vmatprep.subr.mxu0 0.0
    %3247 = vmatpush2.msra.mxu0 0.0
    %3248 = vmatprep.subr.mxu0 0.0
    %3249 = vmatpush2.msra.mxu0 0.0
    %3250 = vmatprep.subr.mxu0 0.0
    %3251 = vmatpush2.msra.mxu0 0.0
    %3252 = vmatprep.subr.mxu0 0.0
    %3253 = vmatpush2.msra.mxu0 0.0
    %3254 = vmatprep.subr.mxu0 0.0
    %3255 = vmatpush2.msra.mxu0 0.0
    %3256 = vmatprep.subr.mxu0 0.0
    %3257 = vmatpush2.msra.mxu0 0.0
    %3258 = vmatprep.subr.mxu0 0.0
    %3259 = vmatpush2.msra.mxu0 0.0
    %3260 = vmatprep.subr.mxu0 0.0
    %3261 = vmatpush2.msra.mxu0 0.0
    %3262 = vmatprep.subr.mxu0 0.0
    %3263 = vmatpush2.msra.mxu0 0.0
    %3264 = vmatprep.subr.mxu0 0.0
    %3265 = vmatpush2.msra.mxu0 0.0
    %3266 = vmatprep.subr.mxu0 0.0
    %3267 = vmatpush2.msra.mxu0 0.0
    %3268 = vmatprep.mubr.f32.mxu0 0.0
    %3269 = vmatmul.mubr.f32.gmra.mxu0 %v2813
    %v3270 = vpop.f32.mrf.mxu0
    %v3271 = vadd.f32 0.0, %v3270
    %v3272 = vpop.f32.mrf.mxu0
    %v3273 = vadd.f32 0.0, %v3272
    %3274 = vdwg.mxu0
    %v3275 = vadd.f32 %v3129, %v3200
    %v3276 = vadd.f32 %v3130, %v3202
    %v3277 = vadd.f32 %v3131, %v3271
    %v3278 = vadd.f32 %v3132, %v3273
    %v3279 = vxor.u32 %v3275, 2147483648
    %v3280 = vxor.u32 %v3276, 2147483648
    %v3281 = vxor.u32 %v3277, 2147483648
    %v3282 = vmul.f32 %v3279, 1.442695
    %v3283 = vpow.pop %v3282
    %v3284 = vmul.f32 %v3280, 1.442695
    %v3285 = vpow.pop %v3284
    %v3286 = vmul.f32 %v3281, 1.442695
    %v3287 = vpow.pop %v3286
    %v3288 = vadd.f32 %v3283, 1.0
    %v3289 = vadd.f32 %v3285, 1.0
    %v3290 = vadd.f32 %v3287, 1.0
    %v3291 = vrcp.pop %v3288
    %v3292 = vmul.f32 1.0, %v3291
    %v3293 = vrcp.pop %v3289
    %v3294 = vmul.f32 1.0, %v3293
    %v3295 = vrcp.pop %v3290
    %v3296 = vmul.f32 1.0, %v3295
    %v3297 = vtanh.pop %v3278
    %v3298 = vmul.f32 %v3294, %v2811
    %v3299 = vmul.f32 %v3292, %v3297
    %v3300 = vadd.f32 %v3298, %v3299
    %v3301 = vtanh.pop %v3300
    %v3302 = vmul.f32 %v3296, %v3301
    %3303 = vmatprep.subr.mxu0 %v833
    %3304 = vmatpush1.msra.mxu0 %v832
    %3305 = vmatprep.subr.mxu0 %v829
    %3306 = vmatpush1.msra.mxu0 %v828
    %3307 = vmatprep.subr.mxu0 %v825
    %3308 = vmatpush1.msra.mxu0 %v824
    %3309 = vmatprep.subr.mxu0 %v821
    %3310 = vmatpush1.msra.mxu0 %v820
    %3311 = vmatprep.subr.mxu0 %v817
    %3312 = vmatpush1.msra.mxu0 %v816
    %3313 = vmatprep.subr.mxu0 %v813
    %3314 = vmatpush1.msra.mxu0 %v812
    %3315 = vmatprep.subr.mxu0 %v809
    %3316 = vmatpush1.msra.mxu0 %v808
    %3317 = vmatprep.subr.mxu0 %v805
    %3318 = vmatpush1.msra.mxu0 %v804
    %3319 = vmatprep.subr.mxu0 %v801
    %3320 = vmatpush1.msra.mxu0 %v800
    %3321 = vmatprep.subr.mxu0 %v797
    %3322 = vmatpush1.msra.mxu0 %v796
    %3323 = vmatprep.subr.mxu0 %v793
    %3324 = vmatpush1.msra.mxu0 %v792
    %3325 = vmatprep.subr.mxu0 %v789
    %3326 = vmatpush1.msra.mxu0 %v788
    %3327 = vmatprep.subr.mxu0 %v785
    %3328 = vmatpush1.msra.mxu0 %v784
    %3329 = vmatprep.subr.mxu0 %v781
    %3330 = vmatpush1.msra.mxu0 %v780
    %3331 = vmatprep.subr.mxu0 %v777
    %3332 = vmatpush1.msra.mxu0 %v776
    %3333 = vmatprep.subr.mxu0 %v773
    %3334 = vmatpush1.msra.mxu0 %v772
    %3335 = vmatprep.subr.mxu0 0.0
    %3336 = vmatpush2.msra.mxu0 0.0
    %3337 = vmatprep.subr.mxu0 0.0
    %3338 = vmatpush2.msra.mxu0 0.0
    %3339 = vmatprep.subr.mxu0 0.0
    %3340 = vmatpush2.msra.mxu0 0.0
    %3341 = vmatprep.subr.mxu0 0.0
    %3342 = vmatpush2.msra.mxu0 0.0
    %3343 = vmatprep.subr.mxu0 0.0
    %3344 = vmatpush2.msra.mxu0 0.0
    %3345 = vmatprep.subr.mxu0 0.0
    %3346 = vmatpush2.msra.mxu0 0.0
    %3347 = vmatprep.subr.mxu0 0.0
    %3348 = vmatpush2.msra.mxu0 0.0
    %3349 = vmatprep.subr.mxu0 0.0
    %3350 = vmatpush2.msra.mxu0 0.0
    %3351 = vmatprep.subr.mxu0 0.0
    %3352 = vmatpush2.msra.mxu0 0.0
    %3353 = vmatprep.subr.mxu0 0.0
    %3354 = vmatpush2.msra.mxu0 0.0
    %3355 = vmatprep.subr.mxu0 0.0
    %3356 = vmatpush2.msra.mxu0 0.0
    %3357 = vmatprep.subr.mxu0 0.0
    %3358 = vmatpush2.msra.mxu0 0.0
    %3359 = vmatprep.subr.mxu0 0.0
    %3360 = vmatpush2.msra.mxu0 0.0
    %3361 = vmatprep.subr.mxu0 0.0
    %3362 = vmatpush2.msra.mxu0 0.0
    %3363 = vmatprep.subr.mxu0 0.0
    %3364 = vmatpush2.msra.mxu0 0.0
    %3365 = vmatprep.subr.mxu0 0.0
    %3366 = vmatpush2.msra.mxu0 0.0
    %3367 = vmatprep.mubr.f32.mxu0 0.0
    %3368 = vmatmul.mubr.f32.gmra.mxu0 %v3125
    %v3369 = vpop.f32.mrf.mxu0
    %v3370 = vadd.f32 0.0, %v3369
    %v3371 = vpop.f32.mrf.mxu0
    %v3372 = vadd.f32 0.0, %v3371
    %3373 = vdwg.mxu0
    %3374 = vmatprep.subr.mxu0 %v835
    %3375 = vmatpush1.msra.mxu0 %v834
    %3376 = vmatprep.subr.mxu0 %v831
    %3377 = vmatpush1.msra.mxu0 %v830
    %3378 = vmatprep.subr.mxu0 %v827
    %3379 = vmatpush1.msra.mxu0 %v826
    %3380 = vmatprep.subr.mxu0 %v823
    %3381 = vmatpush1.msra.mxu0 %v822
    %3382 = vmatprep.subr.mxu0 %v819
    %3383 = vmatpush1.msra.mxu0 %v818
    %3384 = vmatprep.subr.mxu0 %v815
    %3385 = vmatpush1.msra.mxu0 %v814
    %3386 = vmatprep.subr.mxu0 %v811
    %3387 = vmatpush1.msra.mxu0 %v810
    %3388 = vmatprep.subr.mxu0 %v807
    %3389 = vmatpush1.msra.mxu0 %v806
    %3390 = vmatprep.subr.mxu0 %v803
    %3391 = vmatpush1.msra.mxu0 %v802
    %3392 = vmatprep.subr.mxu0 %v799
    %3393 = vmatpush1.msra.mxu0 %v798
    %3394 = vmatprep.subr.mxu0 %v795
    %3395 = vmatpush1.msra.mxu0 %v794
    %3396 = vmatprep.subr.mxu0 %v791
    %3397 = vmatpush1.msra.mxu0 %v790
    %3398 = vmatprep.subr.mxu0 %v787
    %3399 = vmatpush1.msra.mxu0 %v786
    %3400 = vmatprep.subr.mxu0 %v783
    %3401 = vmatpush1.msra.mxu0 %v782
    %3402 = vmatprep.subr.mxu0 %v779
    %3403 = vmatpush1.msra.mxu0 %v778
    %3404 = vmatprep.subr.mxu0 %v775
    %3405 = vmatpush1.msra.mxu0 %v774
    %3406 = vmatprep.subr.mxu0 0.0
    %3407 = vmatpush2.msra.mxu0 0.0
    %3408 = vmatprep.subr.mxu0 0.0
    %3409 = vmatpush2.msra.mxu0 0.0
    %3410 = vmatprep.subr.mxu0 0.0
    %3411 = vmatpush2.msra.mxu0 0.0
    %3412 = vmatprep.subr.mxu0 0.0
    %3413 = vmatpush2.msra.mxu0 0.0
    %3414 = vmatprep.subr.mxu0 0.0
    %3415 = vmatpush2.msra.mxu0 0.0
    %3416 = vmatprep.subr.mxu0 0.0
    %3417 = vmatpush2.msra.mxu0 0.0
    %3418 = vmatprep.subr.mxu0 0.0
    %3419 = vmatpush2.msra.mxu0 0.0
    %3420 = vmatprep.subr.mxu0 0.0
    %3421 = vmatpush2.msra.mxu0 0.0
    %3422 = vmatprep.subr.mxu0 0.0
    %3423 = vmatpush2.msra.mxu0 0.0
    %3424 = vmatprep.subr.mxu0 0.0
    %3425 = vmatpush2.msra.mxu0 0.0
    %3426 = vmatprep.subr.mxu0 0.0
    %3427 = vmatpush2.msra.mxu0 0.0
    %3428 = vmatprep.subr.mxu0 0.0
    %3429 = vmatpush2.msra.mxu0 0.0
    %3430 = vmatprep.subr.mxu0 0.0
    %3431 = vmatpush2.msra.mxu0 0.0
    %3432 = vmatprep.subr.mxu0 0.0
    %3433 = vmatpush2.msra.mxu0 0.0
    %3434 = vmatprep.subr.mxu0 0.0
    %3435 = vmatpush2.msra.mxu0 0.0
    %3436 = vmatprep.subr.mxu0 0.0
    %3437 = vmatpush2.msra.mxu0 0.0
    %3438 = vmatprep.mubr.f32.mxu0 0.0
    %3439 = vmatmul.mubr.f32.gmra.mxu0 %v3125
    %v3440 = vpop.f32.mrf.mxu0
    %v3441 = vadd.f32 0.0, %v3440
    %v3442 = vpop.f32.mrf.mxu0
    %v3443 = vadd.f32 0.0, %v3442
    %3444 = vdwg.mxu0
    %3445 = vmatprep.subr.mxu0 %v769
    %3446 = vmatpush1.msra.mxu0 %v768
    %3447 = vmatprep.subr.mxu0 %v765
    %3448 = vmatpush1.msra.mxu0 %v764
    %3449 = vmatprep.subr.mxu0 %v761
    %3450 = vmatpush1.msra.mxu0 %v760
    %3451 = vmatprep.subr.mxu0 %v757
    %3452 = vmatpush1.msra.mxu0 %v756
    %3453 = vmatprep.subr.mxu0 %v753
    %3454 = vmatpush1.msra.mxu0 %v752
    %3455 = vmatprep.subr.mxu0 %v749
    %3456 = vmatpush1.msra.mxu0 %v748
    %3457 = vmatprep.subr.mxu0 %v745
    %3458 = vmatpush1.msra.mxu0 %v744
    %3459 = vmatprep.subr.mxu0 %v741
    %3460 = vmatpush1.msra.mxu0 %v740
    %3461 = vmatprep.subr.mxu0 %v737
    %3462 = vmatpush1.msra.mxu0 %v736
    %3463 = vmatprep.subr.mxu0 %v733
    %3464 = vmatpush1.msra.mxu0 %v732
    %3465 = vmatprep.subr.mxu0 %v729
    %3466 = vmatpush1.msra.mxu0 %v728
    %3467 = vmatprep.subr.mxu0 %v725
    %3468 = vmatpush1.msra.mxu0 %v724
    %3469 = vmatprep.subr.mxu0 %v721
    %3470 = vmatpush1.msra.mxu0 %v720
    %3471 = vmatprep.subr.mxu0 %v717
    %3472 = vmatpush1.msra.mxu0 %v716
    %3473 = vmatprep.subr.mxu0 %v713
    %3474 = vmatpush1.msra.mxu0 %v712
    %3475 = vmatprep.subr.mxu0 %v709
    %3476 = vmatpush1.msra.mxu0 %v708
    %3477 = vmatprep.subr.mxu0 0.0
    %3478 = vmatpush2.msra.mxu0 0.0
    %3479 = vmatprep.subr.mxu0 0.0
    %3480 = vmatpush2.msra.mxu0 0.0
    %3481 = vmatprep.subr.mxu0 0.0
    %3482 = vmatpush2.msra.mxu0 0.0
    %3483 = vmatprep.subr.mxu0 0.0
    %3484 = vmatpush2.msra.mxu0 0.0
    %3485 = vmatprep.subr.mxu0 0.0
    %3486 = vmatpush2.msra.mxu0 0.0
    %3487 = vmatprep.subr.mxu0 0.0
    %3488 = vmatpush2.msra.mxu0 0.0
    %3489 = vmatprep.subr.mxu0 0.0
    %3490 = vmatpush2.msra.mxu0 0.0
    %3491 = vmatprep.subr.mxu0 0.0
    %3492 = vmatpush2.msra.mxu0 0.0
    %3493 = vmatprep.subr.mxu0 0.0
    %3494 = vmatpush2.msra.mxu0 0.0
    %3495 = vmatprep.subr.mxu0 0.0
    %3496 = vmatpush2.msra.mxu0 0.0
    %3497 = vmatprep.subr.mxu0 0.0
    %3498 = vmatpush2.msra.mxu0 0.0
    %3499 = vmatprep.subr.mxu0 0.0
    %3500 = vmatpush2.msra.mxu0 0.0
    %3501 = vmatprep.subr.mxu0 0.0
    %3502 = vmatpush2.msra.mxu0 0.0
    %3503 = vmatprep.subr.mxu0 0.0
    %3504 = vmatpush2.msra.mxu0 0.0
    %3505 = vmatprep.subr.mxu0 0.0
    %3506 = vmatpush2.msra.mxu0 0.0
    %3507 = vmatprep.subr.mxu0 0.0
    %3508 = vmatpush2.msra.mxu0 0.0
    %3509 = vmatprep.mubr.f32.mxu0 0.0
    %3510 = vmatmul.mubr.f32.gmra.mxu0 %v3302
    %v3511 = vpop.f32.mrf.mxu0
    %v3512 = vadd.f32 %v3370, %v3511
    %v3513 = vpop.f32.mrf.mxu0
    %v3514 = vadd.f32 %v3372, %v3513
    %3515 = vdwg.mxu0
    %3516 = vmatprep.subr.mxu0 %v771
    %3517 = vmatpush1.msra.mxu0 %v770
    %3518 = vmatprep.subr.mxu0 %v767
    %3519 = vmatpush1.msra.mxu0 %v766
    %3520 = vmatprep.subr.mxu0 %v763
    %3521 = vmatpush1.msra.mxu0 %v762
    %3522 = vmatprep.subr.mxu0 %v759
    %3523 = vmatpush1.msra.mxu0 %v758
    %3524 = vmatprep.subr.mxu0 %v755
    %3525 = vmatpush1.msra.mxu0 %v754
    %3526 = vmatprep.subr.mxu0 %v751
    %3527 = vmatpush1.msra.mxu0 %v750
    %3528 = vmatprep.subr.mxu0 %v747
    %3529 = vmatpush1.msra.mxu0 %v746
    %3530 = vmatprep.subr.mxu0 %v743
    %3531 = vmatpush1.msra.mxu0 %v742
    %3532 = vmatprep.subr.mxu0 %v739
    %3533 = vmatpush1.msra.mxu0 %v738
    %3534 = vmatprep.subr.mxu0 %v735
    %3535 = vmatpush1.msra.mxu0 %v734
    %3536 = vmatprep.subr.mxu0 %v731
    %3537 = vmatpush1.msra.mxu0 %v730
    %3538 = vmatprep.subr.mxu0 %v727
    %3539 = vmatpush1.msra.mxu0 %v726
    %3540 = vmatprep.subr.mxu0 %v723
    %3541 = vmatpush1.msra.mxu0 %v722
    %3542 = vmatprep.subr.mxu0 %v719
    %3543 = vmatpush1.msra.mxu0 %v718
    %3544 = vmatprep.subr.mxu0 %v715
    %3545 = vmatpush1.msra.mxu0 %v714
    %3546 = vmatprep.subr.mxu0 %v711
    %3547 = vmatpush1.msra.mxu0 %v710
    %3548 = vmatprep.subr.mxu0 0.0
    %3549 = vmatpush2.msra.mxu0 0.0
    %3550 = vmatprep.subr.mxu0 0.0
    %3551 = vmatpush2.msra.mxu0 0.0
    %3552 = vmatprep.subr.mxu0 0.0
    %3553 = vmatpush2.msra.mxu0 0.0
    %3554 = vmatprep.subr.mxu0 0.0
    %3555 = vmatpush2.msra.mxu0 0.0
    %3556 = vmatprep.subr.mxu0 0.0
    %3557 = vmatpush2.msra.mxu0 0.0
    %3558 = vmatprep.subr.mxu0 0.0
    %3559 = vmatpush2.msra.mxu0 0.0
    %3560 = vmatprep.subr.mxu0 0.0
    %3561 = vmatpush2.msra.mxu0 0.0
    %3562 = vmatprep.subr.mxu0 0.0
    %3563 = vmatpush2.msra.mxu0 0.0
    %3564 = vmatprep.subr.mxu0 0.0
    %3565 = vmatpush2.msra.mxu0 0.0
    %3566 = vmatprep.subr.mxu0 0.0
    %3567 = vmatpush2.msra.mxu0 0.0
    %3568 = vmatprep.subr.mxu0 0.0
    %3569 = vmatpush2.msra.mxu0 0.0
    %3570 = vmatprep.subr.mxu0 0.0
    %3571 = vmatpush2.msra.mxu0 0.0
    %3572 = vmatprep.subr.mxu0 0.0
    %3573 = vmatpush2.msra.mxu0 0.0
    %3574 = vmatprep.subr.mxu0 0.0
    %3575 = vmatpush2.msra.mxu0 0.0
    %3576 = vmatprep.subr.mxu0 0.0
    %3577 = vmatpush2.msra.mxu0 0.0
    %3578 = vmatprep.subr.mxu0 0.0
    %3579 = vmatpush2.msra.mxu0 0.0
    %3580 = vmatprep.mubr.f32.mxu0 0.0
    %3581 = vmatmul.mubr.f32.gmra.mxu0 %v3302
    %v3582 = vpop.f32.mrf.mxu0
    %v3583 = vadd.f32 %v3441, %v3582
    %v3584 = vpop.f32.mrf.mxu0
    %v3585 = vadd.f32 %v3443, %v3584
    %3586 = vdwg.mxu0
    %v3587 = vadd.f32 %v3512, %v1125
    %v3588 = vadd.f32 %v3514, %v1129
    %v3589 = vadd.f32 %v3583, %v1133
    %v3590 = vadd.f32 %v3585, %v1137
    %v3591 = vxor.u32 %v3587, 2147483648
    %v3592 = vxor.u32 %v3588, 2147483648
    %v3593 = vxor.u32 %v3589, 2147483648
    %v3594 = vmul.f32 %v3591, 1.442695
    %v3595 = vpow.pop %v3594
    %v3596 = vmul.f32 %v3592, 1.442695
    %v3597 = vpow.pop %v3596
    %v3598 = vmul.f32 %v3593, 1.442695
    %v3599 = vpow.pop %v3598
    %v3600 = vadd.f32 %v3595, 1.0
    %v3601 = vadd.f32 %v3597, 1.0
    %v3602 = vadd.f32 %v3599, 1.0
    %v3603 = vrcp.pop %v3600
    %v3604 = vmul.f32 1.0, %v3603
    %v3605 = vrcp.pop %v3601
    %v3606 = vmul.f32 1.0, %v3605
    %v3607 = vrcp.pop %v3602
    %v3608 = vmul.f32 1.0, %v3607
    %v3609 = vtanh.pop %v3590
    %v3610 = vmul.f32 %v3606, %v3123
    %v3611 = vmul.f32 %v3604, %v3609
    %v3612 = vadd.f32 %v3610, %v3611
    %v3613 = vtanh.pop %v3612
    %v3614 = vmul.f32 %v3608, %v3613
    %s3615 = smul.u32 6, 4
    %s3616 = smul.addr %s3615, 8
    %s3617 = scalar_lea.vmem [#allocation2], %s3616
    %v3618 = vld [vmem:[%s3617] sm:$0xff]
    %v3619 = vld [vmem:[%s3617 + $0x8] sm:$0xff]
    %v3620 = vld [vmem:[%s3617 + $0x10] sm:$0xff]
    %v3621 = vld [vmem:[%s3617 + $0x18] sm:$0xff]
    %3622 = vmatprep.subr.mxu0 %v535
    %3623 = vmatpush1.msra.mxu0 %v534
    %3624 = vmatprep.subr.mxu0 %v531
    %3625 = vmatpush1.msra.mxu0 %v530
    %3626 = vmatprep.subr.mxu0 %v527
    %3627 = vmatpush1.msra.mxu0 %v526
    %3628 = vmatprep.subr.mxu0 %v523
    %3629 = vmatpush1.msra.mxu0 %v522
    %3630 = vmatprep.subr.mxu0 %v519
    %3631 = vmatpush1.msra.mxu0 %v518
    %3632 = vmatprep.subr.mxu0 %v515
    %3633 = vmatpush1.msra.mxu0 %v514
    %3634 = vmatprep.subr.mxu0 %v511
    %3635 = vmatpush1.msra.mxu0 %v510
    %3636 = vmatprep.subr.mxu0 %v507
    %3637 = vmatpush1.msra.mxu0 %v506
    %3638 = vmatprep.subr.mxu0 %v503
    %3639 = vmatpush1.msra.mxu0 %v502
    %3640 = vmatprep.subr.mxu0 %v499
    %3641 = vmatpush1.msra.mxu0 %v498
    %3642 = vmatprep.subr.mxu0 %v495
    %3643 = vmatpush1.msra.mxu0 %v494
    %3644 = vmatprep.subr.mxu0 %v491
    %3645 = vmatpush1.msra.mxu0 %v490
    %3646 = vmatprep.subr.mxu0 %v487
    %3647 = vmatpush1.msra.mxu0 %v486
    %3648 = vmatprep.subr.mxu0 %v483
    %3649 = vmatpush1.msra.mxu0 %v482
    %3650 = vmatprep.subr.mxu0 %v479
    %3651 = vmatpush1.msra.mxu0 %v478
    %3652 = vmatprep.subr.mxu0 %v475
    %3653 = vmatpush1.msra.mxu0 %v474
    %3654 = vmatprep.subr.mxu0 0.0
    %3655 = vmatpush2.msra.mxu0 0.0
    %3656 = vmatprep.subr.mxu0 0.0
    %3657 = vmatpush2.msra.mxu0 0.0
    %3658 = vmatprep.subr.mxu0 0.0
    %3659 = vmatpush2.msra.mxu0 0.0
    %3660 = vmatprep.subr.mxu0 0.0
    %3661 = vmatpush2.msra.mxu0 0.0
    %3662 = vmatprep.subr.mxu0 0.0
    %3663 = vmatpush2.msra.mxu0 0.0
    %3664 = vmatprep.subr.mxu0 0.0
    %3665 = vmatpush2.msra.mxu0 0.0
    %3666 = vmatprep.subr.mxu0 0.0
    %3667 = vmatpush2.msra.mxu0 0.0
    %3668 = vmatprep.subr.mxu0 0.0
    %3669 = vmatpush2.msra.mxu0 0.0
    %3670 = vmatprep.subr.mxu0 0.0
    %3671 = vmatpush2.msra.mxu0 0.0
    %3672 = vmatprep.subr.mxu0 0.0
    %3673 = vmatpush2.msra.mxu0 0.0
    %3674 = vmatprep.subr.mxu0 0.0
    %3675 = vmatpush2.msra.mxu0 0.0
    %3676 = vmatprep.subr.mxu0 0.0
    %3677 = vmatpush2.msra.mxu0 0.0
    %3678 = vmatprep.subr.mxu0 0.0
    %3679 = vmatpush2.msra.mxu0 0.0
    %3680 = vmatprep.subr.mxu0 0.0
    %3681 = vmatpush2.msra.mxu0 0.0
    %3682 = vmatprep.subr.mxu0 0.0
    %3683 = vmatpush2.msra.mxu0 0.0
    %3684 = vmatprep.subr.mxu0 0.0
    %3685 = vmatpush2.msra.mxu0 0.0
    %3686 = vmatprep.mubr.f32.mxu0 0.0
    %3687 = vmatmul.mubr.f32.gmra.mxu0 %v3302
    %v3688 = vpop.f32.mrf.mxu0
    %v3689 = vadd.f32 0.0, %v3688
    %v3690 = vpop.f32.mrf.mxu0
    %v3691 = vadd.f32 0.0, %v3690
    %3692 = vdwg.mxu0
    %3693 = vmatprep.subr.mxu0 %v537
    %3694 = vmatpush1.msra.mxu0 %v536
    %3695 = vmatprep.subr.mxu0 %v533
    %3696 = vmatpush1.msra.mxu0 %v532
    %3697 = vmatprep.subr.mxu0 %v529
    %3698 = vmatpush1.msra.mxu0 %v528
    %3699 = vmatprep.subr.mxu0 %v525
    %3700 = vmatpush1.msra.mxu0 %v524
    %3701 = vmatprep.subr.mxu0 %v521
    %3702 = vmatpush1.msra.mxu0 %v520
    %3703 = vmatprep.subr.mxu0 %v517
    %3704 = vmatpush1.msra.mxu0 %v516
    %3705 = vmatprep.subr.mxu0 %v513
    %3706 = vmatpush1.msra.mxu0 %v512
    %3707 = vmatprep.subr.mxu0 %v509
    %3708 = vmatpush1.msra.mxu0 %v508
    %3709 = vmatprep.subr.mxu0 %v505
    %3710 = vmatpush1.msra.mxu0 %v504
    %3711 = vmatprep.subr.mxu0 %v501
    %3712 = vmatpush1.msra.mxu0 %v500
    %3713 = vmatprep.subr.mxu0 %v497
    %3714 = vmatpush1.msra.mxu0 %v496
    %3715 = vmatprep.subr.mxu0 %v493
    %3716 = vmatpush1.msra.mxu0 %v492
    %3717 = vmatprep.subr.mxu0 %v489
    %3718 = vmatpush1.msra.mxu0 %v488
    %3719 = vmatprep.subr.mxu0 %v485
    %3720 = vmatpush1.msra.mxu0 %v484
    %3721 = vmatprep.subr.mxu0 %v481
    %3722 = vmatpush1.msra.mxu0 %v480
    %3723 = vmatprep.subr.mxu0 %v477
    %3724 = vmatpush1.msra.mxu0 %v476
    %3725 = vmatprep.subr.mxu0 0.0
    %3726 = vmatpush2.msra.mxu0 0.0
    %3727 = vmatprep.subr.mxu0 0.0
    %3728 = vmatpush2.msra.mxu0 0.0
    %3729 = vmatprep.subr.mxu0 0.0
    %3730 = vmatpush2.msra.mxu0 0.0
    %3731 = vmatprep.subr.mxu0 0.0
    %3732 = vmatpush2.msra.mxu0 0.0
    %3733 = vmatprep.subr.mxu0 0.0
    %3734 = vmatpush2.msra.mxu0 0.0
    %3735 = vmatprep.subr.mxu0 0.0
    %3736 = vmatpush2.msra.mxu0 0.0
    %3737 = vmatprep.subr.mxu0 0.0
    %3738 = vmatpush2.msra.mxu0 0.0
    %3739 = vmatprep.subr.mxu0 0.0
    %3740 = vmatpush2.msra.mxu0 0.0
    %3741 = vmatprep.subr.mxu0 0.0
    %3742 = vmatpush2.msra.mxu0 0.0
    %3743 = vmatprep.subr.mxu0 0.0
    %3744 = vmatpush2.msra.mxu0 0.0
    %3745 = vmatprep.subr.mxu0 0.0
    %3746 = vmatpush2.msra.mxu0 0.0
    %3747 = vmatprep.subr.mxu0 0.0
    %3748 = vmatpush2.msra.mxu0 0.0
    %3749 = vmatprep.subr.mxu0 0.0
    %3750 = vmatpush2.msra.mxu0 0.0
    %3751 = vmatprep.subr.mxu0 0.0
    %3752 = vmatpush2.msra.mxu0 0.0
    %3753 = vmatprep.subr.mxu0 0.0
    %3754 = vmatpush2.msra.mxu0 0.0
    %3755 = vmatprep.subr.mxu0 0.0
    %3756 = vmatpush2.msra.mxu0 0.0
    %3757 = vmatprep.mubr.f32.mxu0 0.0
    %3758 = vmatmul.mubr.f32.gmra.mxu0 %v3302
    %v3759 = vpop.f32.mrf.mxu0
    %v3760 = vadd.f32 0.0, %v3759
    %v3761 = vpop.f32.mrf.mxu0
    %v3762 = vadd.f32 0.0, %v3761
    %3763 = vdwg.mxu0
    %v3764 = vadd.f32 %v3618, %v3689
    %v3765 = vadd.f32 %v3619, %v3691
    %v3766 = vadd.f32 %v3620, %v3760
    %v3767 = vadd.f32 %v3621, %v3762
    %v3768 = vxor.u32 %v3764, 2147483648
    %v3769 = vxor.u32 %v3765, 2147483648
    %v3770 = vxor.u32 %v3766, 2147483648
    %v3771 = vmul.f32 %v3768, 1.442695
    %v3772 = vpow.pop %v3771
    %v3773 = vmul.f32 %v3769, 1.442695
    %v3774 = vpow.pop %v3773
    %v3775 = vmul.f32 %v3770, 1.442695
    %v3776 = vpow.pop %v3775
    %v3777 = vadd.f32 %v3772, 1.0
    %v3778 = vadd.f32 %v3774, 1.0
    %v3779 = vadd.f32 %v3776, 1.0
    %v3780 = vrcp.pop %v3777
    %v3781 = vmul.f32 1.0, %v3780
    %v3782 = vrcp.pop %v3778
    %v3783 = vmul.f32 1.0, %v3782
    %v3784 = vrcp.pop %v3779
    %v3785 = vmul.f32 1.0, %v3784
    %v3786 = vtanh.pop %v3767
    %v3787 = vmul.f32 %v3783, %v3300
    %v3788 = vmul.f32 %v3781, %v3786
    %v3789 = vadd.f32 %v3787, %v3788
    %v3790 = vtanh.pop %v3789
    %v3791 = vmul.f32 %v3785, %v3790
    %3792 = vmatprep.subr.mxu0 %v833
    %3793 = vmatpush1.msra.mxu0 %v832
    %3794 = vmatprep.subr.mxu0 %v829
    %3795 = vmatpush1.msra.mxu0 %v828
    %3796 = vmatprep.subr.mxu0 %v825
    %3797 = vmatpush1.msra.mxu0 %v824
    %3798 = vmatprep.subr.mxu0 %v821
    %3799 = vmatpush1.msra.mxu0 %v820
    %3800 = vmatprep.subr.mxu0 %v817
    %3801 = vmatpush1.msra.mxu0 %v816
    %3802 = vmatprep.subr.mxu0 %v813
    %3803 = vmatpush1.msra.mxu0 %v812
    %3804 = vmatprep.subr.mxu0 %v809
    %3805 = vmatpush1.msra.mxu0 %v808
    %3806 = vmatprep.subr.mxu0 %v805
    %3807 = vmatpush1.msra.mxu0 %v804
    %3808 = vmatprep.subr.mxu0 %v801
    %3809 = vmatpush1.msra.mxu0 %v800
    %3810 = vmatprep.subr.mxu0 %v797
    %3811 = vmatpush1.msra.mxu0 %v796
    %3812 = vmatprep.subr.mxu0 %v793
    %3813 = vmatpush1.msra.mxu0 %v792
    %3814 = vmatprep.subr.mxu0 %v789
    %3815 = vmatpush1.msra.mxu0 %v788
    %3816 = vmatprep.subr.mxu0 %v785
    %3817 = vmatpush1.msra.mxu0 %v784
    %3818 = vmatprep.subr.mxu0 %v781
    %3819 = vmatpush1.msra.mxu0 %v780
    %3820 = vmatprep.subr.mxu0 %v777
    %3821 = vmatpush1.msra.mxu0 %v776
    %3822 = vmatprep.subr.mxu0 %v773
    %3823 = vmatpush1.msra.mxu0 %v772
    %3824 = vmatprep.subr.mxu0 0.0
    %3825 = vmatpush2.msra.mxu0 0.0
    %3826 = vmatprep.subr.mxu0 0.0
    %3827 = vmatpush2.msra.mxu0 0.0
    %3828 = vmatprep.subr.mxu0 0.0
    %3829 = vmatpush2.msra.mxu0 0.0
    %3830 = vmatprep.subr.mxu0 0.0
    %3831 = vmatpush2.msra.mxu0 0.0
    %3832 = vmatprep.subr.mxu0 0.0
    %3833 = vmatpush2.msra.mxu0 0.0
    %3834 = vmatprep.subr.mxu0 0.0
    %3835 = vmatpush2.msra.mxu0 0.0
    %3836 = vmatprep.subr.mxu0 0.0
    %3837 = vmatpush2.msra.mxu0 0.0
    %3838 = vmatprep.subr.mxu0 0.0
    %3839 = vmatpush2.msra.mxu0 0.0
    %3840 = vmatprep.subr.mxu0 0.0
    %3841 = vmatpush2.msra.mxu0 0.0
    %3842 = vmatprep.subr.mxu0 0.0
    %3843 = vmatpush2.msra.mxu0 0.0
    %3844 = vmatprep.subr.mxu0 0.0
    %3845 = vmatpush2.msra.mxu0 0.0
    %3846 = vmatprep.subr.mxu0 0.0
    %3847 = vmatpush2.msra.mxu0 0.0
    %3848 = vmatprep.subr.mxu0 0.0
    %3849 = vmatpush2.msra.mxu0 0.0
    %3850 = vmatprep.subr.mxu0 0.0
    %3851 = vmatpush2.msra.mxu0 0.0
    %3852 = vmatprep.subr.mxu0 0.0
    %3853 = vmatpush2.msra.mxu0 0.0
    %3854 = vmatprep.subr.mxu0 0.0
    %3855 = vmatpush2.msra.mxu0 0.0
    %3856 = vmatprep.mubr.f32.mxu0 0.0
    %3857 = vmatmul.mubr.f32.gmra.mxu0 %v3614
    %v3858 = vpop.f32.mrf.mxu0
    %v3859 = vadd.f32 0.0, %v3858
    %v3860 = vpop.f32.mrf.mxu0
    %v3861 = vadd.f32 0.0, %v3860
    %3862 = vdwg.mxu0
    %3863 = vmatprep.subr.mxu0 %v835
    %3864 = vmatpush1.msra.mxu0 %v834
    %3865 = vmatprep.subr.mxu0 %v831
    %3866 = vmatpush1.msra.mxu0 %v830
    %3867 = vmatprep.subr.mxu0 %v827
    %3868 = vmatpush1.msra.mxu0 %v826
    %3869 = vmatprep.subr.mxu0 %v823
    %3870 = vmatpush1.msra.mxu0 %v822
    %3871 = vmatprep.subr.mxu0 %v819
    %3872 = vmatpush1.msra.mxu0 %v818
    %3873 = vmatprep.subr.mxu0 %v815
    %3874 = vmatpush1.msra.mxu0 %v814
    %3875 = vmatprep.subr.mxu0 %v811
    %3876 = vmatpush1.msra.mxu0 %v810
    %3877 = vmatprep.subr.mxu0 %v807
    %3878 = vmatpush1.msra.mxu0 %v806
    %3879 = vmatprep.subr.mxu0 %v803
    %3880 = vmatpush1.msra.mxu0 %v802
    %3881 = vmatprep.subr.mxu0 %v799
    %3882 = vmatpush1.msra.mxu0 %v798
    %3883 = vmatprep.subr.mxu0 %v795
    %3884 = vmatpush1.msra.mxu0 %v794
    %3885 = vmatprep.subr.mxu0 %v791
    %3886 = vmatpush1.msra.mxu0 %v790
    %3887 = vmatprep.subr.mxu0 %v787
    %3888 = vmatpush1.msra.mxu0 %v786
    %3889 = vmatprep.subr.mxu0 %v783
    %3890 = vmatpush1.msra.mxu0 %v782
    %3891 = vmatprep.subr.mxu0 %v779
    %3892 = vmatpush1.msra.mxu0 %v778
    %3893 = vmatprep.subr.mxu0 %v775
    %3894 = vmatpush1.msra.mxu0 %v774
    %3895 = vmatprep.subr.mxu0 0.0
    %3896 = vmatpush2.msra.mxu0 0.0
    %3897 = vmatprep.subr.mxu0 0.0
    %3898 = vmatpush2.msra.mxu0 0.0
    %3899 = vmatprep.subr.mxu0 0.0
    %3900 = vmatpush2.msra.mxu0 0.0
    %3901 = vmatprep.subr.mxu0 0.0
    %3902 = vmatpush2.msra.mxu0 0.0
    %3903 = vmatprep.subr.mxu0 0.0
    %3904 = vmatpush2.msra.mxu0 0.0
    %3905 = vmatprep.subr.mxu0 0.0
    %3906 = vmatpush2.msra.mxu0 0.0
    %3907 = vmatprep.subr.mxu0 0.0
    %3908 = vmatpush2.msra.mxu0 0.0
    %3909 = vmatprep.subr.mxu0 0.0
    %3910 = vmatpush2.msra.mxu0 0.0
    %3911 = vmatprep.subr.mxu0 0.0
    %3912 = vmatpush2.msra.mxu0 0.0
    %3913 = vmatprep.subr.mxu0 0.0
    %3914 = vmatpush2.msra.mxu0 0.0
    %3915 = vmatprep.subr.mxu0 0.0
    %3916 = vmatpush2.msra.mxu0 0.0
    %3917 = vmatprep.subr.mxu0 0.0
    %3918 = vmatpush2.msra.mxu0 0.0
    %3919 = vmatprep.subr.mxu0 0.0
    %3920 = vmatpush2.msra.mxu0 0.0
    %3921 = vmatprep.subr.mxu0 0.0
    %3922 = vmatpush2.msra.mxu0 0.0
    %3923 = vmatprep.subr.mxu0 0.0
    %3924 = vmatpush2.msra.mxu0 0.0
    %3925 = vmatprep.subr.mxu0 0.0
    %3926 = vmatpush2.msra.mxu0 0.0
    %3927 = vmatprep.mubr.f32.mxu0 0.0
    %3928 = vmatmul.mubr.f32.gmra.mxu0 %v3614
    %v3929 = vpop.f32.mrf.mxu0
    %v3930 = vadd.f32 0.0, %v3929
    %v3931 = vpop.f32.mrf.mxu0
    %v3932 = vadd.f32 0.0, %v3931
    %3933 = vdwg.mxu0
    %3934 = vmatprep.subr.mxu0 %v769
    %3935 = vmatpush1.msra.mxu0 %v768
    %3936 = vmatprep.subr.mxu0 %v765
    %3937 = vmatpush1.msra.mxu0 %v764
    %3938 = vmatprep.subr.mxu0 %v761
    %3939 = vmatpush1.msra.mxu0 %v760
    %3940 = vmatprep.subr.mxu0 %v757
    %3941 = vmatpush1.msra.mxu0 %v756
    %3942 = vmatprep.subr.mxu0 %v753
    %3943 = vmatpush1.msra.mxu0 %v752
    %3944 = vmatprep.subr.mxu0 %v749
    %3945 = vmatpush1.msra.mxu0 %v748
    %3946 = vmatprep.subr.mxu0 %v745
    %3947 = vmatpush1.msra.mxu0 %v744
    %3948 = vmatprep.subr.mxu0 %v741
    %3949 = vmatpush1.msra.mxu0 %v740
    %3950 = vmatprep.subr.mxu0 %v737
    %3951 = vmatpush1.msra.mxu0 %v736
    %3952 = vmatprep.subr.mxu0 %v733
    %3953 = vmatpush1.msra.mxu0 %v732
    %3954 = vmatprep.subr.mxu0 %v729
    %3955 = vmatpush1.msra.mxu0 %v728
    %3956 = vmatprep.subr.mxu0 %v725
    %3957 = vmatpush1.msra.mxu0 %v724
    %3958 = vmatprep.subr.mxu0 %v721
    %3959 = vmatpush1.msra.mxu0 %v720
    %3960 = vmatprep.subr.mxu0 %v717
    %3961 = vmatpush1.msra.mxu0 %v716
    %3962 = vmatprep.subr.mxu0 %v713
    %3963 = vmatpush1.msra.mxu0 %v712
    %3964 = vmatprep.subr.mxu0 %v709
    %3965 = vmatpush1.msra.mxu0 %v708
    %3966 = vmatprep.subr.mxu0 0.0
    %3967 = vmatpush2.msra.mxu0 0.0
    %3968 = vmatprep.subr.mxu0 0.0
    %3969 = vmatpush2.msra.mxu0 0.0
    %3970 = vmatprep.subr.mxu0 0.0
    %3971 = vmatpush2.msra.mxu0 0.0
    %3972 = vmatprep.subr.mxu0 0.0
    %3973 = vmatpush2.msra.mxu0 0.0
    %3974 = vmatprep.subr.mxu0 0.0
    %3975 = vmatpush2.msra.mxu0 0.0
    %3976 = vmatprep.subr.mxu0 0.0
    %3977 = vmatpush2.msra.mxu0 0.0
    %3978 = vmatprep.subr.mxu0 0.0
    %3979 = vmatpush2.msra.mxu0 0.0
    %3980 = vmatprep.subr.mxu0 0.0
    %3981 = vmatpush2.msra.mxu0 0.0
    %3982 = vmatprep.subr.mxu0 0.0
    %3983 = vmatpush2.msra.mxu0 0.0
    %3984 = vmatprep.subr.mxu0 0.0
    %3985 = vmatpush2.msra.mxu0 0.0
    %3986 = vmatprep.subr.mxu0 0.0
    %3987 = vmatpush2.msra.mxu0 0.0
    %3988 = vmatprep.subr.mxu0 0.0
    %3989 = vmatpush2.msra.mxu0 0.0
    %3990 = vmatprep.subr.mxu0 0.0
    %3991 = vmatpush2.msra.mxu0 0.0
    %3992 = vmatprep.subr.mxu0 0.0
    %3993 = vmatpush2.msra.mxu0 0.0
    %3994 = vmatprep.subr.mxu0 0.0
    %3995 = vmatpush2.msra.mxu0 0.0
    %3996 = vmatprep.subr.mxu0 0.0
    %3997 = vmatpush2.msra.mxu0 0.0
    %3998 = vmatprep.mubr.f32.mxu0 0.0
    %3999 = vmatmul.mubr.f32.gmra.mxu0 %v3791
    %v4000 = vpop.f32.mrf.mxu0
    %v4001 = vadd.f32 %v3859, %v4000
    %v4002 = vpop.f32.mrf.mxu0
    %v4003 = vadd.f32 %v3861, %v4002
    %4004 = vdwg.mxu0
    %4005 = vmatprep.subr.mxu0 %v771
    %4006 = vmatpush1.msra.mxu0 %v770
    %4007 = vmatprep.subr.mxu0 %v767
    %4008 = vmatpush1.msra.mxu0 %v766
    %4009 = vmatprep.subr.mxu0 %v763
    %4010 = vmatpush1.msra.mxu0 %v762
    %4011 = vmatprep.subr.mxu0 %v759
    %4012 = vmatpush1.msra.mxu0 %v758
    %4013 = vmatprep.subr.mxu0 %v755
    %4014 = vmatpush1.msra.mxu0 %v754
    %4015 = vmatprep.subr.mxu0 %v751
    %4016 = vmatpush1.msra.mxu0 %v750
    %4017 = vmatprep.subr.mxu0 %v747
    %4018 = vmatpush1.msra.mxu0 %v746
    %4019 = vmatprep.subr.mxu0 %v743
    %4020 = vmatpush1.msra.mxu0 %v742
    %4021 = vmatprep.subr.mxu0 %v739
    %4022 = vmatpush1.msra.mxu0 %v738
    %4023 = vmatprep.subr.mxu0 %v735
    %4024 = vmatpush1.msra.mxu0 %v734
    %4025 = vmatprep.subr.mxu0 %v731
    %4026 = vmatpush1.msra.mxu0 %v730
    %4027 = vmatprep.subr.mxu0 %v727
    %4028 = vmatpush1.msra.mxu0 %v726
    %4029 = vmatprep.subr.mxu0 %v723
    %4030 = vmatpush1.msra.mxu0 %v722
    %4031 = vmatprep.subr.mxu0 %v719
    %4032 = vmatpush1.msra.mxu0 %v718
    %4033 = vmatprep.subr.mxu0 %v715
    %4034 = vmatpush1.msra.mxu0 %v714
    %4035 = vmatprep.subr.mxu0 %v711
    %4036 = vmatpush1.msra.mxu0 %v710
    %4037 = vmatprep.subr.mxu0 0.0
    %4038 = vmatpush2.msra.mxu0 0.0
    %4039 = vmatprep.subr.mxu0 0.0
    %4040 = vmatpush2.msra.mxu0 0.0
    %4041 = vmatprep.subr.mxu0 0.0
    %4042 = vmatpush2.msra.mxu0 0.0
    %4043 = vmatprep.subr.mxu0 0.0
    %4044 = vmatpush2.msra.mxu0 0.0
    %4045 = vmatprep.subr.mxu0 0.0
    %4046 = vmatpush2.msra.mxu0 0.0
    %4047 = vmatprep.subr.mxu0 0.0
    %4048 = vmatpush2.msra.mxu0 0.0
    %4049 = vmatprep.subr.mxu0 0.0
    %4050 = vmatpush2.msra.mxu0 0.0
    %4051 = vmatprep.subr.mxu0 0.0
    %4052 = vmatpush2.msra.mxu0 0.0
    %4053 = vmatprep.subr.mxu0 0.0
    %4054 = vmatpush2.msra.mxu0 0.0
    %4055 = vmatprep.subr.mxu0 0.0
    %4056 = vmatpush2.msra.mxu0 0.0
    %4057 = vmatprep.subr.mxu0 0.0
    %4058 = vmatpush2.msra.mxu0 0.0
    %4059 = vmatprep.subr.mxu0 0.0
    %4060 = vmatpush2.msra.mxu0 0.0
    %4061 = vmatprep.subr.mxu0 0.0
    %4062 = vmatpush2.msra.mxu0 0.0
    %4063 = vmatprep.subr.mxu0 0.0
    %4064 = vmatpush2.msra.mxu0 0.0
    %4065 = vmatprep.subr.mxu0 0.0
    %4066 = vmatpush2.msra.mxu0 0.0
    %4067 = vmatprep.subr.mxu0 0.0
    %4068 = vmatpush2.msra.mxu0 0.0
    %4069 = vmatprep.mubr.f32.mxu0 0.0
    %4070 = vmatmul.mubr.f32.gmra.mxu0 %v3791
    %v4071 = vpop.f32.mrf.mxu0
    %v4072 = vadd.f32 %v3930, %v4071
    %v4073 = vpop.f32.mrf.mxu0
    %v4074 = vadd.f32 %v3932, %v4073
    %4075 = vdwg.mxu0
    %v4076 = vadd.f32 %v4001, %v1125
    %v4077 = vadd.f32 %v4003, %v1129
    %v4078 = vadd.f32 %v4072, %v1133
    %v4079 = vadd.f32 %v4074, %v1137
    %v4080 = vxor.u32 %v4076, 2147483648
    %v4081 = vxor.u32 %v4077, 2147483648
    %v4082 = vxor.u32 %v4078, 2147483648
    %v4083 = vmul.f32 %v4080, 1.442695
    %v4084 = vpow.pop %v4083
    %v4085 = vmul.f32 %v4081, 1.442695
    %v4086 = vpow.pop %v4085
    %v4087 = vmul.f32 %v4082, 1.442695
    %v4088 = vpow.pop %v4087
    %v4089 = vadd.f32 %v4084, 1.0
    %v4090 = vadd.f32 %v4086, 1.0
    %v4091 = vadd.f32 %v4088, 1.0
    %v4092 = vrcp.pop %v4089
    %v4093 = vmul.f32 1.0, %v4092
    %v4094 = vrcp.pop %v4090
    %v4095 = vmul.f32 1.0, %v4094
    %v4096 = vrcp.pop %v4091
    %v4097 = vmul.f32 1.0, %v4096
    %v4098 = vtanh.pop %v4079
    %v4099 = vmul.f32 %v4095, %v3612
    %v4100 = vmul.f32 %v4093, %v4098
    %v4101 = vadd.f32 %v4099, %v4100
    %v4102 = vtanh.pop %v4101
    %v4103 = vmul.f32 %v4097, %v4102
    %s4104 = smul.u32 7, 4
    %s4105 = smul.addr %s4104, 8
    %s4106 = scalar_lea.vmem [#allocation2], %s4105
    %v4107 = vld [vmem:[%s4106] sm:$0xff]
    %v4108 = vld [vmem:[%s4106 + $0x8] sm:$0xff]
    %v4109 = vld [vmem:[%s4106 + $0x10] sm:$0xff]
    %v4110 = vld [vmem:[%s4106 + $0x18] sm:$0xff]
    %4111 = vmatprep.subr.mxu0 %v535
    %4112 = vmatpush1.msra.mxu0 %v534
    %4113 = vmatprep.subr.mxu0 %v531
    %4114 = vmatpush1.msra.mxu0 %v530
    %4115 = vmatprep.subr.mxu0 %v527
    %4116 = vmatpush1.msra.mxu0 %v526
    %4117 = vmatprep.subr.mxu0 %v523
    %4118 = vmatpush1.msra.mxu0 %v522
    %4119 = vmatprep.subr.mxu0 %v519
    %4120 = vmatpush1.msra.mxu0 %v518
    %4121 = vmatprep.subr.mxu0 %v515
    %4122 = vmatpush1.msra.mxu0 %v514
    %4123 = vmatprep.subr.mxu0 %v511
    %4124 = vmatpush1.msra.mxu0 %v510
    %4125 = vmatprep.subr.mxu0 %v507
    %4126 = vmatpush1.msra.mxu0 %v506
    %4127 = vmatprep.subr.mxu0 %v503
    %4128 = vmatpush1.msra.mxu0 %v502
    %4129 = vmatprep.subr.mxu0 %v499
    %4130 = vmatpush1.msra.mxu0 %v498
    %4131 = vmatprep.subr.mxu0 %v495
    %4132 = vmatpush1.msra.mxu0 %v494
    %4133 = vmatprep.subr.mxu0 %v491
    %4134 = vmatpush1.msra.mxu0 %v490
    %4135 = vmatprep.subr.mxu0 %v487
    %4136 = vmatpush1.msra.mxu0 %v486
    %4137 = vmatprep.subr.mxu0 %v483
    %4138 = vmatpush1.msra.mxu0 %v482
    %4139 = vmatprep.subr.mxu0 %v479
    %4140 = vmatpush1.msra.mxu0 %v478
    %4141 = vmatprep.subr.mxu0 %v475
    %4142 = vmatpush1.msra.mxu0 %v474
    %4143 = vmatprep.subr.mxu0 0.0
    %4144 = vmatpush2.msra.mxu0 0.0
    %4145 = vmatprep.subr.mxu0 0.0
    %4146 = vmatpush2.msra.mxu0 0.0
    %4147 = vmatprep.subr.mxu0 0.0
    %4148 = vmatpush2.msra.mxu0 0.0
    %4149 = vmatprep.subr.mxu0 0.0
    %4150 = vmatpush2.msra.mxu0 0.0
    %4151 = vmatprep.subr.mxu0 0.0
    %4152 = vmatpush2.msra.mxu0 0.0
    %4153 = vmatprep.subr.mxu0 0.0
    %4154 = vmatpush2.msra.mxu0 0.0
    %4155 = vmatprep.subr.mxu0 0.0
    %4156 = vmatpush2.msra.mxu0 0.0
    %4157 = vmatprep.subr.mxu0 0.0
    %4158 = vmatpush2.msra.mxu0 0.0
    %4159 = vmatprep.subr.mxu0 0.0
    %4160 = vmatpush2.msra.mxu0 0.0
    %4161 = vmatprep.subr.mxu0 0.0
    %4162 = vmatpush2.msra.mxu0 0.0
    %4163 = vmatprep.subr.mxu0 0.0
    %4164 = vmatpush2.msra.mxu0 0.0
    %4165 = vmatprep.subr.mxu0 0.0
    %4166 = vmatpush2.msra.mxu0 0.0
    %4167 = vmatprep.subr.mxu0 0.0
    %4168 = vmatpush2.msra.mxu0 0.0
    %4169 = vmatprep.subr.mxu0 0.0
    %4170 = vmatpush2.msra.mxu0 0.0
    %4171 = vmatprep.subr.mxu0 0.0
    %4172 = vmatpush2.msra.mxu0 0.0
    %4173 = vmatprep.subr.mxu0 0.0
    %4174 = vmatpush2.msra.mxu0 0.0
    %4175 = vmatprep.mubr.f32.mxu0 0.0
    %4176 = vmatmul.mubr.f32.gmra.mxu0 %v3791
    %v4177 = vpop.f32.mrf.mxu0
    %v4178 = vadd.f32 0.0, %v4177
    %v4179 = vpop.f32.mrf.mxu0
    %v4180 = vadd.f32 0.0, %v4179
    %4181 = vdwg.mxu0
    %4182 = vmatprep.subr.mxu0 %v537
    %4183 = vmatpush1.msra.mxu0 %v536
    %4184 = vmatprep.subr.mxu0 %v533
    %4185 = vmatpush1.msra.mxu0 %v532
    %4186 = vmatprep.subr.mxu0 %v529
    %4187 = vmatpush1.msra.mxu0 %v528
    %4188 = vmatprep.subr.mxu0 %v525
    %4189 = vmatpush1.msra.mxu0 %v524
    %4190 = vmatprep.subr.mxu0 %v521
    %4191 = vmatpush1.msra.mxu0 %v520
    %4192 = vmatprep.subr.mxu0 %v517
    %4193 = vmatpush1.msra.mxu0 %v516
    %4194 = vmatprep.subr.mxu0 %v513
    %4195 = vmatpush1.msra.mxu0 %v512
    %4196 = vmatprep.subr.mxu0 %v509
    %4197 = vmatpush1.msra.mxu0 %v508
    %4198 = vmatprep.subr.mxu0 %v505
    %4199 = vmatpush1.msra.mxu0 %v504
    %4200 = vmatprep.subr.mxu0 %v501
    %4201 = vmatpush1.msra.mxu0 %v500
    %4202 = vmatprep.subr.mxu0 %v497
    %4203 = vmatpush1.msra.mxu0 %v496
    %4204 = vmatprep.subr.mxu0 %v493
    %4205 = vmatpush1.msra.mxu0 %v492
    %4206 = vmatprep.subr.mxu0 %v489
    %4207 = vmatpush1.msra.mxu0 %v488
    %4208 = vmatprep.subr.mxu0 %v485
    %4209 = vmatpush1.msra.mxu0 %v484
    %4210 = vmatprep.subr.mxu0 %v481
    %4211 = vmatpush1.msra.mxu0 %v480
    %4212 = vmatprep.subr.mxu0 %v477
    %4213 = vmatpush1.msra.mxu0 %v476
    %4214 = vmatprep.subr.mxu0 0.0
    %4215 = vmatpush2.msra.mxu0 0.0
    %4216 = vmatprep.subr.mxu0 0.0
    %4217 = vmatpush2.msra.mxu0 0.0
    %4218 = vmatprep.subr.mxu0 0.0
    %4219 = vmatpush2.msra.mxu0 0.0
    %4220 = vmatprep.subr.mxu0 0.0
    %4221 = vmatpush2.msra.mxu0 0.0
    %4222 = vmatprep.subr.mxu0 0.0
    %4223 = vmatpush2.msra.mxu0 0.0
    %4224 = vmatprep.subr.mxu0 0.0
    %4225 = vmatpush2.msra.mxu0 0.0
    %4226 = vmatprep.subr.mxu0 0.0
    %4227 = vmatpush2.msra.mxu0 0.0
    %4228 = vmatprep.subr.mxu0 0.0
    %4229 = vmatpush2.msra.mxu0 0.0
    %4230 = vmatprep.subr.mxu0 0.0
    %4231 = vmatpush2.msra.mxu0 0.0
    %4232 = vmatprep.subr.mxu0 0.0
    %4233 = vmatpush2.msra.mxu0 0.0
    %4234 = vmatprep.subr.mxu0 0.0
    %4235 = vmatpush2.msra.mxu0 0.0
    %4236 = vmatprep.subr.mxu0 0.0
    %4237 = vmatpush2.msra.mxu0 0.0
    %4238 = vmatprep.subr.mxu0 0.0
    %4239 = vmatpush2.msra.mxu0 0.0
    %4240 = vmatprep.subr.mxu0 0.0
    %4241 = vmatpush2.msra.mxu0 0.0
    %4242 = vmatprep.subr.mxu0 0.0
    %4243 = vmatpush2.msra.mxu0 0.0
    %4244 = vmatprep.subr.mxu0 0.0
    %4245 = vmatpush2.msra.mxu0 0.0
    %4246 = vmatprep.mubr.f32.mxu0 0.0
    %4247 = vmatmul.mubr.f32.gmra.mxu0 %v3791
    %v4248 = vpop.f32.mrf.mxu0
    %v4249 = vadd.f32 0.0, %v4248
    %v4250 = vpop.f32.mrf.mxu0
    %v4251 = vadd.f32 0.0, %v4250
    %4252 = vdwg.mxu0
    %v4253 = vadd.f32 %v4107, %v4178
    %v4254 = vadd.f32 %v4108, %v4180
    %v4255 = vadd.f32 %v4109, %v4249
    %v4256 = vadd.f32 %v4110, %v4251
    %v4257 = vxor.u32 %v4253, 2147483648
    %v4258 = vxor.u32 %v4254, 2147483648
    %v4259 = vxor.u32 %v4255, 2147483648
    %v4260 = vmul.f32 %v4257, 1.442695
    %v4261 = vpow.pop %v4260
    %v4262 = vmul.f32 %v4258, 1.442695
    %v4263 = vpow.pop %v4262
    %v4264 = vmul.f32 %v4259, 1.442695
    %v4265 = vpow.pop %v4264
    %v4266 = vadd.f32 %v4261, 1.0
    %v4267 = vadd.f32 %v4263, 1.0
    %v4268 = vadd.f32 %v4265, 1.0
    %v4269 = vrcp.pop %v4266
    %v4270 = vmul.f32 1.0, %v4269
    %v4271 = vrcp.pop %v4267
    %v4272 = vmul.f32 1.0, %v4271
    %v4273 = vrcp.pop %v4268
    %v4274 = vmul.f32 1.0, %v4273
    %v4275 = vtanh.pop %v4256
    %v4276 = vmul.f32 %v4272, %v3789
    %v4277 = vmul.f32 %v4270, %v4275
    %v4278 = vadd.f32 %v4276, %v4277
    %v4279 = vtanh.pop %v4278
    %v4280 = vmul.f32 %v4274, %v4279
    %4281 = vmatprep.subr.mxu0 %v833
    %4282 = vmatpush1.msra.mxu0 %v832
    %4283 = vmatprep.subr.mxu0 %v829
    %4284 = vmatpush1.msra.mxu0 %v828
    %4285 = vmatprep.subr.mxu0 %v825
    %4286 = vmatpush1.msra.mxu0 %v824
    %4287 = vmatprep.subr.mxu0 %v821
    %4288 = vmatpush1.msra.mxu0 %v820
    %4289 = vmatprep.subr.mxu0 %v817
    %4290 = vmatpush1.msra.mxu0 %v816
    %4291 = vmatprep.subr.mxu0 %v813
    %4292 = vmatpush1.msra.mxu0 %v812
    %4293 = vmatprep.subr.mxu0 %v809
    %4294 = vmatpush1.msra.mxu0 %v808
    %4295 = vmatprep.subr.mxu0 %v805
    %4296 = vmatpush1.msra.mxu0 %v804
    %4297 = vmatprep.subr.mxu0 %v801
    %4298 = vmatpush1.msra.mxu0 %v800
    %4299 = vmatprep.subr.mxu0 %v797
    %4300 = vmatpush1.msra.mxu0 %v796
    %4301 = vmatprep.subr.mxu0 %v793
    %4302 = vmatpush1.msra.mxu0 %v792
    %4303 = vmatprep.subr.mxu0 %v789
    %4304 = vmatpush1.msra.mxu0 %v788
    %4305 = vmatprep.subr.mxu0 %v785
    %4306 = vmatpush1.msra.mxu0 %v784
    %4307 = vmatprep.subr.mxu0 %v781
    %4308 = vmatpush1.msra.mxu0 %v780
    %4309 = vmatprep.subr.mxu0 %v777
    %4310 = vmatpush1.msra.mxu0 %v776
    %4311 = vmatprep.subr.mxu0 %v773
    %4312 = vmatpush1.msra.mxu0 %v772
    %4313 = vmatprep.subr.mxu0 0.0
    %4314 = vmatpush2.msra.mxu0 0.0
    %4315 = vmatprep.subr.mxu0 0.0
    %4316 = vmatpush2.msra.mxu0 0.0
    %4317 = vmatprep.subr.mxu0 0.0
    %4318 = vmatpush2.msra.mxu0 0.0
    %4319 = vmatprep.subr.mxu0 0.0
    %4320 = vmatpush2.msra.mxu0 0.0
    %4321 = vmatprep.subr.mxu0 0.0
    %4322 = vmatpush2.msra.mxu0 0.0
    %4323 = vmatprep.subr.mxu0 0.0
    %4324 = vmatpush2.msra.mxu0 0.0
    %4325 = vmatprep.subr.mxu0 0.0
    %4326 = vmatpush2.msra.mxu0 0.0
    %4327 = vmatprep.subr.mxu0 0.0
    %4328 = vmatpush2.msra.mxu0 0.0
    %4329 = vmatprep.subr.mxu0 0.0
    %4330 = vmatpush2.msra.mxu0 0.0
    %4331 = vmatprep.subr.mxu0 0.0
    %4332 = vmatpush2.msra.mxu0 0.0
    %4333 = vmatprep.subr.mxu0 0.0
    %4334 = vmatpush2.msra.mxu0 0.0
    %4335 = vmatprep.subr.mxu0 0.0
    %4336 = vmatpush2.msra.mxu0 0.0
    %4337 = vmatprep.subr.mxu0 0.0
    %4338 = vmatpush2.msra.mxu0 0.0
    %4339 = vmatprep.subr.mxu0 0.0
    %4340 = vmatpush2.msra.mxu0 0.0
    %4341 = vmatprep.subr.mxu0 0.0
    %4342 = vmatpush2.msra.mxu0 0.0
    %4343 = vmatprep.subr.mxu0 0.0
    %4344 = vmatpush2.msra.mxu0 0.0
    %4345 = vmatprep.mubr.f32.mxu0 0.0
    %4346 = vmatmul.mubr.f32.gmra.mxu0 %v4103
    %v4347 = vpop.f32.mrf.mxu0
    %v4348 = vadd.f32 0.0, %v4347
    %v4349 = vpop.f32.mrf.mxu0
    %v4350 = vadd.f32 0.0, %v4349
    %4351 = vdwg.mxu0
    %4352 = vmatprep.subr.mxu0 %v835
    %4353 = vmatpush1.msra.mxu0 %v834
    %4354 = vmatprep.subr.mxu0 %v831
    %4355 = vmatpush1.msra.mxu0 %v830
    %4356 = vmatprep.subr.mxu0 %v827
    %4357 = vmatpush1.msra.mxu0 %v826
    %4358 = vmatprep.subr.mxu0 %v823
    %4359 = vmatpush1.msra.mxu0 %v822
    %4360 = vmatprep.subr.mxu0 %v819
    %4361 = vmatpush1.msra.mxu0 %v818
    %4362 = vmatprep.subr.mxu0 %v815
    %4363 = vmatpush1.msra.mxu0 %v814
    %4364 = vmatprep.subr.mxu0 %v811
    %4365 = vmatpush1.msra.mxu0 %v810
    %4366 = vmatprep.subr.mxu0 %v807
    %4367 = vmatpush1.msra.mxu0 %v806
    %4368 = vmatprep.subr.mxu0 %v803
    %4369 = vmatpush1.msra.mxu0 %v802
    %4370 = vmatprep.subr.mxu0 %v799
    %4371 = vmatpush1.msra.mxu0 %v798
    %4372 = vmatprep.subr.mxu0 %v795
    %4373 = vmatpush1.msra.mxu0 %v794
    %4374 = vmatprep.subr.mxu0 %v791
    %4375 = vmatpush1.msra.mxu0 %v790
    %4376 = vmatprep.subr.mxu0 %v787
    %4377 = vmatpush1.msra.mxu0 %v786
    %4378 = vmatprep.subr.mxu0 %v783
    %4379 = vmatpush1.msra.mxu0 %v782
    %4380 = vmatprep.subr.mxu0 %v779
    %4381 = vmatpush1.msra.mxu0 %v778
    %4382 = vmatprep.subr.mxu0 %v775
    %4383 = vmatpush1.msra.mxu0 %v774
    %4384 = vmatprep.subr.mxu0 0.0
    %4385 = vmatpush2.msra.mxu0 0.0
    %4386 = vmatprep.subr.mxu0 0.0
    %4387 = vmatpush2.msra.mxu0 0.0
    %4388 = vmatprep.subr.mxu0 0.0
    %4389 = vmatpush2.msra.mxu0 0.0
    %4390 = vmatprep.subr.mxu0 0.0
    %4391 = vmatpush2.msra.mxu0 0.0
    %4392 = vmatprep.subr.mxu0 0.0
    %4393 = vmatpush2.msra.mxu0 0.0
    %4394 = vmatprep.subr.mxu0 0.0
    %4395 = vmatpush2.msra.mxu0 0.0
    %4396 = vmatprep.subr.mxu0 0.0
    %4397 = vmatpush2.msra.mxu0 0.0
    %4398 = vmatprep.subr.mxu0 0.0
    %4399 = vmatpush2.msra.mxu0 0.0
    %4400 = vmatprep.subr.mxu0 0.0
    %4401 = vmatpush2.msra.mxu0 0.0
    %4402 = vmatprep.subr.mxu0 0.0
    %4403 = vmatpush2.msra.mxu0 0.0
    %4404 = vmatprep.subr.mxu0 0.0
    %4405 = vmatpush2.msra.mxu0 0.0
    %4406 = vmatprep.subr.mxu0 0.0
    %4407 = vmatpush2.msra.mxu0 0.0
    %4408 = vmatprep.subr.mxu0 0.0
    %4409 = vmatpush2.msra.mxu0 0.0
    %4410 = vmatprep.subr.mxu0 0.0
    %4411 = vmatpush2.msra.mxu0 0.0
    %4412 = vmatprep.subr.mxu0 0.0
    %4413 = vmatpush2.msra.mxu0 0.0
    %4414 = vmatprep.subr.mxu0 0.0
    %4415 = vmatpush2.msra.mxu0 0.0
    %4416 = vmatprep.mubr.f32.mxu0 0.0
    %4417 = vmatmul.mubr.f32.gmra.mxu0 %v4103
    %v4418 = vpop.f32.mrf.mxu0
    %v4419 = vadd.f32 0.0, %v4418
    %v4420 = vpop.f32.mrf.mxu0
    %v4421 = vadd.f32 0.0, %v4420
    %4422 = vdwg.mxu0
    %4423 = vmatprep.subr.mxu0 %v769
    %4424 = vmatpush1.msra.mxu0 %v768
    %4425 = vmatprep.subr.mxu0 %v765
    %4426 = vmatpush1.msra.mxu0 %v764
    %4427 = vmatprep.subr.mxu0 %v761
    %4428 = vmatpush1.msra.mxu0 %v760
    %4429 = vmatprep.subr.mxu0 %v757
    %4430 = vmatpush1.msra.mxu0 %v756
    %4431 = vmatprep.subr.mxu0 %v753
    %4432 = vmatpush1.msra.mxu0 %v752
    %4433 = vmatprep.subr.mxu0 %v749
    %4434 = vmatpush1.msra.mxu0 %v748
    %4435 = vmatprep.subr.mxu0 %v745
    %4436 = vmatpush1.msra.mxu0 %v744
    %4437 = vmatprep.subr.mxu0 %v741
    %4438 = vmatpush1.msra.mxu0 %v740
    %4439 = vmatprep.subr.mxu0 %v737
    %4440 = vmatpush1.msra.mxu0 %v736
    %4441 = vmatprep.subr.mxu0 %v733
    %4442 = vmatpush1.msra.mxu0 %v732
    %4443 = vmatprep.subr.mxu0 %v729
    %4444 = vmatpush1.msra.mxu0 %v728
    %4445 = vmatprep.subr.mxu0 %v725
    %4446 = vmatpush1.msra.mxu0 %v724
    %4447 = vmatprep.subr.mxu0 %v721
    %4448 = vmatpush1.msra.mxu0 %v720
    %4449 = vmatprep.subr.mxu0 %v717
    %4450 = vmatpush1.msra.mxu0 %v716
    %4451 = vmatprep.subr.mxu0 %v713
    %4452 = vmatpush1.msra.mxu0 %v712
    %4453 = vmatprep.subr.mxu0 %v709
    %4454 = vmatpush1.msra.mxu0 %v708
    %4455 = vmatprep.subr.mxu0 0.0
    %4456 = vmatpush2.msra.mxu0 0.0
    %4457 = vmatprep.subr.mxu0 0.0
    %4458 = vmatpush2.msra.mxu0 0.0
    %4459 = vmatprep.subr.mxu0 0.0
    %4460 = vmatpush2.msra.mxu0 0.0
    %4461 = vmatprep.subr.mxu0 0.0
    %4462 = vmatpush2.msra.mxu0 0.0
    %4463 = vmatprep.subr.mxu0 0.0
    %4464 = vmatpush2.msra.mxu0 0.0
    %4465 = vmatprep.subr.mxu0 0.0
    %4466 = vmatpush2.msra.mxu0 0.0
    %4467 = vmatprep.subr.mxu0 0.0
    %4468 = vmatpush2.msra.mxu0 0.0
    %4469 = vmatprep.subr.mxu0 0.0
    %4470 = vmatpush2.msra.mxu0 0.0
    %4471 = vmatprep.subr.mxu0 0.0
    %4472 = vmatpush2.msra.mxu0 0.0
    %4473 = vmatprep.subr.mxu0 0.0
    %4474 = vmatpush2.msra.mxu0 0.0
    %4475 = vmatprep.subr.mxu0 0.0
    %4476 = vmatpush2.msra.mxu0 0.0
    %4477 = vmatprep.subr.mxu0 0.0
    %4478 = vmatpush2.msra.mxu0 0.0
    %4479 = vmatprep.subr.mxu0 0.0
    %4480 = vmatpush2.msra.mxu0 0.0
    %4481 = vmatprep.subr.mxu0 0.0
    %4482 = vmatpush2.msra.mxu0 0.0
    %4483 = vmatprep.subr.mxu0 0.0
    %4484 = vmatpush2.msra.mxu0 0.0
    %4485 = vmatprep.subr.mxu0 0.0
    %4486 = vmatpush2.msra.mxu0 0.0
    %4487 = vmatprep.mubr.f32.mxu0 0.0
    %4488 = vmatmul.mubr.f32.gmra.mxu0 %v4280
    %v4489 = vpop.f32.mrf.mxu0
    %v4490 = vadd.f32 %v4348, %v4489
    %v4491 = vpop.f32.mrf.mxu0
    %v4492 = vadd.f32 %v4350, %v4491
    %4493 = vdwg.mxu0
    %4494 = vmatprep.subr.mxu0 %v771
    %4495 = vmatpush1.msra.mxu0 %v770
    %4496 = vmatprep.subr.mxu0 %v767
    %4497 = vmatpush1.msra.mxu0 %v766
    %4498 = vmatprep.subr.mxu0 %v763
    %4499 = vmatpush1.msra.mxu0 %v762
    %4500 = vmatprep.subr.mxu0 %v759
    %4501 = vmatpush1.msra.mxu0 %v758
    %4502 = vmatprep.subr.mxu0 %v755
    %4503 = vmatpush1.msra.mxu0 %v754
    %4504 = vmatprep.subr.mxu0 %v751
    %4505 = vmatpush1.msra.mxu0 %v750
    %4506 = vmatprep.subr.mxu0 %v747
    %4507 = vmatpush1.msra.mxu0 %v746
    %4508 = vmatprep.subr.mxu0 %v743
    %4509 = vmatpush1.msra.mxu0 %v742
    %4510 = vmatprep.subr.mxu0 %v739
    %4511 = vmatpush1.msra.mxu0 %v738
    %4512 = vmatprep.subr.mxu0 %v735
    %4513 = vmatpush1.msra.mxu0 %v734
    %4514 = vmatprep.subr.mxu0 %v731
    %4515 = vmatpush1.msra.mxu0 %v730
    %4516 = vmatprep.subr.mxu0 %v727
    %4517 = vmatpush1.msra.mxu0 %v726
    %4518 = vmatprep.subr.mxu0 %v723
    %4519 = vmatpush1.msra.mxu0 %v722
    %4520 = vmatprep.subr.mxu0 %v719
    %4521 = vmatpush1.msra.mxu0 %v718
    %4522 = vmatprep.subr.mxu0 %v715
    %4523 = vmatpush1.msra.mxu0 %v714
    %4524 = vmatprep.subr.mxu0 %v711
    %4525 = vmatpush1.msra.mxu0 %v710
    %4526 = vmatprep.subr.mxu0 0.0
    %4527 = vmatpush2.msra.mxu0 0.0
    %4528 = vmatprep.subr.mxu0 0.0
    %4529 = vmatpush2.msra.mxu0 0.0
    %4530 = vmatprep.subr.mxu0 0.0
    %4531 = vmatpush2.msra.mxu0 0.0
    %4532 = vmatprep.subr.mxu0 0.0
    %4533 = vmatpush2.msra.mxu0 0.0
    %4534 = vmatprep.subr.mxu0 0.0
    %4535 = vmatpush2.msra.mxu0 0.0
    %4536 = vmatprep.subr.mxu0 0.0
    %4537 = vmatpush2.msra.mxu0 0.0
    %4538 = vmatprep.subr.mxu0 0.0
    %4539 = vmatpush2.msra.mxu0 0.0
    %4540 = vmatprep.subr.mxu0 0.0
    %4541 = vmatpush2.msra.mxu0 0.0
    %4542 = vmatprep.subr.mxu0 0.0
    %4543 = vmatpush2.msra.mxu0 0.0
    %4544 = vmatprep.subr.mxu0 0.0
    %4545 = vmatpush2.msra.mxu0 0.0
    %4546 = vmatprep.subr.mxu0 0.0
    %4547 = vmatpush2.msra.mxu0 0.0
    %4548 = vmatprep.subr.mxu0 0.0
    %4549 = vmatpush2.msra.mxu0 0.0
    %4550 = vmatprep.subr.mxu0 0.0
    %4551 = vmatpush2.msra.mxu0 0.0
    %4552 = vmatprep.subr.mxu0 0.0
    %4553 = vmatpush2.msra.mxu0 0.0
    %4554 = vmatprep.subr.mxu0 0.0
    %4555 = vmatpush2.msra.mxu0 0.0
    %4556 = vmatprep.subr.mxu0 0.0
    %4557 = vmatpush2.msra.mxu0 0.0
    %4558 = vmatprep.mubr.f32.mxu0 0.0
    %4559 = vmatmul.mubr.f32.gmra.mxu0 %v4280
    %v4560 = vpop.f32.mrf.mxu0
    %v4561 = vadd.f32 %v4419, %v4560
    %v4562 = vpop.f32.mrf.mxu0
    %v4563 = vadd.f32 %v4421, %v4562
    %4564 = vdwg.mxu0
    %v4565 = vadd.f32 %v4490, %v1125
    %v4566 = vadd.f32 %v4492, %v1129
    %v4567 = vadd.f32 %v4561, %v1133
    %v4568 = vadd.f32 %v4563, %v1137
    %v4569 = vxor.u32 %v4565, 2147483648
    %v4570 = vxor.u32 %v4566, 2147483648
    %v4571 = vxor.u32 %v4567, 2147483648
    %v4572 = vmul.f32 %v4569, 1.442695
    %v4573 = vpow.pop %v4572
    %v4574 = vmul.f32 %v4570, 1.442695
    %v4575 = vpow.pop %v4574
    %v4576 = vmul.f32 %v4571, 1.442695
    %v4577 = vpow.pop %v4576
    %v4578 = vadd.f32 %v4573, 1.0
    %v4579 = vadd.f32 %v4575, 1.0
    %v4580 = vadd.f32 %v4577, 1.0
    %v4581 = vrcp.pop %v4578
    %v4582 = vmul.f32 1.0, %v4581
    %v4583 = vrcp.pop %v4579
    %v4584 = vmul.f32 1.0, %v4583
    %v4585 = vrcp.pop %v4580
    %v4586 = vmul.f32 1.0, %v4585
    %v4587 = vtanh.pop %v4568
    %v4588 = vmul.f32 %v4584, %v4101
    %v4589 = vmul.f32 %v4582, %v4587
    %v4590 = vadd.f32 %v4588, %v4589
    %v4591 = vtanh.pop %v4590
    %v4592 = vmul.f32 %v4586, %v4591
    %v4593 = vld [vmem:[#allocation12] sm:$0xff]
    %v4594 = vld [vmem:[#allocation12 + $0x8] sm:$0xff]
    %v4595 = vld [vmem:[#allocation12 + $0x10] sm:$0xff]
    %v4596 = vld [vmem:[#allocation12 + $0x18] sm:$0xff]
    %v4597 = vld [vmem:[#allocation12 + $0x20] sm:$0xff]
    %v4598 = vld [vmem:[#allocation12 + $0x28] sm:$0xff]
    %v4599 = vld [vmem:[#allocation12 + $0x30] sm:$0xff]
    %v4600 = vld [vmem:[#allocation12 + $0x38] sm:$0xff]
    %v4601 = vld [vmem:[#allocation12 + $0x40] sm:$0xff]
    %v4602 = vld [vmem:[#allocation12 + $0x48] sm:$0xff]
    %v4603 = vld [vmem:[#allocation12 + $0x50] sm:$0xff]
    %v4604 = vld [vmem:[#allocation12 + $0x58] sm:$0xff]
    %v4605 = vld [vmem:[#allocation12 + $0x60] sm:$0xff]
    %v4606 = vld [vmem:[#allocation12 + $0x68] sm:$0xff]
    %v4607 = vld [vmem:[#allocation12 + $0x70] sm:$0xff]
    %v4608 = vld [vmem:[#allocation12 + $0x78] sm:$0xff]
    %v4609 = vld [vmem:[%s8] sm:$0x1]
    %v4611 = vlaneseq
    %v4612 = vshrl.u32 %v4611, 7
    %v4613 = vsub.s32 0, %v4612
    %v4614 = vrot.slane %v4609, %v4613
    %4616 = vmatprep.subr.mxu0 0.0
    %4617 = vmatpush1.msra.mxu0 %v4608
    %4618 = vmatprep.subr.mxu0 0.0
    %4619 = vmatpush1.msra.mxu0 %v4607
    %4620 = vmatprep.subr.mxu0 0.0
    %4621 = vmatpush1.msra.mxu0 %v4606
    %4622 = vmatprep.subr.mxu0 0.0
    %4623 = vmatpush1.msra.mxu0 %v4605
    %4624 = vmatprep.subr.mxu0 0.0
    %4625 = vmatpush1.msra.mxu0 %v4604
    %4626 = vmatprep.subr.mxu0 0.0
    %4627 = vmatpush1.msra.mxu0 %v4603
    %4628 = vmatprep.subr.mxu0 0.0
    %4629 = vmatpush1.msra.mxu0 %v4602
    %4630 = vmatprep.subr.mxu0 0.0
    %4631 = vmatpush1.msra.mxu0 %v4601
    %4632 = vmatprep.subr.mxu0 0.0
    %4633 = vmatpush1.msra.mxu0 %v4600
    %4634 = vmatprep.subr.mxu0 0.0
    %4635 = vmatpush1.msra.mxu0 %v4599
    %4636 = vmatprep.subr.mxu0 0.0
    %4637 = vmatpush1.msra.mxu0 %v4598
    %4638 = vmatprep.subr.mxu0 0.0
    %4639 = vmatpush1.msra.mxu0 %v4597
    %4640 = vmatprep.subr.mxu0 0.0
    %4641 = vmatpush1.msra.mxu0 %v4596
    %4642 = vmatprep.subr.mxu0 0.0
    %4643 = vmatpush1.msra.mxu0 %v4595
    %4644 = vmatprep.subr.mxu0 0.0
    %4645 = vmatpush1.msra.mxu0 %v4594
    %4646 = vmatprep.subr.mxu0 0.0
    %4647 = vmatpush1.msra.mxu0 %v4593
    %4648 = vmatprep.subr.mxu0 0.0
    %4649 = vmatpush2.msra.mxu0 0.0
    %4650 = vmatprep.subr.mxu0 0.0
    %4651 = vmatpush2.msra.mxu0 0.0
    %4652 = vmatprep.subr.mxu0 0.0
    %4653 = vmatpush2.msra.mxu0 0.0
    %4654 = vmatprep.subr.mxu0 0.0
    %4655 = vmatpush2.msra.mxu0 0.0
    %4656 = vmatprep.subr.mxu0 0.0
    %4657 = vmatpush2.msra.mxu0 0.0
    %4658 = vmatprep.subr.mxu0 0.0
    %4659 = vmatpush2.msra.mxu0 0.0
    %4660 = vmatprep.subr.mxu0 0.0
    %4661 = vmatpush2.msra.mxu0 0.0
    %4662 = vmatprep.subr.mxu0 0.0
    %4663 = vmatpush2.msra.mxu0 0.0
    %4664 = vmatprep.subr.mxu0 0.0
    %4665 = vmatpush2.msra.mxu0 0.0
    %4666 = vmatprep.subr.mxu0 0.0
    %4667 = vmatpush2.msra.mxu0 0.0
    %4668 = vmatprep.subr.mxu0 0.0
    %4669 = vmatpush2.msra.mxu0 0.0
    %4670 = vmatprep.subr.mxu0 0.0
    %4671 = vmatpush2.msra.mxu0 0.0
    %4672 = vmatprep.subr.mxu0 0.0
    %4673 = vmatpush2.msra.mxu0 0.0
    %4674 = vmatprep.subr.mxu0 0.0
    %4675 = vmatpush2.msra.mxu0 0.0
    %4676 = vmatprep.subr.mxu0 0.0
    %4677 = vmatpush2.msra.mxu0 0.0
    %4678 = vmatprep.subr.mxu0 0.0
    %4679 = vmatpush2.msra.mxu0 0.0
    %4680 = vmatprep.mubr.f32.mxu0 0.0
    %4681 = vmatmul.mubr.f32.gmra.mxu0 %v4592
    %v4682 = vpop.f32.mrf.mxu0
    %v4683 = vadd.f32 %v4614, %v4682
    %v4684 = vpop.f32.mrf.mxu0
    %4685 = vdwg.mxu0
    %4686 = vst [vmem:[#allocation14] sm:$0xff] %v4683
    // Predicated region
    $region62: #{tpu_custom_call.1} parent=1 // pred_check
      _
    $region63: #{tpu_custom_call.1} parent=1 // pred_check_branch
      %4688 = sbr.rel (0) target = $region65
    $region64: #{tpu_custom_call.1} parent=1 // pred_region
      %s4690 = ssub.s32 128, 128
      %4691 = vsyncadd [#allocation5], %s4690
      %s4693 = sshll.u32 [#allocation14], 4
      %s4694 = int_to_ptr.vmem [resolvable:$true] %s4693
      %4696 = dma.vmem_to_hbm [thread:$0]  %s4694, 128, %s9, [#allocation5]
    $region65: #{tpu_custom_call.1} parent=1 // pred_fallthru
      _
    // Predicated region
    $region66: #{tpu_custom_call.1} parent=1 // pred_check
      _
    $region67: #{tpu_custom_call.1} parent=1 // pred_check_branch
      %4698 = sbr.rel (0) target = $region69
    $region68: #{tpu_custom_call.1} parent=1 // pred_region
      %4699 = dma.done [#allocation5], 128
    $region69: #{tpu_custom_call.1} parent=1 // pred_fallthru
      _
    %4700 = vsyncpa [#allocation4], 1
    %4701 = vsyncpa [#allocation7], 1
    %4702 = vsyncpa [#allocation10], 1
    %4703 = vsyncpa [#allocation13], 1
    %4704 = vsyncpa [#allocation5], 1

</llo_original>
